<compile_context>
chip_gen: v6e
topology: v6e:2x2x1
jax: 0.10.0
libtpu: 0.0.40
codegen_flags: <defaults>
</compile_context>

<pallas_src>
import jax
import jax.numpy as jnp
from jax import lax
from jax.experimental import pallas as pl
from jax.experimental.pallas import tpu as pltpu


def _decoder_kernel(gx_ref, enc_ref, enc_t_ref, h_init_ref, c_init_ref,
                    whh0_ref, w1_ref, b1_ref, wa_ref, ba_ref,
                    out_ref, h_last_ref, c_last_ref):
    H = h_init_ref.shape[-1]
    T = gx_ref.shape[0]

    # Load weights and encoder memory once; resident for the whole decode loop.
    whh0 = whh0_ref[...]          # (H, 4H)
    w1 = w1_ref[...]              # (2H, 4H)  fused [W_ih1; W_hh1]
    b1 = b1_ref[...]              # (1, 4H)
    wa = wa_ref[...]              # (2H, H)   fused [W_ac; W_ah]
    ba = ba_ref[...]              # (1, H)
    enc = enc_ref[...]            # (B, S, H)  rhs for the context matmul
    enc_t = enc_t_ref[...]        # (B, H, S)  rhs for the score matmul (pre-transposed)

    h_init = h_init_ref[...]
    c_init = c_init_ref[...]

    def gates_to_hc(g, c_prev):
        i = jax.nn.sigmoid(g[:, 0 * H:1 * H])
        f = jax.nn.sigmoid(g[:, 1 * H:2 * H])
        z = jnp.tanh(g[:, 2 * H:3 * H])
        o = jax.nn.sigmoid(g[:, 3 * H:4 * H])
        c_new = f * c_prev + i * z
        h_new = o * jnp.tanh(c_new)
        return h_new, c_new

    def step(t, carry):
        h0, c0, h1, c1, _ = carry

        # Layer 0: (x_t @ W_ih0 + b0) was precomputed in the wrapper -> gx_ref[t].
        g0 = gx_ref[t] + jnp.dot(h0, whh0, preferred_element_type=jnp.float32)
        h0n, c0n = gates_to_hc(g0, c0)

        # Layer 1: single fused MXU matmul [h0n; h1] @ [W_ih1; W_hh1] + b1.
        g1 = jnp.dot(jnp.concatenate([h0n, h1], axis=-1), w1,
                     preferred_element_type=jnp.float32) + b1
        h1n, c1n = gates_to_hc(g1, c1)

        # Luong dot-product attention on the MXU (batched einsums; both rhs
        # operands already in (K, N) layout, no per-step transpose).
        q = h1n[:, None, :]                                           # (B,1,H)
        s = jnp.einsum('bqh,bhs->bqs', q, enc_t,
                       preferred_element_type=jnp.float32)            # (B,1,S)
        s = s - jnp.max(s, axis=-1, keepdims=True)
        p = jnp.exp(s)                                                # unnormalized
        ctx = jnp.einsum('bqs,bsh->bqh', p, enc,
                         preferred_element_type=jnp.float32)          # (B,1,H)
        # Normalize after the matmul: one (B,1,H) multiply instead of (B,1,S).
        inv = pl.reciprocal(jnp.sum(p, axis=-1, keepdims=True), approx=True)
        ctx = (ctx * inv)[:, 0, :]                                    # (B,H)

        # Combine: tanh([ctx; h1] @ [W_ac; W_ah] + b_a)  -- one MXU matmul.
        attn = jnp.tanh(jnp.dot(jnp.concatenate([ctx, h1n], axis=-1), wa,
                                preferred_element_type=jnp.float32) + ba)

        out_ref[t] = attn                                             # time-major store
        return (h0n, c0n, h1n, c1n, attn)

    init = (h_init, c_init, h_init, c_init, jnp.zeros_like(h_init))
    _, _, _, c1, attn = lax.fori_loop(0, T, step, init, unroll=True)

    h_last_ref[...] = attn
    c_last_ref[...] = c1


def modal_attention_lstm_decoder(inp, encoder_out, encoder_h, params):
    """inp: (B, T, I); encoder_out: ((B,S,H),(B,S,H)); encoder_h: ((B,H),(B,H))."""
    enc_out, _enc_c_out = encoder_out            # c-out only used by inter-modal branch
    h_init, c_init = encoder_h
    B, T, I = inp.shape
    S = enc_out.shape[1]
    H = h_init.shape[1]

    x = inp.astype(jnp.float32)
    enc_out = enc_out.astype(jnp.float32)
    h_init = h_init.astype(jnp.float32)
    c_init = c_init.astype(jnp.float32)

    # Hoist the layer-0 input projection out of the recurrence: one big matmul
    # (M = T*B rows fills the MXU), produced directly in time-major layout and
    # with the fused LSTM bias folded in.
    gx = jnp.einsum('bti,ig->tbg', x, params["wih0"]) + params["b0"]   # (T, B, 4H)

    # Pre-transposed encoder memory for the score matmul (hoisted out of the loop).
    enc_t = jnp.transpose(enc_out, (0, 2, 1))                          # (B, H, S)

    # Fuse the per-step weight pairs so each layer / combine is one matmul.
    w1 = jnp.concatenate([params["wih1"], params["whh1"]], axis=0)     # (2H, 4H)
    wa = jnp.concatenate([params["wac"], params["wah"]], axis=0)       # (2H, H)

    grid_spec = pltpu.PrefetchScalarGridSpec(
        num_scalar_prefetch=0,
        grid=(1,),                                     # whole decode in one invocation
        in_specs=[
            pl.BlockSpec((T, B, 4 * H), lambda i: (0, 0, 0)),   # precomputed x-gates
            pl.BlockSpec((B, S, H), lambda i: (0, 0, 0)),       # encoder_out (B,S,H)
            pl.BlockSpec((B, H, S), lambda i: (0, 0, 0)),       # encoder_out^T (B,H,S)
            pl.BlockSpec((B, H), lambda i: (0, 0)),             # encoder_h
            pl.BlockSpec((B, H), lambda i: (0, 0)),             # encoder_c
            pl.BlockSpec((H, 4 * H), lambda i: (0, 0)),         # W_hh0
            pl.BlockSpec((2 * H, 4 * H), lambda i: (0, 0)),     # [W_ih1; W_hh1]
            pl.BlockSpec((1, 4 * H), lambda i: (0, 0)),         # b1
            pl.BlockSpec((2 * H, H), lambda i: (0, 0)),         # [W_ac; W_ah]
            pl.BlockSpec((1, H), lambda i: (0, 0)),             # b_a
        ],
        out_specs=[
            pl.BlockSpec((T, B, H), lambda i: (0, 0, 0)),       # out (time-major)
            pl.BlockSpec((B, H), lambda i: (0, 0)),             # h_last
            pl.BlockSpec((B, H), lambda i: (0, 0)),             # c_last
        ],
    )

    out_tbh, h_last, c_last = pl.pallas_call(
        _decoder_kernel,
        out_shape=(jax.ShapeDtypeStruct((T, B, H), jnp.float32),
                   jax.ShapeDtypeStruct((B, H), jnp.float32),
                   jax.ShapeDtypeStruct((B, H), jnp.float32)),
        grid_spec=grid_spec,
        compiler_params=pltpu.CompilerParams(dimension_semantics=("arbitrary",)),
    )(gx, enc_out, enc_t, h_init, c_init,
      params["whh0"], w1, params["b1"], wa, params["ba"])

    out = jnp.transpose(out_tbh, (1, 0, 2))        # (B, T, H); tiny (the big input
                                                   # transpose was fused into `gx`)
    return out, (h_last, c_last)


def _reference(inp, encoder_out, encoder_h, params):
    """Pure-JAX reference mirroring the PyTorch forward (inter_modal_out=None)."""
    enc_out, _ = encoder_out
    h_init, c_init = encoder_h
    B, T, I = inp.shape
    H = h_init.shape[1]

    def lstm_cell(x, h, c, wih, whh, b):
        gates = x @ wih + h @ whh + b
        i = jax.nn.sigmoid(gates[:, 0 * H:1 * H])
        f = jax.nn.sigmoid(gates[:, 1 * H:2 * H])
        g = jnp.tanh(gates[:, 2 * H:3 * H])
        o = jax.nn.sigmoid(gates[:, 3 * H:4 * H])
        c_new = f * c + i * g
        return o * jnp.tanh(c_new), c_new

    h0 = h1 = h_init
    c0 = c1 = c_init
    outs = []
    for t in range(T):
        h0, c0 = lstm_cell(inp[:, t, :], h0, c0, params["wih0"], params["whh0"], params["b0"])
        h1, c1 = lstm_cell(h0, h1, c1, params["wih1"], params["whh1"], params["b1"])
        scores = jnp.einsum("bh,bsh->bs", h1, enc_out)
        p = jax.nn.softmax(scores, axis=-1)
        ctx = jnp.einsum("bs,bsh->bh", p, enc_out)
        h = jnp.tanh(ctx @ params["wac"] + h1 @ params["wah"] + params["ba"])
        outs.append(h)
    out = jnp.stack(outs, axis=1)
    return out, (h, c1)


def _init_params(key, input_size, hidden_size):
    H = hidden_size
    k = 1.0 / jnp.sqrt(jnp.float32(H))
    keys = jax.random.split(key, 11)
    u = lambda kk, shape: jax.random.uniform(kk, shape, jnp.float32, -k, k)
    # Weights pre-transposed to (in_features, out_features); LSTM biases fused.
    return {
        "wih0": u(keys[0], (input_size, 4 * H)),
        "whh0": u(keys[1], (H, 4 * H)),
        "b0":   u(keys[2], (1, 4 * H)) + u(keys[3], (1, 4 * H)),
        "wih1": u(keys[4], (H, 4 * H)),
        "whh1": u(keys[5], (H, 4 * H)),
        "b1":   u(keys[6], (1, 4 * H)) + u(keys[7], (1, 4 * H)),
        "wac":  u(keys[8], (H, H)),
        "wah":  u(keys[9], (H, H)),
        "ba":   u(keys[10], (1, H)),
    }


if __name__ == "__main__":
    B, T, I, S, H = 2, 8, 16, 8, 32

    root = jax.random.PRNGKey(0)
    k_param, k_x, k_enc, k_encc, k_h, k_c = jax.random.split(root, 6)

    params = _init_params(k_param, I, H)
    x = jax.random.normal(k_x, (B, T, I), jnp.float32)
    enc_out = jax.random.normal(k_enc, (B, S, H), jnp.float32)
    enc_c_out = jax.random.normal(k_encc, (B, S, H), jnp.float32)
    enc_h = jax.random.normal(k_h, (B, H), jnp.float32)
    enc_c = jax.random.normal(k_c, (B, H), jnp.float32)

    out, (h_last, c_last) = modal_attention_lstm_decoder(
        x, (enc_out, enc_c_out), (enc_h, enc_c), params)
    jax.block_until_ready((out, h_last, c_last))

    ref_out, (ref_h, ref_c) = _reference(x, (enc_out, enc_c_out), (enc_h, enc_c), params)
    assert jnp.allclose(out, ref_out, atol=5e-3, rtol=5e-3), "output mismatch"
    assert jnp.allclose(h_last, ref_h, atol=5e-3, rtol=5e-3), "h_last mismatch"
    assert jnp.allclose(c_last, ref_c, atol=5e-3, rtol=5e-3), "c_last mismatch"

    print("KERNEL_OK")
</pallas_src>

<mosaic_0001>
module attributes {stable_mosaic.version = 11 : i64} {
  func.func @_decoder_kernel(%arg0: i32, %arg1: memref<8x2x128xf32, #tpu.memory_space<vmem>>, %arg2: memref<2x8x32xf32, #tpu.memory_space<vmem>>, %arg3: memref<2x32x8xf32, #tpu.memory_space<vmem>>, %arg4: memref<2x32xf32, #tpu.memory_space<vmem>>, %arg5: memref<2x32xf32, #tpu.memory_space<vmem>>, %arg6: memref<32x128xf32, #tpu.memory_space<vmem>>, %arg7: memref<64x128xf32, #tpu.memory_space<vmem>>, %arg8: memref<1x128xf32, #tpu.memory_space<vmem>>, %arg9: memref<64x32xf32, #tpu.memory_space<vmem>>, %arg10: memref<1x32xf32, #tpu.memory_space<vmem>>, %arg11: memref<8x2x32xf32, #tpu.memory_space<vmem>>, %arg12: memref<2x32xf32, #tpu.memory_space<vmem>>, %arg13: memref<2x32xf32, #tpu.memory_space<vmem>>) attributes {dimension_semantics = [#tpu.dimension_semantics<arbitrary>], iteration_bounds = array<i64: 1>, scalar_prefetch = 0 : i64, scratch_operands = 0 : i64, tpu.core_type = #tpu.core_type<tc>, window_params = [{pipeline_mode = #tpu.pipeline_mode<synchronous>, transform_indices = @transform_0, window_bounds = array<i64: 8, 2, 128>}, {pipeline_mode = #tpu.pipeline_mode<synchronous>, transform_indices = @transform_1, window_bounds = array<i64: 2, 8, 32>}, {pipeline_mode = #tpu.pipeline_mode<synchronous>, transform_indices = @transform_2, window_bounds = array<i64: 2, 32, 8>}, {pipeline_mode = #tpu.pipeline_mode<synchronous>, transform_indices = @transform_3, window_bounds = array<i64: 2, 32>}, {pipeline_mode = #tpu.pipeline_mode<synchronous>, transform_indices = @transform_4, window_bounds = array<i64: 2, 32>}, {pipeline_mode = #tpu.pipeline_mode<synchronous>, transform_indices = @transform_5, window_bounds = array<i64: 32, 128>}, {pipeline_mode = #tpu.pipeline_mode<synchronous>, transform_indices = @transform_6, window_bounds = array<i64: 64, 128>}, {pipeline_mode = #tpu.pipeline_mode<synchronous>, transform_indices = @transform_7, window_bounds = array<i64: 1, 128>}, {pipeline_mode = #tpu.pipeline_mode<synchronous>, transform_indices = @transform_8, window_bounds = array<i64: 64, 32>}, {pipeline_mode = #tpu.pipeline_mode<synchronous>, transform_indices = @transform_9, window_bounds = array<i64: 1, 32>}, {pipeline_mode = #tpu.pipeline_mode<synchronous>, transform_indices = @transform_10, window_bounds = array<i64: 8, 2, 32>}, {pipeline_mode = #tpu.pipeline_mode<synchronous>, transform_indices = @transform_11, window_bounds = array<i64: 2, 32>}, {pipeline_mode = #tpu.pipeline_mode<synchronous>, transform_indices = @transform_12, window_bounds = array<i64: 2, 32>}]} {
    %c0 = arith.constant 0 : index
    %c0_0 = arith.constant 0 : index
    %0 = vector.load %arg6[%c0, %c0_0] : memref<32x128xf32, #tpu.memory_space<vmem>>, vector<32x128xf32>
    %c0_1 = arith.constant 0 : index
    %c0_2 = arith.constant 0 : index
    %1 = vector.load %arg7[%c0_1, %c0_2] : memref<64x128xf32, #tpu.memory_space<vmem>>, vector<64x128xf32>
    %c0_3 = arith.constant 0 : index
    %c0_4 = arith.constant 0 : index
    %2 = vector.load %arg8[%c0_3, %c0_4] : memref<1x128xf32, #tpu.memory_space<vmem>>, vector<1x128xf32>
    %c0_5 = arith.constant 0 : index
    %c0_6 = arith.constant 0 : index
    %3 = vector.load %arg9[%c0_5, %c0_6] : memref<64x32xf32, #tpu.memory_space<vmem>>, vector<64x32xf32>
    %c0_7 = arith.constant 0 : index
    %c0_8 = arith.constant 0 : index
    %4 = vector.load %arg10[%c0_7, %c0_8] : memref<1x32xf32, #tpu.memory_space<vmem>>, vector<1x32xf32>
    %c0_9 = arith.constant 0 : index
    %c0_10 = arith.constant 0 : index
    %c0_11 = arith.constant 0 : index
    %5 = vector.load %arg2[%c0_9, %c0_10, %c0_11] : memref<2x8x32xf32, #tpu.memory_space<vmem>>, vector<2x8x32xf32>
    %c0_12 = arith.constant 0 : index
    %c0_13 = arith.constant 0 : index
    %c0_14 = arith.constant 0 : index
    %6 = vector.load %arg3[%c0_12, %c0_13, %c0_14] : memref<2x32x8xf32, #tpu.memory_space<vmem>>, vector<2x32x8xf32>
    %c0_15 = arith.constant 0 : index
    %c0_16 = arith.constant 0 : index
    %7 = vector.load %arg4[%c0_15, %c0_16] : memref<2x32xf32, #tpu.memory_space<vmem>>, vector<2x32xf32>
    %c0_17 = arith.constant 0 : index
    %c0_18 = arith.constant 0 : index
    %8 = vector.load %arg5[%c0_17, %c0_18] : memref<2x32xf32, #tpu.memory_space<vmem>>, vector<2x32xf32>
    %cst = arith.constant 0.000000e+00 : f32
    %9 = vector.broadcast %cst : f32 to vector<2x32xf32>
    %c0_i32 = arith.constant 0 : i32
    %10 = arith.index_cast %c0_i32 : i32 to index
    %c0_19 = arith.constant 0 : index
    %c0_20 = arith.constant 0 : index
    %11 = vector.load %arg1[%10, %c0_19, %c0_20] : memref<8x2x128xf32, #tpu.memory_space<vmem>>, vector<1x2x128xf32>
    %12 = vector.shape_cast %11 : vector<1x2x128xf32> to vector<2x128xf32>
    %cst_21 = arith.constant dense<0.000000e+00> : vector<2x128xf32>
    %13 = tpu.matmul %7, %0, %cst_21 {dimension_numbers = #tpu.dot_dimension_numbers<[1], [0], [0], [1], [0, 0, 1, 1], [], []>} : vector<2x32xf32>, vector<32x128xf32>, vector<2x128xf32> -> vector<2x128xf32>
    %14 = arith.addf %12, %13 : vector<2x128xf32>
    %15 = vector.extract_strided_slice %14 {offsets = [0, 0], sizes = [2, 32], strides = [1, 1]} : vector<2x128xf32> to vector<2x32xf32>
    %16 = arith.negf %15 : vector<2x32xf32>
    %17 = math.exp %16 : vector<2x32xf32>
    %cst_22 = arith.constant 1.000000e+00 : f32
    %18 = vector.broadcast %cst_22 : f32 to vector<2x32xf32>
    %19 = arith.addf %18, %17 : vector<2x32xf32>
    %20 = arith.divf %18, %19 : vector<2x32xf32>
    %21 = vector.extract_strided_slice %14 {offsets = [0, 32], sizes = [2, 32], strides = [1, 1]} : vector<2x128xf32> to vector<2x32xf32>
    %22 = arith.negf %21 : vector<2x32xf32>
    %23 = math.exp %22 : vector<2x32xf32>
    %cst_23 = arith.constant 1.000000e+00 : f32
    %24 = vector.broadcast %cst_23 : f32 to vector<2x32xf32>
    %25 = arith.addf %24, %23 : vector<2x32xf32>
    %26 = arith.divf %24, %25 : vector<2x32xf32>
    %27 = vector.extract_strided_slice %14 {offsets = [0, 64], sizes = [2, 32], strides = [1, 1]} : vector<2x128xf32> to vector<2x32xf32>
    %28 = math.tanh %27 : vector<2x32xf32>
    %29 = vector.extract_strided_slice %14 {offsets = [0, 96], sizes = [2, 32], strides = [1, 1]} : vector<2x128xf32> to vector<2x32xf32>
    %30 = arith.negf %29 : vector<2x32xf32>
    %31 = math.exp %30 : vector<2x32xf32>
    %cst_24 = arith.constant 1.000000e+00 : f32
    %32 = vector.broadcast %cst_24 : f32 to vector<2x32xf32>
    %33 = arith.addf %32, %31 : vector<2x32xf32>
    %34 = arith.divf %32, %33 : vector<2x32xf32>
    %35 = arith.mulf %26, %8 : vector<2x32xf32>
    %36 = arith.mulf %20, %28 : vector<2x32xf32>
    %37 = arith.addf %35, %36 : vector<2x32xf32>
    %38 = math.tanh %37 : vector<2x32xf32>
    %39 = arith.mulf %34, %38 : vector<2x32xf32>
    %40 = tpu.concatenate %39, %7 in 1 : vector<2x32xf32>, vector<2x32xf32> -> vector<2x64xf32>
    %cst_25 = arith.constant dense<0.000000e+00> : vector<2x128xf32>
    %41 = tpu.matmul %40, %1, %cst_25 {dimension_numbers = #tpu.dot_dimension_numbers<[1], [0], [0], [1], [0, 0, 1, 1], [], []>} : vector<2x64xf32>, vector<64x128xf32>, vector<2x128xf32> -> vector<2x128xf32>
    %42 = vector.broadcast %2 : vector<1x128xf32> to vector<2x128xf32>
    %43 = arith.addf %41, %42 : vector<2x128xf32>
    %44 = vector.extract_strided_slice %43 {offsets = [0, 0], sizes = [2, 32], strides = [1, 1]} : vector<2x128xf32> to vector<2x32xf32>
    %45 = arith.negf %44 : vector<2x32xf32>
    %46 = math.exp %45 : vector<2x32xf32>
    %cst_26 = arith.constant 1.000000e+00 : f32
    %47 = vector.broadcast %cst_26 : f32 to vector<2x32xf32>
    %48 = arith.addf %47, %46 : vector<2x32xf32>
    %49 = arith.divf %47, %48 : vector<2x32xf32>
    %50 = vector.extract_strided_slice %43 {offsets = [0, 32], sizes = [2, 32], strides = [1, 1]} : vector<2x128xf32> to vector<2x32xf32>
    %51 = arith.negf %50 : vector<2x32xf32>
    %52 = math.exp %51 : vector<2x32xf32>
    %cst_27 = arith.constant 1.000000e+00 : f32
    %53 = vector.broadcast %cst_27 : f32 to vector<2x32xf32>
    %54 = arith.addf %53, %52 : vector<2x32xf32>
    %55 = arith.divf %53, %54 : vector<2x32xf32>
    %56 = vector.extract_strided_slice %43 {offsets = [0, 64], sizes = [2, 32], strides = [1, 1]} : vector<2x128xf32> to vector<2x32xf32>
    %57 = math.tanh %56 : vector<2x32xf32>
    %58 = vector.extract_strided_slice %43 {offsets = [0, 96], sizes = [2, 32], strides = [1, 1]} : vector<2x128xf32> to vector<2x32xf32>
    %59 = arith.negf %58 : vector<2x32xf32>
    %60 = math.exp %59 : vector<2x32xf32>
    %cst_28 = arith.constant 1.000000e+00 : f32
    %61 = vector.broadcast %cst_28 : f32 to vector<2x32xf32>
    %62 = arith.addf %61, %60 : vector<2x32xf32>
    %63 = arith.divf %61, %62 : vector<2x32xf32>
    %64 = arith.mulf %55, %8 : vector<2x32xf32>
    %65 = arith.mulf %49, %57 : vector<2x32xf32>
    %66 = arith.addf %64, %65 : vector<2x32xf32>
    %67 = math.tanh %66 : vector<2x32xf32>
    %68 = arith.mulf %63, %67 : vector<2x32xf32>
    %69 = vector.shape_cast %68 : vector<2x32xf32> to vector<2x1x32xf32>
    "tpu.trace_start"() <{level = 10 : i32, message = "bqh,bhs->bqs"}> : () -> ()
    %cst_29 = arith.constant dense<0.000000e+00> : vector<2x1x8xf32>
    %70 = tpu.matmul %69, %6, %cst_29 {dimension_numbers = #tpu.dot_dimension_numbers<[2], [1], [1], [2], [0, 0, 0, 1, 1, 2], [0], [0]>} : vector<2x1x32xf32>, vector<2x32x8xf32>, vector<2x1x8xf32> -> vector<2x1x8xf32>
    "tpu.trace_stop"() : () -> ()
    %cst_30 = arith.constant dense<0xFF800000> : vector<2x1xf32>
    %71 = vector.multi_reduction <maximumf>, %70, %cst_30 [2] : vector<2x1x8xf32> to vector<2x1xf32>
    %72 = vector.shape_cast %71 : vector<2x1xf32> to vector<2x1x1xf32>
    %73 = vector.broadcast %72 : vector<2x1x1xf32> to vector<2x1x8xf32>
    %74 = arith.subf %70, %73 : vector<2x1x8xf32>
    %75 = math.exp %74 : vector<2x1x8xf32>
    "tpu.trace_start"() <{level = 10 : i32, message = "bqs,bsh->bqh"}> : () -> ()
    %cst_31 = arith.constant dense<0.000000e+00> : vector<2x1x32xf32>
    %76 = tpu.matmul %75, %5, %cst_31 {dimension_numbers = #tpu.dot_dimension_numbers<[2], [1], [1], [2], [0, 0, 0, 1, 1, 2], [0], [0]>} : vector<2x1x8xf32>, vector<2x8x32xf32>, vector<2x1x32xf32> -> vector<2x1x32xf32>
    "tpu.trace_stop"() : () -> ()
    %cst_32 = arith.constant dense<0.000000e+00> : vector<2x1xf32>
    %77 = vector.multi_reduction <add>, %75, %cst_32 [2] : vector<2x1x8xf32> to vector<2x1xf32>
    %78 = vector.shape_cast %77 : vector<2x1xf32> to vector<2x1x1xf32>
    %79 = tpu.reciprocal %78 {approx = true} : vector<2x1x1xf32> -> vector<2x1x1xf32>
    %80 = vector.broadcast %79 : vector<2x1x1xf32> to vector<2x1x32xf32>
    %81 = arith.mulf %76, %80 : vector<2x1x32xf32>
    %82 = vector.shape_cast %81 : vector<2x1x32xf32> to vector<2x32xf32>
    %83 = tpu.concatenate %82, %68 in 1 : vector<2x32xf32>, vector<2x32xf32> -> vector<2x64xf32>
    %cst_33 = arith.constant dense<0.000000e+00> : vector<2x32xf32>
    %84 = tpu.matmul %83, %3, %cst_33 {dimension_numbers = #tpu.dot_dimension_numbers<[1], [0], [0], [1], [0, 0, 1, 1], [], []>} : vector<2x64xf32>, vector<64x32xf32>, vector<2x32xf32> -> vector<2x32xf32>
    %85 = vector.broadcast %4 : vector<1x32xf32> to vector<2x32xf32>
    %86 = arith.addf %84, %85 : vector<2x32xf32>
    %87 = math.tanh %86 : vector<2x32xf32>
    %88 = arith.index_cast %c0_i32 : i32 to index
    %c0_34 = arith.constant 0 : index
    %c0_35 = arith.constant 0 : index
    %89 = vector.load %arg11[%88, %c0_34, %c0_35] : memref<8x2x32xf32, #tpu.memory_space<vmem>>, vector<1x2x32xf32>
    %90 = vector.shape_cast %89 : vector<1x2x32xf32> to vector<2x32xf32>
    %91 = vector.shape_cast %87 : vector<2x32xf32> to vector<1x2x32xf32>
    tpu.vector_store %arg11[%88, %c0_34, %c0_35], %91 {strides = array<i32>} : memref<8x2x32xf32, #tpu.memory_space<vmem>>, vector<1x2x32xf32>,
    %c1_i32 = arith.constant 1 : i32
    %92 = arith.index_cast %c1_i32 : i32 to index
    %c0_36 = arith.constant 0 : index
    %c0_37 = arith.constant 0 : index
    %93 = vector.load %arg1[%92, %c0_36, %c0_37] : memref<8x2x128xf32, #tpu.memory_space<vmem>>, vector<1x2x128xf32>
    %94 = vector.shape_cast %93 : vector<1x2x128xf32> to vector<2x128xf32>
    %cst_38 = arith.constant dense<0.000000e+00> : vector<2x128xf32>
    %95 = tpu.matmul %39, %0, %cst_38 {dimension_numbers = #tpu.dot_dimension_numbers<[1], [0], [0], [1], [0, 0, 1, 1], [], []>} : vector<2x32xf32>, vector<32x128xf32>, vector<2x128xf32> -> vector<2x128xf32>
    %96 = arith.addf %94, %95 : vector<2x128xf32>
    %97 = vector.extract_strided_slice %96 {offsets = [0, 0], sizes = [2, 32], strides = [1, 1]} : vector<2x128xf32> to vector<2x32xf32>
    %98 = arith.negf %97 : vector<2x32xf32>
    %99 = math.exp %98 : vector<2x32xf32>
    %cst_39 = arith.constant 1.000000e+00 : f32
    %100 = vector.broadcast %cst_39 : f32 to vector<2x32xf32>
    %101 = arith.addf %100, %99 : vector<2x32xf32>
    %102 = arith.divf %100, %101 : vector<2x32xf32>
    %103 = vector.extract_strided_slice %96 {offsets = [0, 32], sizes = [2, 32], strides = [1, 1]} : vector<2x128xf32> to vector<2x32xf32>
    %104 = arith.negf %103 : vector<2x32xf32>
    %105 = math.exp %104 : vector<2x32xf32>
    %cst_40 = arith.constant 1.000000e+00 : f32
    %106 = vector.broadcast %cst_40 : f32 to vector<2x32xf32>
    %107 = arith.addf %106, %105 : vector<2x32xf32>
    %108 = arith.divf %106, %107 : vector<2x32xf32>
    %109 = vector.extract_strided_slice %96 {offsets = [0, 64], sizes = [2, 32], strides = [1, 1]} : vector<2x128xf32> to vector<2x32xf32>
    %110 = math.tanh %109 : vector<2x32xf32>
    %111 = vector.extract_strided_slice %96 {offsets = [0, 96], sizes = [2, 32], strides = [1, 1]} : vector<2x128xf32> to vector<2x32xf32>
    %112 = arith.negf %111 : vector<2x32xf32>
    %113 = math.exp %112 : vector<2x32xf32>
    %cst_41 = arith.constant 1.000000e+00 : f32
    %114 = vector.broadcast %cst_41 : f32 to vector<2x32xf32>
    %115 = arith.addf %114, %113 : vector<2x32xf32>
    %116 = arith.divf %114, %115 : vector<2x32xf32>
    %117 = arith.mulf %108, %37 : vector<2x32xf32>
    %118 = arith.mulf %102, %110 : vector<2x32xf32>
    %119 = arith.addf %117, %118 : vector<2x32xf32>
    %120 = math.tanh %119 : vector<2x32xf32>
    %121 = arith.mulf %116, %120 : vector<2x32xf32>
    %122 = tpu.concatenate %121, %68 in 1 : vector<2x32xf32>, vector<2x32xf32> -> vector<2x64xf32>
    %cst_42 = arith.constant dense<0.000000e+00> : vector<2x128xf32>
    %123 = tpu.matmul %122, %1, %cst_42 {dimension_numbers = #tpu.dot_dimension_numbers<[1], [0], [0], [1], [0, 0, 1, 1], [], []>} : vector<2x64xf32>, vector<64x128xf32>, vector<2x128xf32> -> vector<2x128xf32>
    %124 = vector.broadcast %2 : vector<1x128xf32> to vector<2x128xf32>
    %125 = arith.addf %123, %124 : vector<2x128xf32>
    %126 = vector.extract_strided_slice %125 {offsets = [0, 0], sizes = [2, 32], strides = [1, 1]} : vector<2x128xf32> to vector<2x32xf32>
    %127 = arith.negf %126 : vector<2x32xf32>
    %128 = math.exp %127 : vector<2x32xf32>
    %cst_43 = arith.constant 1.000000e+00 : f32
    %129 = vector.broadcast %cst_43 : f32 to vector<2x32xf32>
    %130 = arith.addf %129, %128 : vector<2x32xf32>
    %131 = arith.divf %129, %130 : vector<2x32xf32>
    %132 = vector.extract_strided_slice %125 {offsets = [0, 32], sizes = [2, 32], strides = [1, 1]} : vector<2x128xf32> to vector<2x32xf32>
    %133 = arith.negf %132 : vector<2x32xf32>
    %134 = math.exp %133 : vector<2x32xf32>
    %cst_44 = arith.constant 1.000000e+00 : f32
    %135 = vector.broadcast %cst_44 : f32 to vector<2x32xf32>
    %136 = arith.addf %135, %134 : vector<2x32xf32>
    %137 = arith.divf %135, %136 : vector<2x32xf32>
    %138 = vector.extract_strided_slice %125 {offsets = [0, 64], sizes = [2, 32], strides = [1, 1]} : vector<2x128xf32> to vector<2x32xf32>
    %139 = math.tanh %138 : vector<2x32xf32>
    %140 = vector.extract_strided_slice %125 {offsets = [0, 96], sizes = [2, 32], strides = [1, 1]} : vector<2x128xf32> to vector<2x32xf32>
    %141 = arith.negf %140 : vector<2x32xf32>
    %142 = math.exp %141 : vector<2x32xf32>
    %cst_45 = arith.constant 1.000000e+00 : f32
    %143 = vector.broadcast %cst_45 : f32 to vector<2x32xf32>
    %144 = arith.addf %143, %142 : vector<2x32xf32>
    %145 = arith.divf %143, %144 : vector<2x32xf32>
    %146 = arith.mulf %137, %66 : vector<2x32xf32>
    %147 = arith.mulf %131, %139 : vector<2x32xf32>
    %148 = arith.addf %146, %147 : vector<2x32xf32>
    %149 = math.tanh %148 : vector<2x32xf32>
    %150 = arith.mulf %145, %149 : vector<2x32xf32>
    %151 = vector.shape_cast %150 : vector<2x32xf32> to vector<2x1x32xf32>
    "tpu.trace_start"() <{level = 10 : i32, message = "bqh,bhs->bqs"}> : () -> ()
    %cst_46 = arith.constant dense<0.000000e+00> : vector<2x1x8xf32>
    %152 = tpu.matmul %151, %6, %cst_46 {dimension_numbers = #tpu.dot_dimension_numbers<[2], [1], [1], [2], [0, 0, 0, 1, 1, 2], [0], [0]>} : vector<2x1x32xf32>, vector<2x32x8xf32>, vector<2x1x8xf32> -> vector<2x1x8xf32>
    "tpu.trace_stop"() : () -> ()
    %cst_47 = arith.constant dense<0xFF800000> : vector<2x1xf32>
    %153 = vector.multi_reduction <maximumf>, %152, %cst_47 [2] : vector<2x1x8xf32> to vector<2x1xf32>
    %154 = vector.shape_cast %153 : vector<2x1xf32> to vector<2x1x1xf32>
    %155 = vector.broadcast %154 : vector<2x1x1xf32> to vector<2x1x8xf32>
    %156 = arith.subf %152, %155 : vector<2x1x8xf32>
    %157 = math.exp %156 : vector<2x1x8xf32>
    "tpu.trace_start"() <{level = 10 : i32, message = "bqs,bsh->bqh"}> : () -> ()
    %cst_48 = arith.constant dense<0.000000e+00> : vector<2x1x32xf32>
    %158 = tpu.matmul %157, %5, %cst_48 {dimension_numbers = #tpu.dot_dimension_numbers<[2], [1], [1], [2], [0, 0, 0, 1, 1, 2], [0], [0]>} : vector<2x1x8xf32>, vector<2x8x32xf32>, vector<2x1x32xf32> -> vector<2x1x32xf32>
    "tpu.trace_stop"() : () -> ()
    %cst_49 = arith.constant dense<0.000000e+00> : vector<2x1xf32>
    %159 = vector.multi_reduction <add>, %157, %cst_49 [2] : vector<2x1x8xf32> to vector<2x1xf32>
    %160 = vector.shape_cast %159 : vector<2x1xf32> to vector<2x1x1xf32>
    %161 = tpu.reciprocal %160 {approx = true} : vector<2x1x1xf32> -> vector<2x1x1xf32>
    %162 = vector.broadcast %161 : vector<2x1x1xf32> to vector<2x1x32xf32>
    %163 = arith.mulf %158, %162 : vector<2x1x32xf32>
    %164 = vector.shape_cast %163 : vector<2x1x32xf32> to vector<2x32xf32>
    %165 = tpu.concatenate %164, %150 in 1 : vector<2x32xf32>, vector<2x32xf32> -> vector<2x64xf32>
    %cst_50 = arith.constant dense<0.000000e+00> : vector<2x32xf32>
    %166 = tpu.matmul %165, %3, %cst_50 {dimension_numbers = #tpu.dot_dimension_numbers<[1], [0], [0], [1], [0, 0, 1, 1], [], []>} : vector<2x64xf32>, vector<64x32xf32>, vector<2x32xf32> -> vector<2x32xf32>
    %167 = vector.broadcast %4 : vector<1x32xf32> to vector<2x32xf32>
    %168 = arith.addf %166, %167 : vector<2x32xf32>
    %169 = math.tanh %168 : vector<2x32xf32>
    %170 = arith.index_cast %c1_i32 : i32 to index
    %c0_51 = arith.constant 0 : index
    %c0_52 = arith.constant 0 : index
    %171 = vector.load %arg11[%170, %c0_51, %c0_52] : memref<8x2x32xf32, #tpu.memory_space<vmem>>, vector<1x2x32xf32>
    %172 = vector.shape_cast %171 : vector<1x2x32xf32> to vector<2x32xf32>
    %173 = vector.shape_cast %169 : vector<2x32xf32> to vector<1x2x32xf32>
    tpu.vector_store %arg11[%170, %c0_51, %c0_52], %173 {strides = array<i32>} : memref<8x2x32xf32, #tpu.memory_space<vmem>>, vector<1x2x32xf32>,
    %c2_i32 = arith.constant 2 : i32
    %174 = arith.index_cast %c2_i32 : i32 to index
    %c0_53 = arith.constant 0 : index
    %c0_54 = arith.constant 0 : index
    %175 = vector.load %arg1[%174, %c0_53, %c0_54] : memref<8x2x128xf32, #tpu.memory_space<vmem>>, vector<1x2x128xf32>
    %176 = vector.shape_cast %175 : vector<1x2x128xf32> to vector<2x128xf32>
    %cst_55 = arith.constant dense<0.000000e+00> : vector<2x128xf32>
    %177 = tpu.matmul %121, %0, %cst_55 {dimension_numbers = #tpu.dot_dimension_numbers<[1], [0], [0], [1], [0, 0, 1, 1], [], []>} : vector<2x32xf32>, vector<32x128xf32>, vector<2x128xf32> -> vector<2x128xf32>
    %178 = arith.addf %176, %177 : vector<2x128xf32>
    %179 = vector.extract_strided_slice %178 {offsets = [0, 0], sizes = [2, 32], strides = [1, 1]} : vector<2x128xf32> to vector<2x32xf32>
    %180 = arith.negf %179 : vector<2x32xf32>
    %181 = math.exp %180 : vector<2x32xf32>
    %cst_56 = arith.constant 1.000000e+00 : f32
    %182 = vector.broadcast %cst_56 : f32 to vector<2x32xf32>
    %183 = arith.addf %182, %181 : vector<2x32xf32>
    %184 = arith.divf %182, %183 : vector<2x32xf32>
    %185 = vector.extract_strided_slice %178 {offsets = [0, 32], sizes = [2, 32], strides = [1, 1]} : vector<2x128xf32> to vector<2x32xf32>
    %186 = arith.negf %185 : vector<2x32xf32>
    %187 = math.exp %186 : vector<2x32xf32>
    %cst_57 = arith.constant 1.000000e+00 : f32
    %188 = vector.broadcast %cst_57 : f32 to vector<2x32xf32>
    %189 = arith.addf %188, %187 : vector<2x32xf32>
    %190 = arith.divf %188, %189 : vector<2x32xf32>
    %191 = vector.extract_strided_slice %178 {offsets = [0, 64], sizes = [2, 32], strides = [1, 1]} : vector<2x128xf32> to vector<2x32xf32>
    %192 = math.tanh %191 : vector<2x32xf32>
    %193 = vector.extract_strided_slice %178 {offsets = [0, 96], sizes = [2, 32], strides = [1, 1]} : vector<2x128xf32> to vector<2x32xf32>
    %194 = arith.negf %193 : vector<2x32xf32>
    %195 = math.exp %194 : vector<2x32xf32>
    %cst_58 = arith.constant 1.000000e+00 : f32
    %196 = vector.broadcast %cst_58 : f32 to vector<2x32xf32>
    %197 = arith.addf %196, %195 : vector<2x32xf32>
    %198 = arith.divf %196, %197 : vector<2x32xf32>
    %199 = arith.mulf %190, %119 : vector<2x32xf32>
    %200 = arith.mulf %184, %192 : vector<2x32xf32>
    %201 = arith.addf %199, %200 : vector<2x32xf32>
    %202 = math.tanh %201 : vector<2x32xf32>
    %203 = arith.mulf %198, %202 : vector<2x32xf32>
    %204 = tpu.concatenate %203, %150 in 1 : vector<2x32xf32>, vector<2x32xf32> -> vector<2x64xf32>
    %cst_59 = arith.constant dense<0.000000e+00> : vector<2x128xf32>
    %205 = tpu.matmul %204, %1, %cst_59 {dimension_numbers = #tpu.dot_dimension_numbers<[1], [0], [0], [1], [0, 0, 1, 1], [], []>} : vector<2x64xf32>, vector<64x128xf32>, vector<2x128xf32> -> vector<2x128xf32>
    %206 = vector.broadcast %2 : vector<1x128xf32> to vector<2x128xf32>
    %207 = arith.addf %205, %206 : vector<2x128xf32>
    %208 = vector.extract_strided_slice %207 {offsets = [0, 0], sizes = [2, 32], strides = [1, 1]} : vector<2x128xf32> to vector<2x32xf32>
    %209 = arith.negf %208 : vector<2x32xf32>
    %210 = math.exp %209 : vector<2x32xf32>
    %cst_60 = arith.constant 1.000000e+00 : f32
    %211 = vector.broadcast %cst_60 : f32 to vector<2x32xf32>
    %212 = arith.addf %211, %210 : vector<2x32xf32>
    %213 = arith.divf %211, %212 : vector<2x32xf32>
    %214 = vector.extract_strided_slice %207 {offsets = [0, 32], sizes = [2, 32], strides = [1, 1]} : vector<2x128xf32> to vector<2x32xf32>
    %215 = arith.negf %214 : vector<2x32xf32>
    %216 = math.exp %215 : vector<2x32xf32>
    %cst_61 = arith.constant 1.000000e+00 : f32
    %217 = vector.broadcast %cst_61 : f32 to vector<2x32xf32>
    %218 = arith.addf %217, %216 : vector<2x32xf32>
    %219 = arith.divf %217, %218 : vector<2x32xf32>
    %220 = vector.extract_strided_slice %207 {offsets = [0, 64], sizes = [2, 32], strides = [1, 1]} : vector<2x128xf32> to vector<2x32xf32>
    %221 = math.tanh %220 : vector<2x32xf32>
    %222 = vector.extract_strided_slice %207 {offsets = [0, 96], sizes = [2, 32], strides = [1, 1]} : vector<2x128xf32> to vector<2x32xf32>
    %223 = arith.negf %222 : vector<2x32xf32>
    %224 = math.exp %223 : vector<2x32xf32>
    %cst_62 = arith.constant 1.000000e+00 : f32
    %225 = vector.broadcast %cst_62 : f32 to vector<2x32xf32>
    %226 = arith.addf %225, %224 : vector<2x32xf32>
    %227 = arith.divf %225, %226 : vector<2x32xf32>
    %228 = arith.mulf %219, %148 : vector<2x32xf32>
    %229 = arith.mulf %213, %221 : vector<2x32xf32>
    %230 = arith.addf %228, %229 : vector<2x32xf32>
    %231 = math.tanh %230 : vector<2x32xf32>
    %232 = arith.mulf %227, %231 : vector<2x32xf32>
    %233 = vector.shape_cast %232 : vector<2x32xf32> to vector<2x1x32xf32>
    "tpu.trace_start"() <{level = 10 : i32, message = "bqh,bhs->bqs"}> : () -> ()
    %cst_63 = arith.constant dense<0.000000e+00> : vector<2x1x8xf32>
    %234 = tpu.matmul %233, %6, %cst_63 {dimension_numbers = #tpu.dot_dimension_numbers<[2], [1], [1], [2], [0, 0, 0, 1, 1, 2], [0], [0]>} : vector<2x1x32xf32>, vector<2x32x8xf32>, vector<2x1x8xf32> -> vector<2x1x8xf32>
    "tpu.trace_stop"() : () -> ()
    %cst_64 = arith.constant dense<0xFF800000> : vector<2x1xf32>
    %235 = vector.multi_reduction <maximumf>, %234, %cst_64 [2] : vector<2x1x8xf32> to vector<2x1xf32>
    %236 = vector.shape_cast %235 : vector<2x1xf32> to vector<2x1x1xf32>
    %237 = vector.broadcast %236 : vector<2x1x1xf32> to vector<2x1x8xf32>
    %238 = arith.subf %234, %237 : vector<2x1x8xf32>
    %239 = math.exp %238 : vector<2x1x8xf32>
    "tpu.trace_start"() <{level = 10 : i32, message = "bqs,bsh->bqh"}> : () -> ()
    %cst_65 = arith.constant dense<0.000000e+00> : vector<2x1x32xf32>
    %240 = tpu.matmul %239, %5, %cst_65 {dimension_numbers = #tpu.dot_dimension_numbers<[2], [1], [1], [2], [0, 0, 0, 1, 1, 2], [0], [0]>} : vector<2x1x8xf32>, vector<2x8x32xf32>, vector<2x1x32xf32> -> vector<2x1x32xf32>
    "tpu.trace_stop"() : () -> ()
    %cst_66 = arith.constant dense<0.000000e+00> : vector<2x1xf32>
    %241 = vector.multi_reduction <add>, %239, %cst_66 [2] : vector<2x1x8xf32> to vector<2x1xf32>
    %242 = vector.shape_cast %241 : vector<2x1xf32> to vector<2x1x1xf32>
    %243 = tpu.reciprocal %242 {approx = true} : vector<2x1x1xf32> -> vector<2x1x1xf32>
    %244 = vector.broadcast %243 : vector<2x1x1xf32> to vector<2x1x32xf32>
    %245 = arith.mulf %240, %244 : vector<2x1x32xf32>
    %246 = vector.shape_cast %245 : vector<2x1x32xf32> to vector<2x32xf32>
    %247 = tpu.concatenate %246, %232 in 1 : vector<2x32xf32>, vector<2x32xf32> -> vector<2x64xf32>
    %cst_67 = arith.constant dense<0.000000e+00> : vector<2x32xf32>
    %248 = tpu.matmul %247, %3, %cst_67 {dimension_numbers = #tpu.dot_dimension_numbers<[1], [0], [0], [1], [0, 0, 1, 1], [], []>} : vector<2x64xf32>, vector<64x32xf32>, vector<2x32xf32> -> vector<2x32xf32>
    %249 = vector.broadcast %4 : vector<1x32xf32> to vector<2x32xf32>
    %250 = arith.addf %248, %249 : vector<2x32xf32>
    %251 = math.tanh %250 : vector<2x32xf32>
    %252 = arith.index_cast %c2_i32 : i32 to index
    %c0_68 = arith.constant 0 : index
    %c0_69 = arith.constant 0 : index
    %253 = vector.load %arg11[%252, %c0_68, %c0_69] : memref<8x2x32xf32, #tpu.memory_space<vmem>>, vector<1x2x32xf32>
    %254 = vector.shape_cast %253 : vector<1x2x32xf32> to vector<2x32xf32>
    %255 = vector.shape_cast %251 : vector<2x32xf32> to vector<1x2x32xf32>
    tpu.vector_store %arg11[%252, %c0_68, %c0_69], %255 {strides = array<i32>} : memref<8x2x32xf32, #tpu.memory_space<vmem>>, vector<1x2x32xf32>,
    %c3_i32 = arith.constant 3 : i32
    %256 = arith.index_cast %c3_i32 : i32 to index
    %c0_70 = arith.constant 0 : index
    %c0_71 = arith.constant 0 : index
    %257 = vector.load %arg1[%256, %c0_70, %c0_71] : memref<8x2x128xf32, #tpu.memory_space<vmem>>, vector<1x2x128xf32>
    %258 = vector.shape_cast %257 : vector<1x2x128xf32> to vector<2x128xf32>
    %cst_72 = arith.constant dense<0.000000e+00> : vector<2x128xf32>
    %259 = tpu.matmul %203, %0, %cst_72 {dimension_numbers = #tpu.dot_dimension_numbers<[1], [0], [0], [1], [0, 0, 1, 1], [], []>} : vector<2x32xf32>, vector<32x128xf32>, vector<2x128xf32> -> vector<2x128xf32>
    %260 = arith.addf %258, %259 : vector<2x128xf32>
    %261 = vector.extract_strided_slice %260 {offsets = [0, 0], sizes = [2, 32], strides = [1, 1]} : vector<2x128xf32> to vector<2x32xf32>
    %262 = arith.negf %261 : vector<2x32xf32>
    %263 = math.exp %262 : vector<2x32xf32>
    %cst_73 = arith.constant 1.000000e+00 : f32
    %264 = vector.broadcast %cst_73 : f32 to vector<2x32xf32>
    %265 = arith.addf %264, %263 : vector<2x32xf32>
    %266 = arith.divf %264, %265 : vector<2x32xf32>
    %267 = vector.extract_strided_slice %260 {offsets = [0, 32], sizes = [2, 32], strides = [1, 1]} : vector<2x128xf32> to vector<2x32xf32>
    %268 = arith.negf %267 : vector<2x32xf32>
    %269 = math.exp %268 : vector<2x32xf32>
    %cst_74 = arith.constant 1.000000e+00 : f32
    %270 = vector.broadcast %cst_74 : f32 to vector<2x32xf32>
    %271 = arith.addf %270, %269 : vector<2x32xf32>
    %272 = arith.divf %270, %271 : vector<2x32xf32>
    %273 = vector.extract_strided_slice %260 {offsets = [0, 64], sizes = [2, 32], strides = [1, 1]} : vector<2x128xf32> to vector<2x32xf32>
    %274 = math.tanh %273 : vector<2x32xf32>
    %275 = vector.extract_strided_slice %260 {offsets = [0, 96], sizes = [2, 32], strides = [1, 1]} : vector<2x128xf32> to vector<2x32xf32>
    %276 = arith.negf %275 : vector<2x32xf32>
    %277 = math.exp %276 : vector<2x32xf32>
    %cst_75 = arith.constant 1.000000e+00 : f32
    %278 = vector.broadcast %cst_75 : f32 to vector<2x32xf32>
    %279 = arith.addf %278, %277 : vector<2x32xf32>
    %280 = arith.divf %278, %279 : vector<2x32xf32>
    %281 = arith.mulf %272, %201 : vector<2x32xf32>
    %282 = arith.mulf %266, %274 : vector<2x32xf32>
    %283 = arith.addf %281, %282 : vector<2x32xf32>
    %284 = math.tanh %283 : vector<2x32xf32>
    %285 = arith.mulf %280, %284 : vector<2x32xf32>
    %286 = tpu.concatenate %285, %232 in 1 : vector<2x32xf32>, vector<2x32xf32> -> vector<2x64xf32>
    %cst_76 = arith.constant dense<0.000000e+00> : vector<2x128xf32>
    %287 = tpu.matmul %286, %1, %cst_76 {dimension_numbers = #tpu.dot_dimension_numbers<[1], [0], [0], [1], [0, 0, 1, 1], [], []>} : vector<2x64xf32>, vector<64x128xf32>, vector<2x128xf32> -> vector<2x128xf32>
    %288 = vector.broadcast %2 : vector<1x128xf32> to vector<2x128xf32>
    %289 = arith.addf %287, %288 : vector<2x128xf32>
    %290 = vector.extract_strided_slice %289 {offsets = [0, 0], sizes = [2, 32], strides = [1, 1]} : vector<2x128xf32> to vector<2x32xf32>
    %291 = arith.negf %290 : vector<2x32xf32>
    %292 = math.exp %291 : vector<2x32xf32>
    %cst_77 = arith.constant 1.000000e+00 : f32
    %293 = vector.broadcast %cst_77 : f32 to vector<2x32xf32>
    %294 = arith.addf %293, %292 : vector<2x32xf32>
    %295 = arith.divf %293, %294 : vector<2x32xf32>
    %296 = vector.extract_strided_slice %289 {offsets = [0, 32], sizes = [2, 32], strides = [1, 1]} : vector<2x128xf32> to vector<2x32xf32>
    %297 = arith.negf %296 : vector<2x32xf32>
    %298 = math.exp %297 : vector<2x32xf32>
    %cst_78 = arith.constant 1.000000e+00 : f32
    %299 = vector.broadcast %cst_78 : f32 to vector<2x32xf32>
    %300 = arith.addf %299, %298 : vector<2x32xf32>
    %301 = arith.divf %299, %300 : vector<2x32xf32>
    %302 = vector.extract_strided_slice %289 {offsets = [0, 64], sizes = [2, 32], strides = [1, 1]} : vector<2x128xf32> to vector<2x32xf32>
    %303 = math.tanh %302 : vector<2x32xf32>
    %304 = vector.extract_strided_slice %289 {offsets = [0, 96], sizes = [2, 32], strides = [1, 1]} : vector<2x128xf32> to vector<2x32xf32>
    %305 = arith.negf %304 : vector<2x32xf32>
    %306 = math.exp %305 : vector<2x32xf32>
    %cst_79 = arith.constant 1.000000e+00 : f32
    %307 = vector.broadcast %cst_79 : f32 to vector<2x32xf32>
    %308 = arith.addf %307, %306 : vector<2x32xf32>
    %309 = arith.divf %307, %308 : vector<2x32xf32>
    %310 = arith.mulf %301, %230 : vector<2x32xf32>
    %311 = arith.mulf %295, %303 : vector<2x32xf32>
    %312 = arith.addf %310, %311 : vector<2x32xf32>
    %313 = math.tanh %312 : vector<2x32xf32>
    %314 = arith.mulf %309, %313 : vector<2x32xf32>
    %315 = vector.shape_cast %314 : vector<2x32xf32> to vector<2x1x32xf32>
    "tpu.trace_start"() <{level = 10 : i32, message = "bqh,bhs->bqs"}> : () -> ()
    %cst_80 = arith.constant dense<0.000000e+00> : vector<2x1x8xf32>
    %316 = tpu.matmul %315, %6, %cst_80 {dimension_numbers = #tpu.dot_dimension_numbers<[2], [1], [1], [2], [0, 0, 0, 1, 1, 2], [0], [0]>} : vector<2x1x32xf32>, vector<2x32x8xf32>, vector<2x1x8xf32> -> vector<2x1x8xf32>
    "tpu.trace_stop"() : () -> ()
    %cst_81 = arith.constant dense<0xFF800000> : vector<2x1xf32>
    %317 = vector.multi_reduction <maximumf>, %316, %cst_81 [2] : vector<2x1x8xf32> to vector<2x1xf32>
    %318 = vector.shape_cast %317 : vector<2x1xf32> to vector<2x1x1xf32>
    %319 = vector.broadcast %318 : vector<2x1x1xf32> to vector<2x1x8xf32>
    %320 = arith.subf %316, %319 : vector<2x1x8xf32>
    %321 = math.exp %320 : vector<2x1x8xf32>
    "tpu.trace_start"() <{level = 10 : i32, message = "bqs,bsh->bqh"}> : () -> ()
    %cst_82 = arith.constant dense<0.000000e+00> : vector<2x1x32xf32>
    %322 = tpu.matmul %321, %5, %cst_82 {dimension_numbers = #tpu.dot_dimension_numbers<[2], [1], [1], [2], [0, 0, 0, 1, 1, 2], [0], [0]>} : vector<2x1x8xf32>, vector<2x8x32xf32>, vector<2x1x32xf32> -> vector<2x1x32xf32>
    "tpu.trace_stop"() : () -> ()
    %cst_83 = arith.constant dense<0.000000e+00> : vector<2x1xf32>
    %323 = vector.multi_reduction <add>, %321, %cst_83 [2] : vector<2x1x8xf32> to vector<2x1xf32>
    %324 = vector.shape_cast %323 : vector<2x1xf32> to vector<2x1x1xf32>
    %325 = tpu.reciprocal %324 {approx = true} : vector<2x1x1xf32> -> vector<2x1x1xf32>
    %326 = vector.broadcast %325 : vector<2x1x1xf32> to vector<2x1x32xf32>
    %327 = arith.mulf %322, %326 : vector<2x1x32xf32>
    %328 = vector.shape_cast %327 : vector<2x1x32xf32> to vector<2x32xf32>
    %329 = tpu.concatenate %328, %314 in 1 : vector<2x32xf32>, vector<2x32xf32> -> vector<2x64xf32>
    %cst_84 = arith.constant dense<0.000000e+00> : vector<2x32xf32>
    %330 = tpu.matmul %329, %3, %cst_84 {dimension_numbers = #tpu.dot_dimension_numbers<[1], [0], [0], [1], [0, 0, 1, 1], [], []>} : vector<2x64xf32>, vector<64x32xf32>, vector<2x32xf32> -> vector<2x32xf32>
    %331 = vector.broadcast %4 : vector<1x32xf32> to vector<2x32xf32>
    %332 = arith.addf %330, %331 : vector<2x32xf32>
    %333 = math.tanh %332 : vector<2x32xf32>
    %334 = arith.index_cast %c3_i32 : i32 to index
    %c0_85 = arith.constant 0 : index
    %c0_86 = arith.constant 0 : index
    %335 = vector.load %arg11[%334, %c0_85, %c0_86] : memref<8x2x32xf32, #tpu.memory_space<vmem>>, vector<1x2x32xf32>
    %336 = vector.shape_cast %335 : vector<1x2x32xf32> to vector<2x32xf32>
    %337 = vector.shape_cast %333 : vector<2x32xf32> to vector<1x2x32xf32>
    tpu.vector_store %arg11[%334, %c0_85, %c0_86], %337 {strides = array<i32>} : memref<8x2x32xf32, #tpu.memory_space<vmem>>, vector<1x2x32xf32>,
    %c4_i32 = arith.constant 4 : i32
    %338 = arith.index_cast %c4_i32 : i32 to index
    %c0_87 = arith.constant 0 : index
    %c0_88 = arith.constant 0 : index
    %339 = vector.load %arg1[%338, %c0_87, %c0_88] : memref<8x2x128xf32, #tpu.memory_space<vmem>>, vector<1x2x128xf32>
    %340 = vector.shape_cast %339 : vector<1x2x128xf32> to vector<2x128xf32>
    %cst_89 = arith.constant dense<0.000000e+00> : vector<2x128xf32>
    %341 = tpu.matmul %285, %0, %cst_89 {dimension_numbers = #tpu.dot_dimension_numbers<[1], [0], [0], [1], [0, 0, 1, 1], [], []>} : vector<2x32xf32>, vector<32x128xf32>, vector<2x128xf32> -> vector<2x128xf32>
    %342 = arith.addf %340, %341 : vector<2x128xf32>
    %343 = vector.extract_strided_slice %342 {offsets = [0, 0], sizes = [2, 32], strides = [1, 1]} : vector<2x128xf32> to vector<2x32xf32>
    %344 = arith.negf %343 : vector<2x32xf32>
    %345 = math.exp %344 : vector<2x32xf32>
    %cst_90 = arith.constant 1.000000e+00 : f32
    %346 = vector.broadcast %cst_90 : f32 to vector<2x32xf32>
    %347 = arith.addf %346, %345 : vector<2x32xf32>
    %348 = arith.divf %346, %347 : vector<2x32xf32>
    %349 = vector.extract_strided_slice %342 {offsets = [0, 32], sizes = [2, 32], strides = [1, 1]} : vector<2x128xf32> to vector<2x32xf32>
    %350 = arith.negf %349 : vector<2x32xf32>
    %351 = math.exp %350 : vector<2x32xf32>
    %cst_91 = arith.constant 1.000000e+00 : f32
    %352 = vector.broadcast %cst_91 : f32 to vector<2x32xf32>
    %353 = arith.addf %352, %351 : vector<2x32xf32>
    %354 = arith.divf %352, %353 : vector<2x32xf32>
    %355 = vector.extract_strided_slice %342 {offsets = [0, 64], sizes = [2, 32], strides = [1, 1]} : vector<2x128xf32> to vector<2x32xf32>
    %356 = math.tanh %355 : vector<2x32xf32>
    %357 = vector.extract_strided_slice %342 {offsets = [0, 96], sizes = [2, 32], strides = [1, 1]} : vector<2x128xf32> to vector<2x32xf32>
    %358 = arith.negf %357 : vector<2x32xf32>
    %359 = math.exp %358 : vector<2x32xf32>
    %cst_92 = arith.constant 1.000000e+00 : f32
    %360 = vector.broadcast %cst_92 : f32 to vector<2x32xf32>
    %361 = arith.addf %360, %359 : vector<2x32xf32>
    %362 = arith.divf %360, %361 : vector<2x32xf32>
    %363 = arith.mulf %354, %283 : vector<2x32xf32>
    %364 = arith.mulf %348, %356 : vector<2x32xf32>
    %365 = arith.addf %363, %364 : vector<2x32xf32>
    %366 = math.tanh %365 : vector<2x32xf32>
    %367 = arith.mulf %362, %366 : vector<2x32xf32>
    %368 = tpu.concatenate %367, %314 in 1 : vector<2x32xf32>, vector<2x32xf32> -> vector<2x64xf32>
    %cst_93 = arith.constant dense<0.000000e+00> : vector<2x128xf32>
    %369 = tpu.matmul %368, %1, %cst_93 {dimension_numbers = #tpu.dot_dimension_numbers<[1], [0], [0], [1], [0, 0, 1, 1], [], []>} : vector<2x64xf32>, vector<64x128xf32>, vector<2x128xf32> -> vector<2x128xf32>
    %370 = vector.broadcast %2 : vector<1x128xf32> to vector<2x128xf32>
    %371 = arith.addf %369, %370 : vector<2x128xf32>
    %372 = vector.extract_strided_slice %371 {offsets = [0, 0], sizes = [2, 32], strides = [1, 1]} : vector<2x128xf32> to vector<2x32xf32>
    %373 = arith.negf %372 : vector<2x32xf32>
    %374 = math.exp %373 : vector<2x32xf32>
    %cst_94 = arith.constant 1.000000e+00 : f32
    %375 = vector.broadcast %cst_94 : f32 to vector<2x32xf32>
    %376 = arith.addf %375, %374 : vector<2x32xf32>
    %377 = arith.divf %375, %376 : vector<2x32xf32>
    %378 = vector.extract_strided_slice %371 {offsets = [0, 32], sizes = [2, 32], strides = [1, 1]} : vector<2x128xf32> to vector<2x32xf32>
    %379 = arith.negf %378 : vector<2x32xf32>
    %380 = math.exp %379 : vector<2x32xf32>
    %cst_95 = arith.constant 1.000000e+00 : f32
    %381 = vector.broadcast %cst_95 : f32 to vector<2x32xf32>
    %382 = arith.addf %381, %380 : vector<2x32xf32>
    %383 = arith.divf %381, %382 : vector<2x32xf32>
    %384 = vector.extract_strided_slice %371 {offsets = [0, 64], sizes = [2, 32], strides = [1, 1]} : vector<2x128xf32> to vector<2x32xf32>
    %385 = math.tanh %384 : vector<2x32xf32>
    %386 = vector.extract_strided_slice %371 {offsets = [0, 96], sizes = [2, 32], strides = [1, 1]} : vector<2x128xf32> to vector<2x32xf32>
    %387 = arith.negf %386 : vector<2x32xf32>
    %388 = math.exp %387 : vector<2x32xf32>
    %cst_96 = arith.constant 1.000000e+00 : f32
    %389 = vector.broadcast %cst_96 : f32 to vector<2x32xf32>
    %390 = arith.addf %389, %388 : vector<2x32xf32>
    %391 = arith.divf %389, %390 : vector<2x32xf32>
    %392 = arith.mulf %383, %312 : vector<2x32xf32>
    %393 = arith.mulf %377, %385 : vector<2x32xf32>
    %394 = arith.addf %392, %393 : vector<2x32xf32>
    %395 = math.tanh %394 : vector<2x32xf32>
    %396 = arith.mulf %391, %395 : vector<2x32xf32>
    %397 = vector.shape_cast %396 : vector<2x32xf32> to vector<2x1x32xf32>
    "tpu.trace_start"() <{level = 10 : i32, message = "bqh,bhs->bqs"}> : () -> ()
    %cst_97 = arith.constant dense<0.000000e+00> : vector<2x1x8xf32>
    %398 = tpu.matmul %397, %6, %cst_97 {dimension_numbers = #tpu.dot_dimension_numbers<[2], [1], [1], [2], [0, 0, 0, 1, 1, 2], [0], [0]>} : vector<2x1x32xf32>, vector<2x32x8xf32>, vector<2x1x8xf32> -> vector<2x1x8xf32>
    "tpu.trace_stop"() : () -> ()
    %cst_98 = arith.constant dense<0xFF800000> : vector<2x1xf32>
    %399 = vector.multi_reduction <maximumf>, %398, %cst_98 [2] : vector<2x1x8xf32> to vector<2x1xf32>
    %400 = vector.shape_cast %399 : vector<2x1xf32> to vector<2x1x1xf32>
    %401 = vector.broadcast %400 : vector<2x1x1xf32> to vector<2x1x8xf32>
    %402 = arith.subf %398, %401 : vector<2x1x8xf32>
    %403 = math.exp %402 : vector<2x1x8xf32>
    "tpu.trace_start"() <{level = 10 : i32, message = "bqs,bsh->bqh"}> : () -> ()
    %cst_99 = arith.constant dense<0.000000e+00> : vector<2x1x32xf32>
    %404 = tpu.matmul %403, %5, %cst_99 {dimension_numbers = #tpu.dot_dimension_numbers<[2], [1], [1], [2], [0, 0, 0, 1, 1, 2], [0], [0]>} : vector<2x1x8xf32>, vector<2x8x32xf32>, vector<2x1x32xf32> -> vector<2x1x32xf32>
    "tpu.trace_stop"() : () -> ()
    %cst_100 = arith.constant dense<0.000000e+00> : vector<2x1xf32>
    %405 = vector.multi_reduction <add>, %403, %cst_100 [2] : vector<2x1x8xf32> to vector<2x1xf32>
    %406 = vector.shape_cast %405 : vector<2x1xf32> to vector<2x1x1xf32>
    %407 = tpu.reciprocal %406 {approx = true} : vector<2x1x1xf32> -> vector<2x1x1xf32>
    %408 = vector.broadcast %407 : vector<2x1x1xf32> to vector<2x1x32xf32>
    %409 = arith.mulf %404, %408 : vector<2x1x32xf32>
    %410 = vector.shape_cast %409 : vector<2x1x32xf32> to vector<2x32xf32>
    %411 = tpu.concatenate %410, %396 in 1 : vector<2x32xf32>, vector<2x32xf32> -> vector<2x64xf32>
    %cst_101 = arith.constant dense<0.000000e+00> : vector<2x32xf32>
    %412 = tpu.matmul %411, %3, %cst_101 {dimension_numbers = #tpu.dot_dimension_numbers<[1], [0], [0], [1], [0, 0, 1, 1], [], []>} : vector<2x64xf32>, vector<64x32xf32>, vector<2x32xf32> -> vector<2x32xf32>
    %413 = vector.broadcast %4 : vector<1x32xf32> to vector<2x32xf32>
    %414 = arith.addf %412, %413 : vector<2x32xf32>
    %415 = math.tanh %414 : vector<2x32xf32>
    %416 = arith.index_cast %c4_i32 : i32 to index
    %c0_102 = arith.constant 0 : index
    %c0_103 = arith.constant 0 : index
    %417 = vector.load %arg11[%416, %c0_102, %c0_103] : memref<8x2x32xf32, #tpu.memory_space<vmem>>, vector<1x2x32xf32>
    %418 = vector.shape_cast %417 : vector<1x2x32xf32> to vector<2x32xf32>
    %419 = vector.shape_cast %415 : vector<2x32xf32> to vector<1x2x32xf32>
    tpu.vector_store %arg11[%416, %c0_102, %c0_103], %419 {strides = array<i32>} : memref<8x2x32xf32, #tpu.memory_space<vmem>>, vector<1x2x32xf32>,
    %c5_i32 = arith.constant 5 : i32
    %420 = arith.index_cast %c5_i32 : i32 to index
    %c0_104 = arith.constant 0 : index
    %c0_105 = arith.constant 0 : index
    %421 = vector.load %arg1[%420, %c0_104, %c0_105] : memref<8x2x128xf32, #tpu.memory_space<vmem>>, vector<1x2x128xf32>
    %422 = vector.shape_cast %421 : vector<1x2x128xf32> to vector<2x128xf32>
    %cst_106 = arith.constant dense<0.000000e+00> : vector<2x128xf32>
    %423 = tpu.matmul %367, %0, %cst_106 {dimension_numbers = #tpu.dot_dimension_numbers<[1], [0], [0], [1], [0, 0, 1, 1], [], []>} : vector<2x32xf32>, vector<32x128xf32>, vector<2x128xf32> -> vector<2x128xf32>
    %424 = arith.addf %422, %423 : vector<2x128xf32>
    %425 = vector.extract_strided_slice %424 {offsets = [0, 0], sizes = [2, 32], strides = [1, 1]} : vector<2x128xf32> to vector<2x32xf32>
    %426 = arith.negf %425 : vector<2x32xf32>
    %427 = math.exp %426 : vector<2x32xf32>
    %cst_107 = arith.constant 1.000000e+00 : f32
    %428 = vector.broadcast %cst_107 : f32 to vector<2x32xf32>
    %429 = arith.addf %428, %427 : vector<2x32xf32>
    %430 = arith.divf %428, %429 : vector<2x32xf32>
    %431 = vector.extract_strided_slice %424 {offsets = [0, 32], sizes = [2, 32], strides = [1, 1]} : vector<2x128xf32> to vector<2x32xf32>
    %432 = arith.negf %431 : vector<2x32xf32>
    %433 = math.exp %432 : vector<2x32xf32>
    %cst_108 = arith.constant 1.000000e+00 : f32
    %434 = vector.broadcast %cst_108 : f32 to vector<2x32xf32>
    %435 = arith.addf %434, %433 : vector<2x32xf32>
    %436 = arith.divf %434, %435 : vector<2x32xf32>
    %437 = vector.extract_strided_slice %424 {offsets = [0, 64], sizes = [2, 32], strides = [1, 1]} : vector<2x128xf32> to vector<2x32xf32>
    %438 = math.tanh %437 : vector<2x32xf32>
    %439 = vector.extract_strided_slice %424 {offsets = [0, 96], sizes = [2, 32], strides = [1, 1]} : vector<2x128xf32> to vector<2x32xf32>
    %440 = arith.negf %439 : vector<2x32xf32>
    %441 = math.exp %440 : vector<2x32xf32>
    %cst_109 = arith.constant 1.000000e+00 : f32
    %442 = vector.broadcast %cst_109 : f32 to vector<2x32xf32>
    %443 = arith.addf %442, %441 : vector<2x32xf32>
    %444 = arith.divf %442, %443 : vector<2x32xf32>
    %445 = arith.mulf %436, %365 : vector<2x32xf32>
    %446 = arith.mulf %430, %438 : vector<2x32xf32>
    %447 = arith.addf %445, %446 : vector<2x32xf32>
    %448 = math.tanh %447 : vector<2x32xf32>
    %449 = arith.mulf %444, %448 : vector<2x32xf32>
    %450 = tpu.concatenate %449, %396 in 1 : vector<2x32xf32>, vector<2x32xf32> -> vector<2x64xf32>
    %cst_110 = arith.constant dense<0.000000e+00> : vector<2x128xf32>
    %451 = tpu.matmul %450, %1, %cst_110 {dimension_numbers = #tpu.dot_dimension_numbers<[1], [0], [0], [1], [0, 0, 1, 1], [], []>} : vector<2x64xf32>, vector<64x128xf32>, vector<2x128xf32> -> vector<2x128xf32>
    %452 = vector.broadcast %2 : vector<1x128xf32> to vector<2x128xf32>
    %453 = arith.addf %451, %452 : vector<2x128xf32>
    %454 = vector.extract_strided_slice %453 {offsets = [0, 0], sizes = [2, 32], strides = [1, 1]} : vector<2x128xf32> to vector<2x32xf32>
    %455 = arith.negf %454 : vector<2x32xf32>
    %456 = math.exp %455 : vector<2x32xf32>
    %cst_111 = arith.constant 1.000000e+00 : f32
    %457 = vector.broadcast %cst_111 : f32 to vector<2x32xf32>
    %458 = arith.addf %457, %456 : vector<2x32xf32>
    %459 = arith.divf %457, %458 : vector<2x32xf32>
    %460 = vector.extract_strided_slice %453 {offsets = [0, 32], sizes = [2, 32], strides = [1, 1]} : vector<2x128xf32> to vector<2x32xf32>
    %461 = arith.negf %460 : vector<2x32xf32>
    %462 = math.exp %461 : vector<2x32xf32>
    %cst_112 = arith.constant 1.000000e+00 : f32
    %463 = vector.broadcast %cst_112 : f32 to vector<2x32xf32>
    %464 = arith.addf %463, %462 : vector<2x32xf32>
    %465 = arith.divf %463, %464 : vector<2x32xf32>
    %466 = vector.extract_strided_slice %453 {offsets = [0, 64], sizes = [2, 32], strides = [1, 1]} : vector<2x128xf32> to vector<2x32xf32>
    %467 = math.tanh %466 : vector<2x32xf32>
    %468 = vector.extract_strided_slice %453 {offsets = [0, 96], sizes = [2, 32], strides = [1, 1]} : vector<2x128xf32> to vector<2x32xf32>
    %469 = arith.negf %468 : vector<2x32xf32>
    %470 = math.exp %469 : vector<2x32xf32>
    %cst_113 = arith.constant 1.000000e+00 : f32
    %471 = vector.broadcast %cst_113 : f32 to vector<2x32xf32>
    %472 = arith.addf %471, %470 : vector<2x32xf32>
    %473 = arith.divf %471, %472 : vector<2x32xf32>
    %474 = arith.mulf %465, %394 : vector<2x32xf32>
    %475 = arith.mulf %459, %467 : vector<2x32xf32>
    %476 = arith.addf %474, %475 : vector<2x32xf32>
    %477 = math.tanh %476 : vector<2x32xf32>
    %478 = arith.mulf %473, %477 : vector<2x32xf32>
    %479 = vector.shape_cast %478 : vector<2x32xf32> to vector<2x1x32xf32>
    "tpu.trace_start"() <{level = 10 : i32, message = "bqh,bhs->bqs"}> : () -> ()
    %cst_114 = arith.constant dense<0.000000e+00> : vector<2x1x8xf32>
    %480 = tpu.matmul %479, %6, %cst_114 {dimension_numbers = #tpu.dot_dimension_numbers<[2], [1], [1], [2], [0, 0, 0, 1, 1, 2], [0], [0]>} : vector<2x1x32xf32>, vector<2x32x8xf32>, vector<2x1x8xf32> -> vector<2x1x8xf32>
    "tpu.trace_stop"() : () -> ()
    %cst_115 = arith.constant dense<0xFF800000> : vector<2x1xf32>
    %481 = vector.multi_reduction <maximumf>, %480, %cst_115 [2] : vector<2x1x8xf32> to vector<2x1xf32>
    %482 = vector.shape_cast %481 : vector<2x1xf32> to vector<2x1x1xf32>
    %483 = vector.broadcast %482 : vector<2x1x1xf32> to vector<2x1x8xf32>
    %484 = arith.subf %480, %483 : vector<2x1x8xf32>
    %485 = math.exp %484 : vector<2x1x8xf32>
    "tpu.trace_start"() <{level = 10 : i32, message = "bqs,bsh->bqh"}> : () -> ()
    %cst_116 = arith.constant dense<0.000000e+00> : vector<2x1x32xf32>
    %486 = tpu.matmul %485, %5, %cst_116 {dimension_numbers = #tpu.dot_dimension_numbers<[2], [1], [1], [2], [0, 0, 0, 1, 1, 2], [0], [0]>} : vector<2x1x8xf32>, vector<2x8x32xf32>, vector<2x1x32xf32> -> vector<2x1x32xf32>
    "tpu.trace_stop"() : () -> ()
    %cst_117 = arith.constant dense<0.000000e+00> : vector<2x1xf32>
    %487 = vector.multi_reduction <add>, %485, %cst_117 [2] : vector<2x1x8xf32> to vector<2x1xf32>
    %488 = vector.shape_cast %487 : vector<2x1xf32> to vector<2x1x1xf32>
    %489 = tpu.reciprocal %488 {approx = true} : vector<2x1x1xf32> -> vector<2x1x1xf32>
    %490 = vector.broadcast %489 : vector<2x1x1xf32> to vector<2x1x32xf32>
    %491 = arith.mulf %486, %490 : vector<2x1x32xf32>
    %492 = vector.shape_cast %491 : vector<2x1x32xf32> to vector<2x32xf32>
    %493 = tpu.concatenate %492, %478 in 1 : vector<2x32xf32>, vector<2x32xf32> -> vector<2x64xf32>
    %cst_118 = arith.constant dense<0.000000e+00> : vector<2x32xf32>
    %494 = tpu.matmul %493, %3, %cst_118 {dimension_numbers = #tpu.dot_dimension_numbers<[1], [0], [0], [1], [0, 0, 1, 1], [], []>} : vector<2x64xf32>, vector<64x32xf32>, vector<2x32xf32> -> vector<2x32xf32>
    %495 = vector.broadcast %4 : vector<1x32xf32> to vector<2x32xf32>
    %496 = arith.addf %494, %495 : vector<2x32xf32>
    %497 = math.tanh %496 : vector<2x32xf32>
    %498 = arith.index_cast %c5_i32 : i32 to index
    %c0_119 = arith.constant 0 : index
    %c0_120 = arith.constant 0 : index
    %499 = vector.load %arg11[%498, %c0_119, %c0_120] : memref<8x2x32xf32, #tpu.memory_space<vmem>>, vector<1x2x32xf32>
    %500 = vector.shape_cast %499 : vector<1x2x32xf32> to vector<2x32xf32>
    %501 = vector.shape_cast %497 : vector<2x32xf32> to vector<1x2x32xf32>
    tpu.vector_store %arg11[%498, %c0_119, %c0_120], %501 {strides = array<i32>} : memref<8x2x32xf32, #tpu.memory_space<vmem>>, vector<1x2x32xf32>,
    %c6_i32 = arith.constant 6 : i32
    %502 = arith.index_cast %c6_i32 : i32 to index
    %c0_121 = arith.constant 0 : index
    %c0_122 = arith.constant 0 : index
    %503 = vector.load %arg1[%502, %c0_121, %c0_122] : memref<8x2x128xf32, #tpu.memory_space<vmem>>, vector<1x2x128xf32>
    %504 = vector.shape_cast %503 : vector<1x2x128xf32> to vector<2x128xf32>
    %cst_123 = arith.constant dense<0.000000e+00> : vector<2x128xf32>
    %505 = tpu.matmul %449, %0, %cst_123 {dimension_numbers = #tpu.dot_dimension_numbers<[1], [0], [0], [1], [0, 0, 1, 1], [], []>} : vector<2x32xf32>, vector<32x128xf32>, vector<2x128xf32> -> vector<2x128xf32>
    %506 = arith.addf %504, %505 : vector<2x128xf32>
    %507 = vector.extract_strided_slice %506 {offsets = [0, 0], sizes = [2, 32], strides = [1, 1]} : vector<2x128xf32> to vector<2x32xf32>
    %508 = arith.negf %507 : vector<2x32xf32>
    %509 = math.exp %508 : vector<2x32xf32>
    %cst_124 = arith.constant 1.000000e+00 : f32
    %510 = vector.broadcast %cst_124 : f32 to vector<2x32xf32>
    %511 = arith.addf %510, %509 : vector<2x32xf32>
    %512 = arith.divf %510, %511 : vector<2x32xf32>
    %513 = vector.extract_strided_slice %506 {offsets = [0, 32], sizes = [2, 32], strides = [1, 1]} : vector<2x128xf32> to vector<2x32xf32>
    %514 = arith.negf %513 : vector<2x32xf32>
    %515 = math.exp %514 : vector<2x32xf32>
    %cst_125 = arith.constant 1.000000e+00 : f32
    %516 = vector.broadcast %cst_125 : f32 to vector<2x32xf32>
    %517 = arith.addf %516, %515 : vector<2x32xf32>
    %518 = arith.divf %516, %517 : vector<2x32xf32>
    %519 = vector.extract_strided_slice %506 {offsets = [0, 64], sizes = [2, 32], strides = [1, 1]} : vector<2x128xf32> to vector<2x32xf32>
    %520 = math.tanh %519 : vector<2x32xf32>
    %521 = vector.extract_strided_slice %506 {offsets = [0, 96], sizes = [2, 32], strides = [1, 1]} : vector<2x128xf32> to vector<2x32xf32>
    %522 = arith.negf %521 : vector<2x32xf32>
    %523 = math.exp %522 : vector<2x32xf32>
    %cst_126 = arith.constant 1.000000e+00 : f32
    %524 = vector.broadcast %cst_126 : f32 to vector<2x32xf32>
    %525 = arith.addf %524, %523 : vector<2x32xf32>
    %526 = arith.divf %524, %525 : vector<2x32xf32>
    %527 = arith.mulf %518, %447 : vector<2x32xf32>
    %528 = arith.mulf %512, %520 : vector<2x32xf32>
    %529 = arith.addf %527, %528 : vector<2x32xf32>
    %530 = math.tanh %529 : vector<2x32xf32>
    %531 = arith.mulf %526, %530 : vector<2x32xf32>
    %532 = tpu.concatenate %531, %478 in 1 : vector<2x32xf32>, vector<2x32xf32> -> vector<2x64xf32>
    %cst_127 = arith.constant dense<0.000000e+00> : vector<2x128xf32>
    %533 = tpu.matmul %532, %1, %cst_127 {dimension_numbers = #tpu.dot_dimension_numbers<[1], [0], [0], [1], [0, 0, 1, 1], [], []>} : vector<2x64xf32>, vector<64x128xf32>, vector<2x128xf32> -> vector<2x128xf32>
    %534 = vector.broadcast %2 : vector<1x128xf32> to vector<2x128xf32>
    %535 = arith.addf %533, %534 : vector<2x128xf32>
    %536 = vector.extract_strided_slice %535 {offsets = [0, 0], sizes = [2, 32], strides = [1, 1]} : vector<2x128xf32> to vector<2x32xf32>
    %537 = arith.negf %536 : vector<2x32xf32>
    %538 = math.exp %537 : vector<2x32xf32>
    %cst_128 = arith.constant 1.000000e+00 : f32
    %539 = vector.broadcast %cst_128 : f32 to vector<2x32xf32>
    %540 = arith.addf %539, %538 : vector<2x32xf32>
    %541 = arith.divf %539, %540 : vector<2x32xf32>
    %542 = vector.extract_strided_slice %535 {offsets = [0, 32], sizes = [2, 32], strides = [1, 1]} : vector<2x128xf32> to vector<2x32xf32>
    %543 = arith.negf %542 : vector<2x32xf32>
    %544 = math.exp %543 : vector<2x32xf32>
    %cst_129 = arith.constant 1.000000e+00 : f32
    %545 = vector.broadcast %cst_129 : f32 to vector<2x32xf32>
    %546 = arith.addf %545, %544 : vector<2x32xf32>
    %547 = arith.divf %545, %546 : vector<2x32xf32>
    %548 = vector.extract_strided_slice %535 {offsets = [0, 64], sizes = [2, 32], strides = [1, 1]} : vector<2x128xf32> to vector<2x32xf32>
    %549 = math.tanh %548 : vector<2x32xf32>
    %550 = vector.extract_strided_slice %535 {offsets = [0, 96], sizes = [2, 32], strides = [1, 1]} : vector<2x128xf32> to vector<2x32xf32>
    %551 = arith.negf %550 : vector<2x32xf32>
    %552 = math.exp %551 : vector<2x32xf32>
    %cst_130 = arith.constant 1.000000e+00 : f32
    %553 = vector.broadcast %cst_130 : f32 to vector<2x32xf32>
    %554 = arith.addf %553, %552 : vector<2x32xf32>
    %555 = arith.divf %553, %554 : vector<2x32xf32>
    %556 = arith.mulf %547, %476 : vector<2x32xf32>
    %557 = arith.mulf %541, %549 : vector<2x32xf32>
    %558 = arith.addf %556, %557 : vector<2x32xf32>
    %559 = math.tanh %558 : vector<2x32xf32>
    %560 = arith.mulf %555, %559 : vector<2x32xf32>
    %561 = vector.shape_cast %560 : vector<2x32xf32> to vector<2x1x32xf32>
    "tpu.trace_start"() <{level = 10 : i32, message = "bqh,bhs->bqs"}> : () -> ()
    %cst_131 = arith.constant dense<0.000000e+00> : vector<2x1x8xf32>
    %562 = tpu.matmul %561, %6, %cst_131 {dimension_numbers = #tpu.dot_dimension_numbers<[2], [1], [1], [2], [0, 0, 0, 1, 1, 2], [0], [0]>} : vector<2x1x32xf32>, vector<2x32x8xf32>, vector<2x1x8xf32> -> vector<2x1x8xf32>
    "tpu.trace_stop"() : () -> ()
    %cst_132 = arith.constant dense<0xFF800000> : vector<2x1xf32>
    %563 = vector.multi_reduction <maximumf>, %562, %cst_132 [2] : vector<2x1x8xf32> to vector<2x1xf32>
    %564 = vector.shape_cast %563 : vector<2x1xf32> to vector<2x1x1xf32>
    %565 = vector.broadcast %564 : vector<2x1x1xf32> to vector<2x1x8xf32>
    %566 = arith.subf %562, %565 : vector<2x1x8xf32>
    %567 = math.exp %566 : vector<2x1x8xf32>
    "tpu.trace_start"() <{level = 10 : i32, message = "bqs,bsh->bqh"}> : () -> ()
    %cst_133 = arith.constant dense<0.000000e+00> : vector<2x1x32xf32>
    %568 = tpu.matmul %567, %5, %cst_133 {dimension_numbers = #tpu.dot_dimension_numbers<[2], [1], [1], [2], [0, 0, 0, 1, 1, 2], [0], [0]>} : vector<2x1x8xf32>, vector<2x8x32xf32>, vector<2x1x32xf32> -> vector<2x1x32xf32>
    "tpu.trace_stop"() : () -> ()
    %cst_134 = arith.constant dense<0.000000e+00> : vector<2x1xf32>
    %569 = vector.multi_reduction <add>, %567, %cst_134 [2] : vector<2x1x8xf32> to vector<2x1xf32>
    %570 = vector.shape_cast %569 : vector<2x1xf32> to vector<2x1x1xf32>
    %571 = tpu.reciprocal %570 {approx = true} : vector<2x1x1xf32> -> vector<2x1x1xf32>
    %572 = vector.broadcast %571 : vector<2x1x1xf32> to vector<2x1x32xf32>
    %573 = arith.mulf %568, %572 : vector<2x1x32xf32>
    %574 = vector.shape_cast %573 : vector<2x1x32xf32> to vector<2x32xf32>
    %575 = tpu.concatenate %574, %560 in 1 : vector<2x32xf32>, vector<2x32xf32> -> vector<2x64xf32>
    %cst_135 = arith.constant dense<0.000000e+00> : vector<2x32xf32>
    %576 = tpu.matmul %575, %3, %cst_135 {dimension_numbers = #tpu.dot_dimension_numbers<[1], [0], [0], [1], [0, 0, 1, 1], [], []>} : vector<2x64xf32>, vector<64x32xf32>, vector<2x32xf32> -> vector<2x32xf32>
    %577 = vector.broadcast %4 : vector<1x32xf32> to vector<2x32xf32>
    %578 = arith.addf %576, %577 : vector<2x32xf32>
    %579 = math.tanh %578 : vector<2x32xf32>
    %580 = arith.index_cast %c6_i32 : i32 to index
    %c0_136 = arith.constant 0 : index
    %c0_137 = arith.constant 0 : index
    %581 = vector.load %arg11[%580, %c0_136, %c0_137] : memref<8x2x32xf32, #tpu.memory_space<vmem>>, vector<1x2x32xf32>
    %582 = vector.shape_cast %581 : vector<1x2x32xf32> to vector<2x32xf32>
    %583 = vector.shape_cast %579 : vector<2x32xf32> to vector<1x2x32xf32>
    tpu.vector_store %arg11[%580, %c0_136, %c0_137], %583 {strides = array<i32>} : memref<8x2x32xf32, #tpu.memory_space<vmem>>, vector<1x2x32xf32>,
    %c7_i32 = arith.constant 7 : i32
    %584 = arith.index_cast %c7_i32 : i32 to index
    %c0_138 = arith.constant 0 : index
    %c0_139 = arith.constant 0 : index
    %585 = vector.load %arg1[%584, %c0_138, %c0_139] : memref<8x2x128xf32, #tpu.memory_space<vmem>>, vector<1x2x128xf32>
    %586 = vector.shape_cast %585 : vector<1x2x128xf32> to vector<2x128xf32>
    %cst_140 = arith.constant dense<0.000000e+00> : vector<2x128xf32>
    %587 = tpu.matmul %531, %0, %cst_140 {dimension_numbers = #tpu.dot_dimension_numbers<[1], [0], [0], [1], [0, 0, 1, 1], [], []>} : vector<2x32xf32>, vector<32x128xf32>, vector<2x128xf32> -> vector<2x128xf32>
    %588 = arith.addf %586, %587 : vector<2x128xf32>
    %589 = vector.extract_strided_slice %588 {offsets = [0, 0], sizes = [2, 32], strides = [1, 1]} : vector<2x128xf32> to vector<2x32xf32>
    %590 = arith.negf %589 : vector<2x32xf32>
    %591 = math.exp %590 : vector<2x32xf32>
    %cst_141 = arith.constant 1.000000e+00 : f32
    %592 = vector.broadcast %cst_141 : f32 to vector<2x32xf32>
    %593 = arith.addf %592, %591 : vector<2x32xf32>
    %594 = arith.divf %592, %593 : vector<2x32xf32>
    %595 = vector.extract_strided_slice %588 {offsets = [0, 32], sizes = [2, 32], strides = [1, 1]} : vector<2x128xf32> to vector<2x32xf32>
    %596 = arith.negf %595 : vector<2x32xf32>
    %597 = math.exp %596 : vector<2x32xf32>
    %cst_142 = arith.constant 1.000000e+00 : f32
    %598 = vector.broadcast %cst_142 : f32 to vector<2x32xf32>
    %599 = arith.addf %598, %597 : vector<2x32xf32>
    %600 = arith.divf %598, %599 : vector<2x32xf32>
    %601 = vector.extract_strided_slice %588 {offsets = [0, 64], sizes = [2, 32], strides = [1, 1]} : vector<2x128xf32> to vector<2x32xf32>
    %602 = math.tanh %601 : vector<2x32xf32>
    %603 = vector.extract_strided_slice %588 {offsets = [0, 96], sizes = [2, 32], strides = [1, 1]} : vector<2x128xf32> to vector<2x32xf32>
    %604 = arith.negf %603 : vector<2x32xf32>
    %605 = math.exp %604 : vector<2x32xf32>
    %cst_143 = arith.constant 1.000000e+00 : f32
    %606 = vector.broadcast %cst_143 : f32 to vector<2x32xf32>
    %607 = arith.addf %606, %605 : vector<2x32xf32>
    %608 = arith.divf %606, %607 : vector<2x32xf32>
    %609 = arith.mulf %600, %529 : vector<2x32xf32>
    %610 = arith.mulf %594, %602 : vector<2x32xf32>
    %611 = arith.addf %609, %610 : vector<2x32xf32>
    %612 = math.tanh %611 : vector<2x32xf32>
    %613 = arith.mulf %608, %612 : vector<2x32xf32>
    %614 = tpu.concatenate %613, %560 in 1 : vector<2x32xf32>, vector<2x32xf32> -> vector<2x64xf32>
    %cst_144 = arith.constant dense<0.000000e+00> : vector<2x128xf32>
    %615 = tpu.matmul %614, %1, %cst_144 {dimension_numbers = #tpu.dot_dimension_numbers<[1], [0], [0], [1], [0, 0, 1, 1], [], []>} : vector<2x64xf32>, vector<64x128xf32>, vector<2x128xf32> -> vector<2x128xf32>
    %616 = vector.broadcast %2 : vector<1x128xf32> to vector<2x128xf32>
    %617 = arith.addf %615, %616 : vector<2x128xf32>
    %618 = vector.extract_strided_slice %617 {offsets = [0, 0], sizes = [2, 32], strides = [1, 1]} : vector<2x128xf32> to vector<2x32xf32>
    %619 = arith.negf %618 : vector<2x32xf32>
    %620 = math.exp %619 : vector<2x32xf32>
    %cst_145 = arith.constant 1.000000e+00 : f32
    %621 = vector.broadcast %cst_145 : f32 to vector<2x32xf32>
    %622 = arith.addf %621, %620 : vector<2x32xf32>
    %623 = arith.divf %621, %622 : vector<2x32xf32>
    %624 = vector.extract_strided_slice %617 {offsets = [0, 32], sizes = [2, 32], strides = [1, 1]} : vector<2x128xf32> to vector<2x32xf32>
    %625 = arith.negf %624 : vector<2x32xf32>
    %626 = math.exp %625 : vector<2x32xf32>
    %cst_146 = arith.constant 1.000000e+00 : f32
    %627 = vector.broadcast %cst_146 : f32 to vector<2x32xf32>
    %628 = arith.addf %627, %626 : vector<2x32xf32>
    %629 = arith.divf %627, %628 : vector<2x32xf32>
    %630 = vector.extract_strided_slice %617 {offsets = [0, 64], sizes = [2, 32], strides = [1, 1]} : vector<2x128xf32> to vector<2x32xf32>
    %631 = math.tanh %630 : vector<2x32xf32>
    %632 = vector.extract_strided_slice %617 {offsets = [0, 96], sizes = [2, 32], strides = [1, 1]} : vector<2x128xf32> to vector<2x32xf32>
    %633 = arith.negf %632 : vector<2x32xf32>
    %634 = math.exp %633 : vector<2x32xf32>
    %cst_147 = arith.constant 1.000000e+00 : f32
    %635 = vector.broadcast %cst_147 : f32 to vector<2x32xf32>
    %636 = arith.addf %635, %634 : vector<2x32xf32>
    %637 = arith.divf %635, %636 : vector<2x32xf32>
    %638 = arith.mulf %629, %558 : vector<2x32xf32>
    %639 = arith.mulf %623, %631 : vector<2x32xf32>
    %640 = arith.addf %638, %639 : vector<2x32xf32>
    %641 = math.tanh %640 : vector<2x32xf32>
    %642 = arith.mulf %637, %641 : vector<2x32xf32>
    %643 = vector.shape_cast %642 : vector<2x32xf32> to vector<2x1x32xf32>
    "tpu.trace_start"() <{level = 10 : i32, message = "bqh,bhs->bqs"}> : () -> ()
    %cst_148 = arith.constant dense<0.000000e+00> : vector<2x1x8xf32>
    %644 = tpu.matmul %643, %6, %cst_148 {dimension_numbers = #tpu.dot_dimension_numbers<[2], [1], [1], [2], [0, 0, 0, 1, 1, 2], [0], [0]>} : vector<2x1x32xf32>, vector<2x32x8xf32>, vector<2x1x8xf32> -> vector<2x1x8xf32>
    "tpu.trace_stop"() : () -> ()
    %cst_149 = arith.constant dense<0xFF800000> : vector<2x1xf32>
    %645 = vector.multi_reduction <maximumf>, %644, %cst_149 [2] : vector<2x1x8xf32> to vector<2x1xf32>
    %646 = vector.shape_cast %645 : vector<2x1xf32> to vector<2x1x1xf32>
    %647 = vector.broadcast %646 : vector<2x1x1xf32> to vector<2x1x8xf32>
    %648 = arith.subf %644, %647 : vector<2x1x8xf32>
    %649 = math.exp %648 : vector<2x1x8xf32>
    "tpu.trace_start"() <{level = 10 : i32, message = "bqs,bsh->bqh"}> : () -> ()
    %cst_150 = arith.constant dense<0.000000e+00> : vector<2x1x32xf32>
    %650 = tpu.matmul %649, %5, %cst_150 {dimension_numbers = #tpu.dot_dimension_numbers<[2], [1], [1], [2], [0, 0, 0, 1, 1, 2], [0], [0]>} : vector<2x1x8xf32>, vector<2x8x32xf32>, vector<2x1x32xf32> -> vector<2x1x32xf32>
    "tpu.trace_stop"() : () -> ()
    %cst_151 = arith.constant dense<0.000000e+00> : vector<2x1xf32>
    %651 = vector.multi_reduction <add>, %649, %cst_151 [2] : vector<2x1x8xf32> to vector<2x1xf32>
    %652 = vector.shape_cast %651 : vector<2x1xf32> to vector<2x1x1xf32>
    %653 = tpu.reciprocal %652 {approx = true} : vector<2x1x1xf32> -> vector<2x1x1xf32>
    %654 = vector.broadcast %653 : vector<2x1x1xf32> to vector<2x1x32xf32>
    %655 = arith.mulf %650, %654 : vector<2x1x32xf32>
    %656 = vector.shape_cast %655 : vector<2x1x32xf32> to vector<2x32xf32>
    %657 = tpu.concatenate %656, %642 in 1 : vector<2x32xf32>, vector<2x32xf32> -> vector<2x64xf32>
    %cst_152 = arith.constant dense<0.000000e+00> : vector<2x32xf32>
    %658 = tpu.matmul %657, %3, %cst_152 {dimension_numbers = #tpu.dot_dimension_numbers<[1], [0], [0], [1], [0, 0, 1, 1], [], []>} : vector<2x64xf32>, vector<64x32xf32>, vector<2x32xf32> -> vector<2x32xf32>
    %659 = vector.broadcast %4 : vector<1x32xf32> to vector<2x32xf32>
    %660 = arith.addf %658, %659 : vector<2x32xf32>
    %661 = math.tanh %660 : vector<2x32xf32>
    %662 = arith.index_cast %c7_i32 : i32 to index
    %c0_153 = arith.constant 0 : index
    %c0_154 = arith.constant 0 : index
    %663 = vector.load %arg11[%662, %c0_153, %c0_154] : memref<8x2x32xf32, #tpu.memory_space<vmem>>, vector<1x2x32xf32>
    %664 = vector.shape_cast %663 : vector<1x2x32xf32> to vector<2x32xf32>
    %665 = vector.shape_cast %661 : vector<2x32xf32> to vector<1x2x32xf32>
    tpu.vector_store %arg11[%662, %c0_153, %c0_154], %665 {strides = array<i32>} : memref<8x2x32xf32, #tpu.memory_space<vmem>>, vector<1x2x32xf32>,
    %c8_i32 = arith.constant 8 : i32
    %c0_155 = arith.constant 0 : index
    %c0_156 = arith.constant 0 : index
    %666 = vector.load %arg12[%c0_155, %c0_156] : memref<2x32xf32, #tpu.memory_space<vmem>>, vector<2x32xf32>
    tpu.vector_store %arg12[%c0_155, %c0_156], %661 {strides = array<i32>} : memref<2x32xf32, #tpu.memory_space<vmem>>, vector<2x32xf32>,
    %c0_157 = arith.constant 0 : index
    %c0_158 = arith.constant 0 : index
    %667 = vector.load %arg13[%c0_157, %c0_158] : memref<2x32xf32, #tpu.memory_space<vmem>>, vector<2x32xf32>
    tpu.vector_store %arg13[%c0_157, %c0_158], %640 {strides = array<i32>} : memref<2x32xf32, #tpu.memory_space<vmem>>, vector<2x32xf32>,
    return
  }
  func.func @transform_0(%arg0: i32) -> (i32, i32, i32) {
    %c0_i32 = arith.constant 0 : i32
    %c0_i32_0 = arith.constant 0 : i32
    %c0_i32_1 = arith.constant 0 : i32
    %c0_i32_2 = arith.constant 0 : i32
    return %c0_i32, %c0_i32_0, %c0_i32_1 : i32, i32, i32
  }
  func.func @transform_1(%arg0: i32) -> (i32, i32, i32) {
    %c0_i32 = arith.constant 0 : i32
    %c0_i32_0 = arith.constant 0 : i32
    %c0_i32_1 = arith.constant 0 : i32
    %c0_i32_2 = arith.constant 0 : i32
    return %c0_i32, %c0_i32_0, %c0_i32_1 : i32, i32, i32
  }
  func.func @transform_2(%arg0: i32) -> (i32, i32, i32) {
    %c0_i32 = arith.constant 0 : i32
    %c0_i32_0 = arith.constant 0 : i32
    %c0_i32_1 = arith.constant 0 : i32
    %c0_i32_2 = arith.constant 0 : i32
    return %c0_i32, %c0_i32_0, %c0_i32_1 : i32, i32, i32
  }
  func.func @transform_3(%arg0: i32) -> (i32, i32) {
    %c0_i32 = arith.constant 0 : i32
    %c0_i32_0 = arith.constant 0 : i32
    %c0_i32_1 = arith.constant 0 : i32
    return %c0_i32, %c0_i32_0 : i32, i32
  }
  func.func @transform_4(%arg0: i32) -> (i32, i32) {
    %c0_i32 = arith.constant 0 : i32
    %c0_i32_0 = arith.constant 0 : i32
    %c0_i32_1 = arith.constant 0 : i32
    return %c0_i32, %c0_i32_0 : i32, i32
  }
  func.func @transform_5(%arg0: i32) -> (i32, i32) {
    %c0_i32 = arith.constant 0 : i32
    %c0_i32_0 = arith.constant 0 : i32
    %c0_i32_1 = arith.constant 0 : i32
    return %c0_i32, %c0_i32_0 : i32, i32
  }
  func.func @transform_6(%arg0: i32) -> (i32, i32) {
    %c0_i32 = arith.constant 0 : i32
    %c0_i32_0 = arith.constant 0 : i32
    %c0_i32_1 = arith.constant 0 : i32
    return %c0_i32, %c0_i32_0 : i32, i32
  }
  func.func @transform_7(%arg0: i32) -> (i32, i32) {
    %c0_i32 = arith.constant 0 : i32
    %c0_i32_0 = arith.constant 0 : i32
    %c0_i32_1 = arith.constant 0 : i32
    return %c0_i32, %c0_i32_0 : i32, i32
  }
  func.func @transform_8(%arg0: i32) -> (i32, i32) {
    %c0_i32 = arith.constant 0 : i32
    %c0_i32_0 = arith.constant 0 : i32
    %c0_i32_1 = arith.constant 0 : i32
    return %c0_i32, %c0_i32_0 : i32, i32
  }
  func.func @transform_9(%arg0: i32) -> (i32, i32) {
    %c0_i32 = arith.constant 0 : i32
    %c0_i32_0 = arith.constant 0 : i32
    %c0_i32_1 = arith.constant 0 : i32
    return %c0_i32, %c0_i32_0 : i32, i32
  }
  func.func @transform_10(%arg0: i32) -> (i32, i32, i32) {
    %c0_i32 = arith.constant 0 : i32
    %c0_i32_0 = arith.constant 0 : i32
    %c0_i32_1 = arith.constant 0 : i32
    %c0_i32_2 = arith.constant 0 : i32
    return %c0_i32, %c0_i32_0, %c0_i32_1 : i32, i32, i32
  }
  func.func @transform_11(%arg0: i32) -> (i32, i32) {
    %c0_i32 = arith.constant 0 : i32
    %c0_i32_0 = arith.constant 0 : i32
    %c0_i32_1 = arith.constant 0 : i32
    return %c0_i32, %c0_i32_0 : i32, i32
  }
  func.func @transform_12(%arg0: i32) -> (i32, i32) {
    %c0_i32 = arith.constant 0 : i32
    %c0_i32_0 = arith.constant 0 : i32
    %c0_i32_1 = arith.constant 0 : i32
    return %c0_i32, %c0_i32_0 : i32, i32
  }
}

</mosaic_0001>

<llo_original>
// kernel: tpu_custom_call.1
$region0: #{tpu_custom_call.1}
  #allocation0 [shape = 'u32[]', space=smem, size = 0x4, offset = 0x4, fixed_abs, tag = 'smem constant byte address 0x4 - core index']
  #allocation1 [shape = 'u32[144,128]{1,0:T(1,128)}', space=vmem, size = 0x12000, scoped, tag = 'internal scratch']
  %s0 = inlined_call_operand.vmem [shape: f32[8,2,128], index: 0, kind: input, shape index: {}]
  %s1 = inlined_call_operand.vmem [shape: f32[2,8,32], index: 1, kind: input, shape index: {}]
  %s2 = inlined_call_operand.vmem [shape: f32[2,32,8], index: 2, kind: input, shape index: {}]
  %s3 = inlined_call_operand.vmem [shape: f32[2,32], index: 3, kind: input, shape index: {}]
  %s4 = inlined_call_operand.vmem [shape: f32[2,32], index: 4, kind: input, shape index: {}]
  %s5 = inlined_call_operand.vmem [shape: f32[32,128], index: 5, kind: input, shape index: {}]
  %s6 = inlined_call_operand.vmem [shape: f32[64,128], index: 6, kind: input, shape index: {}]
  %s7 = inlined_call_operand.vmem [shape: f32[1,128], index: 7, kind: input, shape index: {}]
  %s8 = inlined_call_operand.vmem [shape: f32[64,32], index: 8, kind: input, shape index: {}]
  %s9 = inlined_call_operand.vmem [shape: f32[1,32], index: 9, kind: input, shape index: {}]
  %s10 = inlined_call_operand.hbm [shape: f32[8,2,32], index: 10, kind: output, shape index: {0}]
  %s11 = inlined_call_operand.hbm [shape: f32[2,32], index: 11, kind: output, shape index: {1}]
  %s12 = inlined_call_operand.hbm [shape: f32[2,32], index: 12, kind: output, shape index: {2}]
  %13 = xla_tuple %s10, %s11, %s12
  %s14 = sld [smem:[#allocation0]]
  $region66: #{tpu_custom_call.1} parent=0
    _
  %s16 = ssub.s32 1, %s14
  %s17 = scalar_select 0, %s16, %s14
  $region1: #{tpu_custom_call.1} parent=0
    #allocation2 [shape = 'u8[8192]{0}', space=vmem, size = 0x2000, scoped, tag = 'output window, operand 0, single buffered']
    #allocation3 [shape = 's32[1]{0}', space=sflag, size = 0x4, scoped, tag = 'scoped memory for tpu_custom_call.1']
    #allocation4 [shape = 'u8[1024]{0}', space=vmem, size = 0x400, scoped, tag = 'output window, operand 1, single buffered']
    #allocation5 [shape = 's32[1]{0}', space=sflag, size = 0x4, scoped, tag = 'scoped memory for tpu_custom_call.1']
    #allocation6 [shape = 'u8[1024]{0}', space=vmem, size = 0x400, scoped, tag = 'output window, operand 2, single buffered']
    %18 = vsyncpa [#allocation3], 0
    %19 = vsyncpa [#allocation5], 0
    // Predicated region
    $region2: #{tpu_custom_call.1} parent=1 // pred_check
      _
    $region3: #{tpu_custom_call.1} parent=1 // pred_check_branch
      %21 = sbr.rel (0) target = $region5
    $region4: #{tpu_custom_call.1} parent=1 // pred_region
      _
    $region5: #{tpu_custom_call.1} parent=1 // pred_fallthru
      _
    // Predicated region
    $region6: #{tpu_custom_call.1} parent=1 // pred_check
      _
    $region7: #{tpu_custom_call.1} parent=1 // pred_check_branch
      %23 = sbr.rel (0) target = $region9
    $region8: #{tpu_custom_call.1} parent=1 // pred_region
      _
    $region9: #{tpu_custom_call.1} parent=1 // pred_fallthru
      _
    // Predicated region
    $region10: #{tpu_custom_call.1} parent=1 // pred_check
      _
    $region11: #{tpu_custom_call.1} parent=1 // pred_check_branch
      %25 = sbr.rel (0) target = $region13
    $region12: #{tpu_custom_call.1} parent=1 // pred_region
      _
    $region13: #{tpu_custom_call.1} parent=1 // pred_fallthru
      _
    // Predicated region
    $region14: #{tpu_custom_call.1} parent=1 // pred_check
      _
    $region15: #{tpu_custom_call.1} parent=1 // pred_check_branch
      %27 = sbr.rel (0) target = $region17
    $region16: #{tpu_custom_call.1} parent=1 // pred_region
      _
    $region17: #{tpu_custom_call.1} parent=1 // pred_fallthru
      _
    // Predicated region
    $region18: #{tpu_custom_call.1} parent=1 // pred_check
      _
    $region19: #{tpu_custom_call.1} parent=1 // pred_check_branch
      %29 = sbr.rel (0) target = $region21
    $region20: #{tpu_custom_call.1} parent=1 // pred_region
      _
    $region21: #{tpu_custom_call.1} parent=1 // pred_fallthru
      _
    // Predicated region
    $region22: #{tpu_custom_call.1} parent=1 // pred_check
      _
    $region23: #{tpu_custom_call.1} parent=1 // pred_check_branch
      %31 = sbr.rel (0) target = $region25
    $region24: #{tpu_custom_call.1} parent=1 // pred_region
      _
    $region25: #{tpu_custom_call.1} parent=1 // pred_fallthru
      _
    // Predicated region
    $region26: #{tpu_custom_call.1} parent=1 // pred_check
      _
    $region27: #{tpu_custom_call.1} parent=1 // pred_check_branch
      %33 = sbr.rel (0) target = $region29
    $region28: #{tpu_custom_call.1} parent=1 // pred_region
      _
    $region29: #{tpu_custom_call.1} parent=1 // pred_fallthru
      _
    // Predicated region
    $region30: #{tpu_custom_call.1} parent=1 // pred_check
      _
    $region31: #{tpu_custom_call.1} parent=1 // pred_check_branch
      %35 = sbr.rel (0) target = $region33
    $region32: #{tpu_custom_call.1} parent=1 // pred_region
      _
    $region33: #{tpu_custom_call.1} parent=1 // pred_fallthru
      _
    // Predicated region
    $region34: #{tpu_custom_call.1} parent=1 // pred_check
      _
    $region35: #{tpu_custom_call.1} parent=1 // pred_check_branch
      %37 = sbr.rel (0) target = $region37
    $region36: #{tpu_custom_call.1} parent=1 // pred_region
      _
    $region37: #{tpu_custom_call.1} parent=1 // pred_fallthru
      _
    // Predicated region
    $region38: #{tpu_custom_call.1} parent=1 // pred_check
      _
    $region39: #{tpu_custom_call.1} parent=1 // pred_check_branch
      %39 = sbr.rel (0) target = $region41
    $region40: #{tpu_custom_call.1} parent=1 // pred_region
      _
    $region41: #{tpu_custom_call.1} parent=1 // pred_fallthru
      _
    %v40 = vld [vmem:[%s5] sm:$0xff]
    %v41 = vld [vmem:[%s5 + $0x8] sm:$0xff]
    %v42 = vld [vmem:[%s5 + $0x10] sm:$0xff]
    %v43 = vld [vmem:[%s5 + $0x18] sm:$0xff]
    %v44 = vld [vmem:[%s6] sm:$0xff]
    %v45 = vld [vmem:[%s6 + $0x8] sm:$0xff]
    %v46 = vld [vmem:[%s6 + $0x10] sm:$0xff]
    %v47 = vld [vmem:[%s6 + $0x18] sm:$0xff]
    %v48 = vld [vmem:[%s6 + $0x20] sm:$0xff]
    %v49 = vld [vmem:[%s6 + $0x28] sm:$0xff]
    %v50 = vld [vmem:[%s6 + $0x30] sm:$0xff]
    %v51 = vld [vmem:[%s6 + $0x38] sm:$0xff]
    %v52 = vld [vmem:[%s7] sm:$0x1]
    %v53 = vld [vmem:[%s8] sm:$0xff]
    %v54 = vld [vmem:[%s8 + $0x8] sm:$0xff]
    %v55 = vld [vmem:[%s8 + $0x10] sm:$0xff]
    %v56 = vld [vmem:[%s8 + $0x18] sm:$0xff]
    %v57 = vld [vmem:[%s8 + $0x20] sm:$0xff]
    %v58 = vld [vmem:[%s8 + $0x28] sm:$0xff]
    %v59 = vld [vmem:[%s8 + $0x30] sm:$0xff]
    %v60 = vld [vmem:[%s8 + $0x38] sm:$0xff]
    %v61 = vld [vmem:[%s9] sm:$0x1]
    %v62 = vld [vmem:[%s1] sm:$0xff]
    %v63 = vld [vmem:[%s1 + $0x8] sm:$0xff]
    %v64 = vld [vmem:[%s2] sm:$0xff]
    %v65 = vld [vmem:[%s2 + $0x8] sm:$0xff]
    %v66 = vld [vmem:[%s2 + $0x10] sm:$0xff]
    %v67 = vld [vmem:[%s2 + $0x18] sm:$0xff]
    %v68 = vld [vmem:[%s2 + $0x20] sm:$0xff]
    %v69 = vld [vmem:[%s2 + $0x28] sm:$0xff]
    %v70 = vld [vmem:[%s2 + $0x30] sm:$0xff]
    %v71 = vld [vmem:[%s2 + $0x38] sm:$0xff]
    %v72 = vld [vmem:[%s3] sm:$0x3]
    %v73 = vld [vmem:[%s4] sm:$0x3]
    %v74 = vld [vmem:[%s0] sm:$0x3]
    %vm75 = vcmask 261120
    %v77 = vsel %vm75, %v72, 0
    %79 = vmatprep.subr.mxu0 0.0
    %80 = vmatpush1.msra.mxu0 0.0
    %81 = vmatprep.subr.mxu0 0.0
    %82 = vmatpush1.msra.mxu0 0.0
    %83 = vmatprep.subr.mxu0 0.0
    %84 = vmatpush1.msra.mxu0 0.0
    %85 = vmatprep.subr.mxu0 0.0
    %86 = vmatpush1.msra.mxu0 0.0
    %87 = vmatprep.subr.mxu0 0.0
    %88 = vmatpush1.msra.mxu0 0.0
    %89 = vmatprep.subr.mxu0 0.0
    %90 = vmatpush1.msra.mxu0 0.0
    %91 = vmatprep.subr.mxu0 0.0
    %92 = vmatpush1.msra.mxu0 0.0
    %93 = vmatprep.subr.mxu0 0.0
    %94 = vmatpush1.msra.mxu0 0.0
    %95 = vmatprep.subr.mxu0 0.0
    %96 = vmatpush1.msra.mxu0 0.0
    %97 = vmatprep.subr.mxu0 0.0
    %98 = vmatpush1.msra.mxu0 0.0
    %99 = vmatprep.subr.mxu0 0.0
    %100 = vmatpush1.msra.mxu0 0.0
    %101 = vmatprep.subr.mxu0 0.0
    %102 = vmatpush1.msra.mxu0 0.0
    %103 = vmatprep.subr.mxu0 0.0
    %104 = vmatpush1.msra.mxu0 %v43
    %105 = vmatprep.subr.mxu0 0.0
    %106 = vmatpush1.msra.mxu0 %v42
    %107 = vmatprep.subr.mxu0 0.0
    %108 = vmatpush1.msra.mxu0 %v41
    %109 = vmatprep.subr.mxu0 0.0
    %110 = vmatpush1.msra.mxu0 %v40
    %111 = vmatprep.subr.mxu0 0.0
    %112 = vmatpush2.msra.mxu0 0.0
    %113 = vmatprep.subr.mxu0 0.0
    %114 = vmatpush2.msra.mxu0 0.0
    %115 = vmatprep.subr.mxu0 0.0
    %116 = vmatpush2.msra.mxu0 0.0
    %117 = vmatprep.subr.mxu0 0.0
    %118 = vmatpush2.msra.mxu0 0.0
    %119 = vmatprep.subr.mxu0 0.0
    %120 = vmatpush2.msra.mxu0 0.0
    %121 = vmatprep.subr.mxu0 0.0
    %122 = vmatpush2.msra.mxu0 0.0
    %123 = vmatprep.subr.mxu0 0.0
    %124 = vmatpush2.msra.mxu0 0.0
    %125 = vmatprep.subr.mxu0 0.0
    %126 = vmatpush2.msra.mxu0 0.0
    %127 = vmatprep.subr.mxu0 0.0
    %128 = vmatpush2.msra.mxu0 0.0
    %129 = vmatprep.subr.mxu0 0.0
    %130 = vmatpush2.msra.mxu0 0.0
    %131 = vmatprep.subr.mxu0 0.0
    %132 = vmatpush2.msra.mxu0 0.0
    %133 = vmatprep.subr.mxu0 0.0
    %134 = vmatpush2.msra.mxu0 0.0
    %135 = vmatprep.subr.mxu0 0.0
    %136 = vmatpush2.msra.mxu0 0.0
    %137 = vmatprep.subr.mxu0 0.0
    %138 = vmatpush2.msra.mxu0 0.0
    %139 = vmatprep.subr.mxu0 0.0
    %140 = vmatpush2.msra.mxu0 0.0
    %141 = vmatprep.subr.mxu0 0.0
    %142 = vmatpush2.msra.mxu0 0.0
    %143 = vmatprep.mubr.f32.mxu0 0.0
    %144 = vmatmul.mubr.f32.gmra.mxu0 %v77
    %v145 = vpop.f32.mrf.mxu0
    %v146 = vadd.f32 0.0, %v145
    %v147 = vpop.f32.mrf.mxu0
    %148 = vdwg.mxu0
    %v149 = vadd.f32 %v74, %v146
    %v150 = vxor.u32 %v149, 2147483648
    %v151 = vmul.f32 %v150, 1.442695
    %v152 = vpow.pop %v151
    %v153 = vadd.f32 %v152, 1.0
    %v154 = vrcp.pop %v153
    %v155 = vmul.f32 1.0, %v154
    %v156 = vtanh.pop %v149
    %158 = vrot.lane.b32.xlu0 %v73, 32
    %v159 = vpop.permute.xlu0 %158
    %v161 = vmul.f32 %v155, %v159
    %163 = vrot.lane.b32.xlu0 %v156, 64
    %v164 = vpop.permute.xlu0 %163
    %v166 = vmul.f32 %v155, %v164
    %168 = vrot.lane.b32.xlu0 %v166, 32
    %v169 = vpop.permute.xlu0 %168
    %v171 = vadd.f32 %v161, %v169
    %v172 = vtanh.pop %v171
    %174 = vrot.lane.b32.xlu0 %v172, 64
    %v175 = vpop.permute.xlu0 %174
    %v177 = vmul.f32 %v155, %v175
    %179 = vrot.lane.b32.xlu0 %v177, 32
    %v180 = vpop.permute.xlu0 %179
    %182 = vrot.lane.b32.xlu0 %v72, 32
    %v183 = vpop.permute.xlu0 %182
    %v185 = vsel %vm75, %v180, %v183
    %v187 = vlaneseq
    %v188 = vshrl.u32 %v187, 7
    %v189 = vsub.s32 0, %v188
    %v190 = vrot.slane %v52, %v189
    %vm192 = vcmask 523264
    %v194 = vsel %vm192, %v185, 0
    %196 = vmatprep.subr.mxu0 0.0
    %197 = vmatpush1.msra.mxu0 0.0
    %198 = vmatprep.subr.mxu0 0.0
    %199 = vmatpush1.msra.mxu0 0.0
    %200 = vmatprep.subr.mxu0 0.0
    %201 = vmatpush1.msra.mxu0 0.0
    %202 = vmatprep.subr.mxu0 0.0
    %203 = vmatpush1.msra.mxu0 0.0
    %204 = vmatprep.subr.mxu0 0.0
    %205 = vmatpush1.msra.mxu0 0.0
    %206 = vmatprep.subr.mxu0 0.0
    %207 = vmatpush1.msra.mxu0 0.0
    %208 = vmatprep.subr.mxu0 0.0
    %209 = vmatpush1.msra.mxu0 0.0
    %210 = vmatprep.subr.mxu0 0.0
    %211 = vmatpush1.msra.mxu0 0.0
    %212 = vmatprep.subr.mxu0 0.0
    %213 = vmatpush1.msra.mxu0 %v51
    %214 = vmatprep.subr.mxu0 0.0
    %215 = vmatpush1.msra.mxu0 %v50
    %216 = vmatprep.subr.mxu0 0.0
    %217 = vmatpush1.msra.mxu0 %v49
    %218 = vmatprep.subr.mxu0 0.0
    %219 = vmatpush1.msra.mxu0 %v48
    %220 = vmatprep.subr.mxu0 0.0
    %221 = vmatpush1.msra.mxu0 %v47
    %222 = vmatprep.subr.mxu0 0.0
    %223 = vmatpush1.msra.mxu0 %v46
    %224 = vmatprep.subr.mxu0 0.0
    %225 = vmatpush1.msra.mxu0 %v45
    %226 = vmatprep.subr.mxu0 0.0
    %227 = vmatpush1.msra.mxu0 %v44
    %228 = vmatprep.subr.mxu0 0.0
    %229 = vmatpush2.msra.mxu0 0.0
    %230 = vmatprep.subr.mxu0 0.0
    %231 = vmatpush2.msra.mxu0 0.0
    %232 = vmatprep.subr.mxu0 0.0
    %233 = vmatpush2.msra.mxu0 0.0
    %234 = vmatprep.subr.mxu0 0.0
    %235 = vmatpush2.msra.mxu0 0.0
    %236 = vmatprep.subr.mxu0 0.0
    %237 = vmatpush2.msra.mxu0 0.0
    %238 = vmatprep.subr.mxu0 0.0
    %239 = vmatpush2.msra.mxu0 0.0
    %240 = vmatprep.subr.mxu0 0.0
    %241 = vmatpush2.msra.mxu0 0.0
    %242 = vmatprep.subr.mxu0 0.0
    %243 = vmatpush2.msra.mxu0 0.0
    %244 = vmatprep.subr.mxu0 0.0
    %245 = vmatpush2.msra.mxu0 0.0
    %246 = vmatprep.subr.mxu0 0.0
    %247 = vmatpush2.msra.mxu0 0.0
    %248 = vmatprep.subr.mxu0 0.0
    %249 = vmatpush2.msra.mxu0 0.0
    %250 = vmatprep.subr.mxu0 0.0
    %251 = vmatpush2.msra.mxu0 0.0
    %252 = vmatprep.subr.mxu0 0.0
    %253 = vmatpush2.msra.mxu0 0.0
    %254 = vmatprep.subr.mxu0 0.0
    %255 = vmatpush2.msra.mxu0 0.0
    %256 = vmatprep.subr.mxu0 0.0
    %257 = vmatpush2.msra.mxu0 0.0
    %258 = vmatprep.subr.mxu0 0.0
    %259 = vmatpush2.msra.mxu0 0.0
    %260 = vmatprep.mubr.f32.mxu0 0.0
    %261 = vmatmul.mubr.f32.gmra.mxu0 %v194
    %v262 = vpop.f32.mrf.mxu0
    %v263 = vadd.f32 %v190, %v262
    %v264 = vpop.f32.mrf.mxu0
    %265 = vdwg.mxu0
    %v266 = vxor.u32 %v263, 2147483648
    %v267 = vmul.f32 %v266, 1.442695
    %v268 = vpow.pop %v267
    %v269 = vadd.f32 %v268, 1.0
    %v270 = vrcp.pop %v269
    %v271 = vmul.f32 1.0, %v270
    %v272 = vtanh.pop %v263
    %v273 = vmul.f32 %v271, %v159
    %275 = vrot.lane.b32.xlu0 %v272, 64
    %v276 = vpop.permute.xlu0 %275
    %v278 = vmul.f32 %v271, %v276
    %280 = vrot.lane.b32.xlu0 %v278, 32
    %v281 = vpop.permute.xlu0 %280
    %v283 = vadd.f32 %v273, %v281
    %v284 = vtanh.pop %v283
    %286 = vrot.lane.b32.xlu0 %v284, 64
    %v287 = vpop.permute.xlu0 %286
    %v289 = vmul.f32 %v271, %v287
    %v292 = vunpack.c.l.s4 1966171168
    %v293 = vunpack.c.0.s8 %v292
    %v294 = vlaneseq
    %v295 = vshrl.u32 %v294, 7
    %v296 = vsub.s32 %v293, %v295
    %v297 = vrot.slane %v289, %v296
    %v298 = vcombine.high %v297, %v297
    %v300 = vunpack.c.l.s4 1966171168
    %v301 = vunpack.c.0.s8 %v300
    %v302 = vlaneseq
    %v303 = vshrl.u32 %v302, 7
    %v304 = vsub.s32 %v301, %v303
    %v305 = vrot.slane %v297, %v304
    %v307 = vunpack.c.l.s4 1966171168
    %v308 = vunpack.c.0.s8 %v307
    %v309 = vlaneseq
    %v310 = vshrl.u32 %v309, 7
    %v311 = vsub.s32 %v308, %v310
    %v312 = vrot.slane %v298, %v311
    %v313 = vlaneseq
    %v314 = vshrl.u32 %v313, 7
    %v315 = vsub.s32 0, %v314
    %v316 = vrot.slane %v305, %v315
    %317 = vrot.lane.b32.xlu0 %v316, 32
    %v318 = vpop.permute.xlu0 %317
    %v319 = vsel %vm75, %v318, 0
    %321 = vmatprep.subr.mxu0 0.0
    %322 = vmatpush1.msra.mxu0 0.0
    %323 = vmatprep.subr.mxu0 0.0
    %324 = vmatpush1.msra.mxu0 0.0
    %325 = vmatprep.subr.mxu0 0.0
    %326 = vmatpush1.msra.mxu0 0.0
    %327 = vmatprep.subr.mxu0 0.0
    %328 = vmatpush1.msra.mxu0 0.0
    %329 = vmatprep.subr.mxu0 0.0
    %330 = vmatpush1.msra.mxu0 0.0
    %331 = vmatprep.subr.mxu0 0.0
    %332 = vmatpush1.msra.mxu0 0.0
    %333 = vmatprep.subr.mxu0 0.0
    %334 = vmatpush1.msra.mxu0 0.0
    %335 = vmatprep.subr.mxu0 0.0
    %336 = vmatpush1.msra.mxu0 0.0
    %337 = vmatprep.subr.mxu0 0.0
    %338 = vmatpush1.msra.mxu0 0.0
    %339 = vmatprep.subr.mxu0 0.0
    %340 = vmatpush1.msra.mxu0 0.0
    %341 = vmatprep.subr.mxu0 0.0
    %342 = vmatpush1.msra.mxu0 0.0
    %343 = vmatprep.subr.mxu0 0.0
    %344 = vmatpush1.msra.mxu0 0.0
    %345 = vmatprep.subr.mxu0 0.0
    %346 = vmatpush1.msra.mxu0 %v67
    %347 = vmatprep.subr.mxu0 0.0
    %348 = vmatpush1.msra.mxu0 %v66
    %349 = vmatprep.subr.mxu0 0.0
    %350 = vmatpush1.msra.mxu0 %v65
    %351 = vmatprep.subr.mxu0 0.0
    %352 = vmatpush1.msra.mxu0 %v64
    %353 = vmatprep.subr.mxu0 0.0
    %354 = vmatpush2.msra.mxu0 0.0
    %355 = vmatprep.subr.mxu0 0.0
    %356 = vmatpush2.msra.mxu0 0.0
    %357 = vmatprep.subr.mxu0 0.0
    %358 = vmatpush2.msra.mxu0 0.0
    %359 = vmatprep.subr.mxu0 0.0
    %360 = vmatpush2.msra.mxu0 0.0
    %361 = vmatprep.subr.mxu0 0.0
    %362 = vmatpush2.msra.mxu0 0.0
    %363 = vmatprep.subr.mxu0 0.0
    %364 = vmatpush2.msra.mxu0 0.0
    %365 = vmatprep.subr.mxu0 0.0
    %366 = vmatpush2.msra.mxu0 0.0
    %367 = vmatprep.subr.mxu0 0.0
    %368 = vmatpush2.msra.mxu0 0.0
    %369 = vmatprep.subr.mxu0 0.0
    %370 = vmatpush2.msra.mxu0 0.0
    %371 = vmatprep.subr.mxu0 0.0
    %372 = vmatpush2.msra.mxu0 0.0
    %373 = vmatprep.subr.mxu0 0.0
    %374 = vmatpush2.msra.mxu0 0.0
    %375 = vmatprep.subr.mxu0 0.0
    %376 = vmatpush2.msra.mxu0 0.0
    %377 = vmatprep.subr.mxu0 0.0
    %378 = vmatpush2.msra.mxu0 0.0
    %379 = vmatprep.subr.mxu0 0.0
    %380 = vmatpush2.msra.mxu0 0.0
    %381 = vmatprep.subr.mxu0 0.0
    %382 = vmatpush2.msra.mxu0 0.0
    %383 = vmatprep.subr.mxu0 0.0
    %384 = vmatpush2.msra.mxu0 0.0
    %385 = vmatprep.mubr.f32.mxu0 0.0
    %386 = vmatmul.mubr.f32.gmra.mxu0 %v319
    %v387 = vpop.f32.mrf.mxu0
    %v388 = vadd.f32 0.0, %v387
    %v389 = vpop.f32.mrf.mxu0
    %390 = vdwg.mxu0
    %v391 = vlaneseq
    %v392 = vshrl.u32 %v391, 7
    %v393 = vsub.s32 0, %v392
    %v394 = vrot.slane %v312, %v393
    %395 = vrot.lane.b32.xlu0 %v394, 32
    %v396 = vpop.permute.xlu0 %395
    %v397 = vsel %vm75, %v396, 0
    %399 = vmatprep.subr.mxu0 0.0
    %400 = vmatpush1.msra.mxu0 0.0
    %401 = vmatprep.subr.mxu0 0.0
    %402 = vmatpush1.msra.mxu0 0.0
    %403 = vmatprep.subr.mxu0 0.0
    %404 = vmatpush1.msra.mxu0 0.0
    %405 = vmatprep.subr.mxu0 0.0
    %406 = vmatpush1.msra.mxu0 0.0
    %407 = vmatprep.subr.mxu0 0.0
    %408 = vmatpush1.msra.mxu0 0.0
    %409 = vmatprep.subr.mxu0 0.0
    %410 = vmatpush1.msra.mxu0 0.0
    %411 = vmatprep.subr.mxu0 0.0
    %412 = vmatpush1.msra.mxu0 0.0
    %413 = vmatprep.subr.mxu0 0.0
    %414 = vmatpush1.msra.mxu0 0.0
    %415 = vmatprep.subr.mxu0 0.0
    %416 = vmatpush1.msra.mxu0 0.0
    %417 = vmatprep.subr.mxu0 0.0
    %418 = vmatpush1.msra.mxu0 0.0
    %419 = vmatprep.subr.mxu0 0.0
    %420 = vmatpush1.msra.mxu0 0.0
    %421 = vmatprep.subr.mxu0 0.0
    %422 = vmatpush1.msra.mxu0 0.0
    %423 = vmatprep.subr.mxu0 0.0
    %424 = vmatpush1.msra.mxu0 %v71
    %425 = vmatprep.subr.mxu0 0.0
    %426 = vmatpush1.msra.mxu0 %v70
    %427 = vmatprep.subr.mxu0 0.0
    %428 = vmatpush1.msra.mxu0 %v69
    %429 = vmatprep.subr.mxu0 0.0
    %430 = vmatpush1.msra.mxu0 %v68
    %431 = vmatprep.subr.mxu0 0.0
    %432 = vmatpush2.msra.mxu0 0.0
    %433 = vmatprep.subr.mxu0 0.0
    %434 = vmatpush2.msra.mxu0 0.0
    %435 = vmatprep.subr.mxu0 0.0
    %436 = vmatpush2.msra.mxu0 0.0
    %437 = vmatprep.subr.mxu0 0.0
    %438 = vmatpush2.msra.mxu0 0.0
    %439 = vmatprep.subr.mxu0 0.0
    %440 = vmatpush2.msra.mxu0 0.0
    %441 = vmatprep.subr.mxu0 0.0
    %442 = vmatpush2.msra.mxu0 0.0
    %443 = vmatprep.subr.mxu0 0.0
    %444 = vmatpush2.msra.mxu0 0.0
    %445 = vmatprep.subr.mxu0 0.0
    %446 = vmatpush2.msra.mxu0 0.0
    %447 = vmatprep.subr.mxu0 0.0
    %448 = vmatpush2.msra.mxu0 0.0
    %449 = vmatprep.subr.mxu0 0.0
    %450 = vmatpush2.msra.mxu0 0.0
    %451 = vmatprep.subr.mxu0 0.0
    %452 = vmatpush2.msra.mxu0 0.0
    %453 = vmatprep.subr.mxu0 0.0
    %454 = vmatpush2.msra.mxu0 0.0
    %455 = vmatprep.subr.mxu0 0.0
    %456 = vmatpush2.msra.mxu0 0.0
    %457 = vmatprep.subr.mxu0 0.0
    %458 = vmatpush2.msra.mxu0 0.0
    %459 = vmatprep.subr.mxu0 0.0
    %460 = vmatpush2.msra.mxu0 0.0
    %461 = vmatprep.subr.mxu0 0.0
    %462 = vmatpush2.msra.mxu0 0.0
    %463 = vmatprep.mubr.f32.mxu0 0.0
    %464 = vmatmul.mubr.f32.gmra.mxu0 %v397
    %v465 = vpop.f32.mrf.mxu0
    %v466 = vadd.f32 0.0, %v465
    %v467 = vpop.f32.mrf.mxu0
    %468 = vdwg.mxu0
    %vm469 = vcmask 57344
    %v470 = vsel %vm469, %v388, -inf
    %471 = vmax.xlane.f32.xlu0 %v470
    %v472 = vpop.xlane.xlu0 %471
    %v473 = vsel %vm469, %v466, -inf
    %474 = vmax.xlane.f32.xlu0 %v473
    %v475 = vpop.xlane.xlu0 %474
    %v476 = vsub.f32 %v388, %v472
    %v477 = vsub.f32 %v466, %v475
    %v478 = vmul.f32 %v476, 1.442695
    %v479 = vpow.pop %v478
    %v480 = vmul.f32 %v477, 1.442695
    %v481 = vpow.pop %v480
    %vm482 = vcmask 64512
    %v484 = vsel %vm482, %v479, 0
    %486 = vmatprep.subr.mxu0 0.0
    %487 = vmatpush1.msra.mxu0 0.0
    %488 = vmatprep.subr.mxu0 0.0
    %489 = vmatpush1.msra.mxu0 0.0
    %490 = vmatprep.subr.mxu0 0.0
    %491 = vmatpush1.msra.mxu0 0.0
    %492 = vmatprep.subr.mxu0 0.0
    %493 = vmatpush1.msra.mxu0 0.0
    %494 = vmatprep.subr.mxu0 0.0
    %495 = vmatpush1.msra.mxu0 0.0
    %496 = vmatprep.subr.mxu0 0.0
    %497 = vmatpush1.msra.mxu0 0.0
    %498 = vmatprep.subr.mxu0 0.0
    %499 = vmatpush1.msra.mxu0 0.0
    %500 = vmatprep.subr.mxu0 0.0
    %501 = vmatpush1.msra.mxu0 0.0
    %502 = vmatprep.subr.mxu0 0.0
    %503 = vmatpush1.msra.mxu0 0.0
    %504 = vmatprep.subr.mxu0 0.0
    %505 = vmatpush1.msra.mxu0 0.0
    %506 = vmatprep.subr.mxu0 0.0
    %507 = vmatpush1.msra.mxu0 0.0
    %508 = vmatprep.subr.mxu0 0.0
    %509 = vmatpush1.msra.mxu0 0.0
    %510 = vmatprep.subr.mxu0 0.0
    %511 = vmatpush1.msra.mxu0 0.0
    %512 = vmatprep.subr.mxu0 0.0
    %513 = vmatpush1.msra.mxu0 0.0
    %514 = vmatprep.subr.mxu0 0.0
    %515 = vmatpush1.msra.mxu0 0.0
    %516 = vmatprep.subr.mxu0 0.0
    %517 = vmatpush1.msra.mxu0 %v62
    %518 = vmatprep.subr.mxu0 0.0
    %519 = vmatpush2.msra.mxu0 0.0
    %520 = vmatprep.subr.mxu0 0.0
    %521 = vmatpush2.msra.mxu0 0.0
    %522 = vmatprep.subr.mxu0 0.0
    %523 = vmatpush2.msra.mxu0 0.0
    %524 = vmatprep.subr.mxu0 0.0
    %525 = vmatpush2.msra.mxu0 0.0
    %526 = vmatprep.subr.mxu0 0.0
    %527 = vmatpush2.msra.mxu0 0.0
    %528 = vmatprep.subr.mxu0 0.0
    %529 = vmatpush2.msra.mxu0 0.0
    %530 = vmatprep.subr.mxu0 0.0
    %531 = vmatpush2.msra.mxu0 0.0
    %532 = vmatprep.subr.mxu0 0.0
    %533 = vmatpush2.msra.mxu0 0.0
    %534 = vmatprep.subr.mxu0 0.0
    %535 = vmatpush2.msra.mxu0 0.0
    %536 = vmatprep.subr.mxu0 0.0
    %537 = vmatpush2.msra.mxu0 0.0
    %538 = vmatprep.subr.mxu0 0.0
    %539 = vmatpush2.msra.mxu0 0.0
    %540 = vmatprep.subr.mxu0 0.0
    %541 = vmatpush2.msra.mxu0 0.0
    %542 = vmatprep.subr.mxu0 0.0
    %543 = vmatpush2.msra.mxu0 0.0
    %544 = vmatprep.subr.mxu0 0.0
    %545 = vmatpush2.msra.mxu0 0.0
    %546 = vmatprep.subr.mxu0 0.0
    %547 = vmatpush2.msra.mxu0 0.0
    %548 = vmatprep.subr.mxu0 0.0
    %549 = vmatpush2.msra.mxu0 0.0
    %550 = vmatprep.mubr.f32.mxu0 0.0
    %551 = vmatmul.mubr.f32.gmra.mxu0 %v484
    %v552 = vpop.f32.mrf.mxu0
    %v553 = vadd.f32 0.0, %v552
    %v554 = vpop.f32.mrf.mxu0
    %555 = vdwg.mxu0
    %v557 = vsel %vm482, %v481, 0
    %559 = vmatprep.subr.mxu0 0.0
    %560 = vmatpush1.msra.mxu0 0.0
    %561 = vmatprep.subr.mxu0 0.0
    %562 = vmatpush1.msra.mxu0 0.0
    %563 = vmatprep.subr.mxu0 0.0
    %564 = vmatpush1.msra.mxu0 0.0
    %565 = vmatprep.subr.mxu0 0.0
    %566 = vmatpush1.msra.mxu0 0.0
    %567 = vmatprep.subr.mxu0 0.0
    %568 = vmatpush1.msra.mxu0 0.0
    %569 = vmatprep.subr.mxu0 0.0
    %570 = vmatpush1.msra.mxu0 0.0
    %571 = vmatprep.subr.mxu0 0.0
    %572 = vmatpush1.msra.mxu0 0.0
    %573 = vmatprep.subr.mxu0 0.0
    %574 = vmatpush1.msra.mxu0 0.0
    %575 = vmatprep.subr.mxu0 0.0
    %576 = vmatpush1.msra.mxu0 0.0
    %577 = vmatprep.subr.mxu0 0.0
    %578 = vmatpush1.msra.mxu0 0.0
    %579 = vmatprep.subr.mxu0 0.0
    %580 = vmatpush1.msra.mxu0 0.0
    %581 = vmatprep.subr.mxu0 0.0
    %582 = vmatpush1.msra.mxu0 0.0
    %583 = vmatprep.subr.mxu0 0.0
    %584 = vmatpush1.msra.mxu0 0.0
    %585 = vmatprep.subr.mxu0 0.0
    %586 = vmatpush1.msra.mxu0 0.0
    %587 = vmatprep.subr.mxu0 0.0
    %588 = vmatpush1.msra.mxu0 0.0
    %589 = vmatprep.subr.mxu0 0.0
    %590 = vmatpush1.msra.mxu0 %v63
    %591 = vmatprep.subr.mxu0 0.0
    %592 = vmatpush2.msra.mxu0 0.0
    %593 = vmatprep.subr.mxu0 0.0
    %594 = vmatpush2.msra.mxu0 0.0
    %595 = vmatprep.subr.mxu0 0.0
    %596 = vmatpush2.msra.mxu0 0.0
    %597 = vmatprep.subr.mxu0 0.0
    %598 = vmatpush2.msra.mxu0 0.0
    %599 = vmatprep.subr.mxu0 0.0
    %600 = vmatpush2.msra.mxu0 0.0
    %601 = vmatprep.subr.mxu0 0.0
    %602 = vmatpush2.msra.mxu0 0.0
    %603 = vmatprep.subr.mxu0 0.0
    %604 = vmatpush2.msra.mxu0 0.0
    %605 = vmatprep.subr.mxu0 0.0
    %606 = vmatpush2.msra.mxu0 0.0
    %607 = vmatprep.subr.mxu0 0.0
    %608 = vmatpush2.msra.mxu0 0.0
    %609 = vmatprep.subr.mxu0 0.0
    %610 = vmatpush2.msra.mxu0 0.0
    %611 = vmatprep.subr.mxu0 0.0
    %612 = vmatpush2.msra.mxu0 0.0
    %613 = vmatprep.subr.mxu0 0.0
    %614 = vmatpush2.msra.mxu0 0.0
    %615 = vmatprep.subr.mxu0 0.0
    %616 = vmatpush2.msra.mxu0 0.0
    %617 = vmatprep.subr.mxu0 0.0
    %618 = vmatpush2.msra.mxu0 0.0
    %619 = vmatprep.subr.mxu0 0.0
    %620 = vmatpush2.msra.mxu0 0.0
    %621 = vmatprep.subr.mxu0 0.0
    %622 = vmatpush2.msra.mxu0 0.0
    %623 = vmatprep.mubr.f32.mxu0 0.0
    %624 = vmatmul.mubr.f32.gmra.mxu0 %v557
    %v625 = vpop.f32.mrf.mxu0
    %v626 = vadd.f32 0.0, %v625
    %v627 = vpop.f32.mrf.mxu0
    %628 = vdwg.mxu0
    %v629 = vsel %vm469, %v479, 0.0
    %630 = vadd.xlane.f32.xlu0 %v629
    %v631 = vpop.xlane.xlu0 %630
    %v632 = vsel %vm469, %v481, 0.0
    %633 = vadd.xlane.f32.xlu0 %v632
    %v634 = vpop.xlane.xlu0 %633
    %v635 = vrcp.pop %v631
    %v636 = vrcp.pop %v634
    %v637 = vmul.f32 %v553, %v635
    %v638 = vmul.f32 %v626, %v636
    %v641 = vrot.slane %v638, 7
    %vm642 = vcmask 1041409
    %v643 = vsel %vm642, %v641, %v637
    %645 = vrot.lane.b32.xlu0 %v289, 64
    %v646 = vpop.permute.xlu0 %645
    %v648 = vsel %vm75, %v643, %v646
    %v650 = vlaneseq
    %v651 = vshrl.u32 %v650, 7
    %v652 = vsub.s32 0, %v651
    %v653 = vrot.slane %v61, %v652
    %v656 = vsel %vm192, %v648, 0
    %658 = vmatprep.subr.mxu0 0.0
    %659 = vmatpush1.msra.mxu0 0.0
    %660 = vmatprep.subr.mxu0 0.0
    %661 = vmatpush1.msra.mxu0 0.0
    %662 = vmatprep.subr.mxu0 0.0
    %663 = vmatpush1.msra.mxu0 0.0
    %664 = vmatprep.subr.mxu0 0.0
    %665 = vmatpush1.msra.mxu0 0.0
    %666 = vmatprep.subr.mxu0 0.0
    %667 = vmatpush1.msra.mxu0 0.0
    %668 = vmatprep.subr.mxu0 0.0
    %669 = vmatpush1.msra.mxu0 0.0
    %670 = vmatprep.subr.mxu0 0.0
    %671 = vmatpush1.msra.mxu0 0.0
    %672 = vmatprep.subr.mxu0 0.0
    %673 = vmatpush1.msra.mxu0 0.0
    %674 = vmatprep.subr.mxu0 0.0
    %675 = vmatpush1.msra.mxu0 %v60
    %676 = vmatprep.subr.mxu0 0.0
    %677 = vmatpush1.msra.mxu0 %v59
    %678 = vmatprep.subr.mxu0 0.0
    %679 = vmatpush1.msra.mxu0 %v58
    %680 = vmatprep.subr.mxu0 0.0
    %681 = vmatpush1.msra.mxu0 %v57
    %682 = vmatprep.subr.mxu0 0.0
    %683 = vmatpush1.msra.mxu0 %v56
    %684 = vmatprep.subr.mxu0 0.0
    %685 = vmatpush1.msra.mxu0 %v55
    %686 = vmatprep.subr.mxu0 0.0
    %687 = vmatpush1.msra.mxu0 %v54
    %688 = vmatprep.subr.mxu0 0.0
    %689 = vmatpush1.msra.mxu0 %v53
    %690 = vmatprep.subr.mxu0 0.0
    %691 = vmatpush2.msra.mxu0 0.0
    %692 = vmatprep.subr.mxu0 0.0
    %693 = vmatpush2.msra.mxu0 0.0
    %694 = vmatprep.subr.mxu0 0.0
    %695 = vmatpush2.msra.mxu0 0.0
    %696 = vmatprep.subr.mxu0 0.0
    %697 = vmatpush2.msra.mxu0 0.0
    %698 = vmatprep.subr.mxu0 0.0
    %699 = vmatpush2.msra.mxu0 0.0
    %700 = vmatprep.subr.mxu0 0.0
    %701 = vmatpush2.msra.mxu0 0.0
    %702 = vmatprep.subr.mxu0 0.0
    %703 = vmatpush2.msra.mxu0 0.0
    %704 = vmatprep.subr.mxu0 0.0
    %705 = vmatpush2.msra.mxu0 0.0
    %706 = vmatprep.subr.mxu0 0.0
    %707 = vmatpush2.msra.mxu0 0.0
    %708 = vmatprep.subr.mxu0 0.0
    %709 = vmatpush2.msra.mxu0 0.0
    %710 = vmatprep.subr.mxu0 0.0
    %711 = vmatpush2.msra.mxu0 0.0
    %712 = vmatprep.subr.mxu0 0.0
    %713 = vmatpush2.msra.mxu0 0.0
    %714 = vmatprep.subr.mxu0 0.0
    %715 = vmatpush2.msra.mxu0 0.0
    %716 = vmatprep.subr.mxu0 0.0
    %717 = vmatpush2.msra.mxu0 0.0
    %718 = vmatprep.subr.mxu0 0.0
    %719 = vmatpush2.msra.mxu0 0.0
    %720 = vmatprep.subr.mxu0 0.0
    %721 = vmatpush2.msra.mxu0 0.0
    %722 = vmatprep.mubr.f32.mxu0 0.0
    %723 = vmatmul.mubr.f32.gmra.mxu0 %v656
    %v724 = vpop.f32.mrf.mxu0
    %v725 = vadd.f32 %v653, %v724
    %v726 = vpop.f32.mrf.mxu0
    %727 = vdwg.mxu0
    %v728 = vtanh.pop %v725
    %vm729 = vcmask 254976
    %730 = vst.msk [vmem:[#allocation2] sm:$0x3] %vm729, %v728
    %s731 = scalar_lea.vmem %s0, 2
    %v732 = vld [vmem:[%s731] sm:$0x3]
    %v733 = vsel %vm75, %v180, 0
    %735 = vmatprep.subr.mxu0 0.0
    %736 = vmatpush1.msra.mxu0 0.0
    %737 = vmatprep.subr.mxu0 0.0
    %738 = vmatpush1.msra.mxu0 0.0
    %739 = vmatprep.subr.mxu0 0.0
    %740 = vmatpush1.msra.mxu0 0.0
    %741 = vmatprep.subr.mxu0 0.0
    %742 = vmatpush1.msra.mxu0 0.0
    %743 = vmatprep.subr.mxu0 0.0
    %744 = vmatpush1.msra.mxu0 0.0
    %745 = vmatprep.subr.mxu0 0.0
    %746 = vmatpush1.msra.mxu0 0.0
    %747 = vmatprep.subr.mxu0 0.0
    %748 = vmatpush1.msra.mxu0 0.0
    %749 = vmatprep.subr.mxu0 0.0
    %750 = vmatpush1.msra.mxu0 0.0
    %751 = vmatprep.subr.mxu0 0.0
    %752 = vmatpush1.msra.mxu0 0.0
    %753 = vmatprep.subr.mxu0 0.0
    %754 = vmatpush1.msra.mxu0 0.0
    %755 = vmatprep.subr.mxu0 0.0
    %756 = vmatpush1.msra.mxu0 0.0
    %757 = vmatprep.subr.mxu0 0.0
    %758 = vmatpush1.msra.mxu0 0.0
    %759 = vmatprep.subr.mxu0 0.0
    %760 = vmatpush1.msra.mxu0 %v43
    %761 = vmatprep.subr.mxu0 0.0
    %762 = vmatpush1.msra.mxu0 %v42
    %763 = vmatprep.subr.mxu0 0.0
    %764 = vmatpush1.msra.mxu0 %v41
    %765 = vmatprep.subr.mxu0 0.0
    %766 = vmatpush1.msra.mxu0 %v40
    %767 = vmatprep.subr.mxu0 0.0
    %768 = vmatpush2.msra.mxu0 0.0
    %769 = vmatprep.subr.mxu0 0.0
    %770 = vmatpush2.msra.mxu0 0.0
    %771 = vmatprep.subr.mxu0 0.0
    %772 = vmatpush2.msra.mxu0 0.0
    %773 = vmatprep.subr.mxu0 0.0
    %774 = vmatpush2.msra.mxu0 0.0
    %775 = vmatprep.subr.mxu0 0.0
    %776 = vmatpush2.msra.mxu0 0.0
    %777 = vmatprep.subr.mxu0 0.0
    %778 = vmatpush2.msra.mxu0 0.0
    %779 = vmatprep.subr.mxu0 0.0
    %780 = vmatpush2.msra.mxu0 0.0
    %781 = vmatprep.subr.mxu0 0.0
    %782 = vmatpush2.msra.mxu0 0.0
    %783 = vmatprep.subr.mxu0 0.0
    %784 = vmatpush2.msra.mxu0 0.0
    %785 = vmatprep.subr.mxu0 0.0
    %786 = vmatpush2.msra.mxu0 0.0
    %787 = vmatprep.subr.mxu0 0.0
    %788 = vmatpush2.msra.mxu0 0.0
    %789 = vmatprep.subr.mxu0 0.0
    %790 = vmatpush2.msra.mxu0 0.0
    %791 = vmatprep.subr.mxu0 0.0
    %792 = vmatpush2.msra.mxu0 0.0
    %793 = vmatprep.subr.mxu0 0.0
    %794 = vmatpush2.msra.mxu0 0.0
    %795 = vmatprep.subr.mxu0 0.0
    %796 = vmatpush2.msra.mxu0 0.0
    %797 = vmatprep.subr.mxu0 0.0
    %798 = vmatpush2.msra.mxu0 0.0
    %799 = vmatprep.mubr.f32.mxu0 0.0
    %800 = vmatmul.mubr.f32.gmra.mxu0 %v733
    %v801 = vpop.f32.mrf.mxu0
    %v802 = vadd.f32 0.0, %v801
    %v803 = vpop.f32.mrf.mxu0
    %804 = vdwg.mxu0
    %v805 = vadd.f32 %v732, %v802
    %v806 = vxor.u32 %v805, 2147483648
    %v807 = vmul.f32 %v806, 1.442695
    %v808 = vpow.pop %v807
    %v809 = vadd.f32 %v808, 1.0
    %v810 = vrcp.pop %v809
    %v811 = vmul.f32 1.0, %v810
    %v812 = vtanh.pop %v805
    %v813 = vmul.f32 %v811, %v171
    %815 = vrot.lane.b32.xlu0 %v812, 64
    %v816 = vpop.permute.xlu0 %815
    %v818 = vmul.f32 %v811, %v816
    %820 = vrot.lane.b32.xlu0 %v818, 32
    %v821 = vpop.permute.xlu0 %820
    %v823 = vadd.f32 %v813, %v821
    %v824 = vtanh.pop %v823
    %826 = vrot.lane.b32.xlu0 %v824, 64
    %v827 = vpop.permute.xlu0 %826
    %v829 = vmul.f32 %v811, %v827
    %831 = vrot.lane.b32.xlu0 %v829, 32
    %v832 = vpop.permute.xlu0 %831
    %v834 = vsel %vm75, %v832, %v646
    %v836 = vsel %vm192, %v834, 0
    %838 = vmatprep.subr.mxu0 0.0
    %839 = vmatpush1.msra.mxu0 0.0
    %840 = vmatprep.subr.mxu0 0.0
    %841 = vmatpush1.msra.mxu0 0.0
    %842 = vmatprep.subr.mxu0 0.0
    %843 = vmatpush1.msra.mxu0 0.0
    %844 = vmatprep.subr.mxu0 0.0
    %845 = vmatpush1.msra.mxu0 0.0
    %846 = vmatprep.subr.mxu0 0.0
    %847 = vmatpush1.msra.mxu0 0.0
    %848 = vmatprep.subr.mxu0 0.0
    %849 = vmatpush1.msra.mxu0 0.0
    %850 = vmatprep.subr.mxu0 0.0
    %851 = vmatpush1.msra.mxu0 0.0
    %852 = vmatprep.subr.mxu0 0.0
    %853 = vmatpush1.msra.mxu0 0.0
    %854 = vmatprep.subr.mxu0 0.0
    %855 = vmatpush1.msra.mxu0 %v51
    %856 = vmatprep.subr.mxu0 0.0
    %857 = vmatpush1.msra.mxu0 %v50
    %858 = vmatprep.subr.mxu0 0.0
    %859 = vmatpush1.msra.mxu0 %v49
    %860 = vmatprep.subr.mxu0 0.0
    %861 = vmatpush1.msra.mxu0 %v48
    %862 = vmatprep.subr.mxu0 0.0
    %863 = vmatpush1.msra.mxu0 %v47
    %864 = vmatprep.subr.mxu0 0.0
    %865 = vmatpush1.msra.mxu0 %v46
    %866 = vmatprep.subr.mxu0 0.0
    %867 = vmatpush1.msra.mxu0 %v45
    %868 = vmatprep.subr.mxu0 0.0
    %869 = vmatpush1.msra.mxu0 %v44
    %870 = vmatprep.subr.mxu0 0.0
    %871 = vmatpush2.msra.mxu0 0.0
    %872 = vmatprep.subr.mxu0 0.0
    %873 = vmatpush2.msra.mxu0 0.0
    %874 = vmatprep.subr.mxu0 0.0
    %875 = vmatpush2.msra.mxu0 0.0
    %876 = vmatprep.subr.mxu0 0.0
    %877 = vmatpush2.msra.mxu0 0.0
    %878 = vmatprep.subr.mxu0 0.0
    %879 = vmatpush2.msra.mxu0 0.0
    %880 = vmatprep.subr.mxu0 0.0
    %881 = vmatpush2.msra.mxu0 0.0
    %882 = vmatprep.subr.mxu0 0.0
    %883 = vmatpush2.msra.mxu0 0.0
    %884 = vmatprep.subr.mxu0 0.0
    %885 = vmatpush2.msra.mxu0 0.0
    %886 = vmatprep.subr.mxu0 0.0
    %887 = vmatpush2.msra.mxu0 0.0
    %888 = vmatprep.subr.mxu0 0.0
    %889 = vmatpush2.msra.mxu0 0.0
    %890 = vmatprep.subr.mxu0 0.0
    %891 = vmatpush2.msra.mxu0 0.0
    %892 = vmatprep.subr.mxu0 0.0
    %893 = vmatpush2.msra.mxu0 0.0
    %894 = vmatprep.subr.mxu0 0.0
    %895 = vmatpush2.msra.mxu0 0.0
    %896 = vmatprep.subr.mxu0 0.0
    %897 = vmatpush2.msra.mxu0 0.0
    %898 = vmatprep.subr.mxu0 0.0
    %899 = vmatpush2.msra.mxu0 0.0
    %900 = vmatprep.subr.mxu0 0.0
    %901 = vmatpush2.msra.mxu0 0.0
    %902 = vmatprep.mubr.f32.mxu0 0.0
    %903 = vmatmul.mubr.f32.gmra.mxu0 %v836
    %v904 = vpop.f32.mrf.mxu0
    %v905 = vadd.f32 %v190, %v904
    %v906 = vpop.f32.mrf.mxu0
    %907 = vdwg.mxu0
    %v908 = vxor.u32 %v905, 2147483648
    %v909 = vmul.f32 %v908, 1.442695
    %v910 = vpow.pop %v909
    %v911 = vadd.f32 %v910, 1.0
    %v912 = vrcp.pop %v911
    %v913 = vmul.f32 1.0, %v912
    %v914 = vtanh.pop %v905
    %v915 = vmul.f32 %v913, %v283
    %917 = vrot.lane.b32.xlu0 %v914, 64
    %v918 = vpop.permute.xlu0 %917
    %v920 = vmul.f32 %v913, %v918
    %922 = vrot.lane.b32.xlu0 %v920, 32
    %v923 = vpop.permute.xlu0 %922
    %v925 = vadd.f32 %v915, %v923
    %v926 = vtanh.pop %v925
    %928 = vrot.lane.b32.xlu0 %v926, 64
    %v929 = vpop.permute.xlu0 %928
    %v931 = vmul.f32 %v913, %v929
    %v934 = vunpack.c.l.s4 1966171168
    %v935 = vunpack.c.0.s8 %v934
    %v936 = vlaneseq
    %v937 = vshrl.u32 %v936, 7
    %v938 = vsub.s32 %v935, %v937
    %v939 = vrot.slane %v931, %v938
    %v940 = vcombine.high %v939, %v939
    %v942 = vunpack.c.l.s4 1966171168
    %v943 = vunpack.c.0.s8 %v942
    %v944 = vlaneseq
    %v945 = vshrl.u32 %v944, 7
    %v946 = vsub.s32 %v943, %v945
    %v947 = vrot.slane %v939, %v946
    %v949 = vunpack.c.l.s4 1966171168
    %v950 = vunpack.c.0.s8 %v949
    %v951 = vlaneseq
    %v952 = vshrl.u32 %v951, 7
    %v953 = vsub.s32 %v950, %v952
    %v954 = vrot.slane %v940, %v953
    %v955 = vlaneseq
    %v956 = vshrl.u32 %v955, 7
    %v957 = vsub.s32 0, %v956
    %v958 = vrot.slane %v947, %v957
    %959 = vrot.lane.b32.xlu0 %v958, 32
    %v960 = vpop.permute.xlu0 %959
    %v961 = vsel %vm75, %v960, 0
    %963 = vmatprep.subr.mxu0 0.0
    %964 = vmatpush1.msra.mxu0 0.0
    %965 = vmatprep.subr.mxu0 0.0
    %966 = vmatpush1.msra.mxu0 0.0
    %967 = vmatprep.subr.mxu0 0.0
    %968 = vmatpush1.msra.mxu0 0.0
    %969 = vmatprep.subr.mxu0 0.0
    %970 = vmatpush1.msra.mxu0 0.0
    %971 = vmatprep.subr.mxu0 0.0
    %972 = vmatpush1.msra.mxu0 0.0
    %973 = vmatprep.subr.mxu0 0.0
    %974 = vmatpush1.msra.mxu0 0.0
    %975 = vmatprep.subr.mxu0 0.0
    %976 = vmatpush1.msra.mxu0 0.0
    %977 = vmatprep.subr.mxu0 0.0
    %978 = vmatpush1.msra.mxu0 0.0
    %979 = vmatprep.subr.mxu0 0.0
    %980 = vmatpush1.msra.mxu0 0.0
    %981 = vmatprep.subr.mxu0 0.0
    %982 = vmatpush1.msra.mxu0 0.0
    %983 = vmatprep.subr.mxu0 0.0
    %984 = vmatpush1.msra.mxu0 0.0
    %985 = vmatprep.subr.mxu0 0.0
    %986 = vmatpush1.msra.mxu0 0.0
    %987 = vmatprep.subr.mxu0 0.0
    %988 = vmatpush1.msra.mxu0 %v67
    %989 = vmatprep.subr.mxu0 0.0
    %990 = vmatpush1.msra.mxu0 %v66
    %991 = vmatprep.subr.mxu0 0.0
    %992 = vmatpush1.msra.mxu0 %v65
    %993 = vmatprep.subr.mxu0 0.0
    %994 = vmatpush1.msra.mxu0 %v64
    %995 = vmatprep.subr.mxu0 0.0
    %996 = vmatpush2.msra.mxu0 0.0
    %997 = vmatprep.subr.mxu0 0.0
    %998 = vmatpush2.msra.mxu0 0.0
    %999 = vmatprep.subr.mxu0 0.0
    %1000 = vmatpush2.msra.mxu0 0.0
    %1001 = vmatprep.subr.mxu0 0.0
    %1002 = vmatpush2.msra.mxu0 0.0
    %1003 = vmatprep.subr.mxu0 0.0
    %1004 = vmatpush2.msra.mxu0 0.0
    %1005 = vmatprep.subr.mxu0 0.0
    %1006 = vmatpush2.msra.mxu0 0.0
    %1007 = vmatprep.subr.mxu0 0.0
    %1008 = vmatpush2.msra.mxu0 0.0
    %1009 = vmatprep.subr.mxu0 0.0
    %1010 = vmatpush2.msra.mxu0 0.0
    %1011 = vmatprep.subr.mxu0 0.0
    %1012 = vmatpush2.msra.mxu0 0.0
    %1013 = vmatprep.subr.mxu0 0.0
    %1014 = vmatpush2.msra.mxu0 0.0
    %1015 = vmatprep.subr.mxu0 0.0
    %1016 = vmatpush2.msra.mxu0 0.0
    %1017 = vmatprep.subr.mxu0 0.0
    %1018 = vmatpush2.msra.mxu0 0.0
    %1019 = vmatprep.subr.mxu0 0.0
    %1020 = vmatpush2.msra.mxu0 0.0
    %1021 = vmatprep.subr.mxu0 0.0
    %1022 = vmatpush2.msra.mxu0 0.0
    %1023 = vmatprep.subr.mxu0 0.0
    %1024 = vmatpush2.msra.mxu0 0.0
    %1025 = vmatprep.subr.mxu0 0.0
    %1026 = vmatpush2.msra.mxu0 0.0
    %1027 = vmatprep.mubr.f32.mxu0 0.0
    %1028 = vmatmul.mubr.f32.gmra.mxu0 %v961
    %v1029 = vpop.f32.mrf.mxu0
    %v1030 = vadd.f32 0.0, %v1029
    %v1031 = vpop.f32.mrf.mxu0
    %1032 = vdwg.mxu0
    %v1033 = vlaneseq
    %v1034 = vshrl.u32 %v1033, 7
    %v1035 = vsub.s32 0, %v1034
    %v1036 = vrot.slane %v954, %v1035
    %1037 = vrot.lane.b32.xlu0 %v1036, 32
    %v1038 = vpop.permute.xlu0 %1037
    %v1039 = vsel %vm75, %v1038, 0
    %1041 = vmatprep.subr.mxu0 0.0
    %1042 = vmatpush1.msra.mxu0 0.0
    %1043 = vmatprep.subr.mxu0 0.0
    %1044 = vmatpush1.msra.mxu0 0.0
    %1045 = vmatprep.subr.mxu0 0.0
    %1046 = vmatpush1.msra.mxu0 0.0
    %1047 = vmatprep.subr.mxu0 0.0
    %1048 = vmatpush1.msra.mxu0 0.0
    %1049 = vmatprep.subr.mxu0 0.0
    %1050 = vmatpush1.msra.mxu0 0.0
    %1051 = vmatprep.subr.mxu0 0.0
    %1052 = vmatpush1.msra.mxu0 0.0
    %1053 = vmatprep.subr.mxu0 0.0
    %1054 = vmatpush1.msra.mxu0 0.0
    %1055 = vmatprep.subr.mxu0 0.0
    %1056 = vmatpush1.msra.mxu0 0.0
    %1057 = vmatprep.subr.mxu0 0.0
    %1058 = vmatpush1.msra.mxu0 0.0
    %1059 = vmatprep.subr.mxu0 0.0
    %1060 = vmatpush1.msra.mxu0 0.0
    %1061 = vmatprep.subr.mxu0 0.0
    %1062 = vmatpush1.msra.mxu0 0.0
    %1063 = vmatprep.subr.mxu0 0.0
    %1064 = vmatpush1.msra.mxu0 0.0
    %1065 = vmatprep.subr.mxu0 0.0
    %1066 = vmatpush1.msra.mxu0 %v71
    %1067 = vmatprep.subr.mxu0 0.0
    %1068 = vmatpush1.msra.mxu0 %v70
    %1069 = vmatprep.subr.mxu0 0.0
    %1070 = vmatpush1.msra.mxu0 %v69
    %1071 = vmatprep.subr.mxu0 0.0
    %1072 = vmatpush1.msra.mxu0 %v68
    %1073 = vmatprep.subr.mxu0 0.0
    %1074 = vmatpush2.msra.mxu0 0.0
    %1075 = vmatprep.subr.mxu0 0.0
    %1076 = vmatpush2.msra.mxu0 0.0
    %1077 = vmatprep.subr.mxu0 0.0
    %1078 = vmatpush2.msra.mxu0 0.0
    %1079 = vmatprep.subr.mxu0 0.0
    %1080 = vmatpush2.msra.mxu0 0.0
    %1081 = vmatprep.subr.mxu0 0.0
    %1082 = vmatpush2.msra.mxu0 0.0
    %1083 = vmatprep.subr.mxu0 0.0
    %1084 = vmatpush2.msra.mxu0 0.0
    %1085 = vmatprep.subr.mxu0 0.0
    %1086 = vmatpush2.msra.mxu0 0.0
    %1087 = vmatprep.subr.mxu0 0.0
    %1088 = vmatpush2.msra.mxu0 0.0
    %1089 = vmatprep.subr.mxu0 0.0
    %1090 = vmatpush2.msra.mxu0 0.0
    %1091 = vmatprep.subr.mxu0 0.0
    %1092 = vmatpush2.msra.mxu0 0.0
    %1093 = vmatprep.subr.mxu0 0.0
    %1094 = vmatpush2.msra.mxu0 0.0
    %1095 = vmatprep.subr.mxu0 0.0
    %1096 = vmatpush2.msra.mxu0 0.0
    %1097 = vmatprep.subr.mxu0 0.0
    %1098 = vmatpush2.msra.mxu0 0.0
    %1099 = vmatprep.subr.mxu0 0.0
    %1100 = vmatpush2.msra.mxu0 0.0
    %1101 = vmatprep.subr.mxu0 0.0
    %1102 = vmatpush2.msra.mxu0 0.0
    %1103 = vmatprep.subr.mxu0 0.0
    %1104 = vmatpush2.msra.mxu0 0.0
    %1105 = vmatprep.mubr.f32.mxu0 0.0
    %1106 = vmatmul.mubr.f32.gmra.mxu0 %v1039
    %v1107 = vpop.f32.mrf.mxu0
    %v1108 = vadd.f32 0.0, %v1107
    %v1109 = vpop.f32.mrf.mxu0
    %1110 = vdwg.mxu0
    %v1111 = vsel %vm469, %v1030, -inf
    %1112 = vmax.xlane.f32.xlu0 %v1111
    %v1113 = vpop.xlane.xlu0 %1112
    %v1114 = vsel %vm469, %v1108, -inf
    %1115 = vmax.xlane.f32.xlu0 %v1114
    %v1116 = vpop.xlane.xlu0 %1115
    %v1117 = vsub.f32 %v1030, %v1113
    %v1118 = vsub.f32 %v1108, %v1116
    %v1119 = vmul.f32 %v1117, 1.442695
    %v1120 = vpow.pop %v1119
    %v1121 = vmul.f32 %v1118, 1.442695
    %v1122 = vpow.pop %v1121
    %v1124 = vsel %vm482, %v1120, 0
    %1126 = vmatprep.subr.mxu0 0.0
    %1127 = vmatpush1.msra.mxu0 0.0
    %1128 = vmatprep.subr.mxu0 0.0
    %1129 = vmatpush1.msra.mxu0 0.0
    %1130 = vmatprep.subr.mxu0 0.0
    %1131 = vmatpush1.msra.mxu0 0.0
    %1132 = vmatprep.subr.mxu0 0.0
    %1133 = vmatpush1.msra.mxu0 0.0
    %1134 = vmatprep.subr.mxu0 0.0
    %1135 = vmatpush1.msra.mxu0 0.0
    %1136 = vmatprep.subr.mxu0 0.0
    %1137 = vmatpush1.msra.mxu0 0.0
    %1138 = vmatprep.subr.mxu0 0.0
    %1139 = vmatpush1.msra.mxu0 0.0
    %1140 = vmatprep.subr.mxu0 0.0
    %1141 = vmatpush1.msra.mxu0 0.0
    %1142 = vmatprep.subr.mxu0 0.0
    %1143 = vmatpush1.msra.mxu0 0.0
    %1144 = vmatprep.subr.mxu0 0.0
    %1145 = vmatpush1.msra.mxu0 0.0
    %1146 = vmatprep.subr.mxu0 0.0
    %1147 = vmatpush1.msra.mxu0 0.0
    %1148 = vmatprep.subr.mxu0 0.0
    %1149 = vmatpush1.msra.mxu0 0.0
    %1150 = vmatprep.subr.mxu0 0.0
    %1151 = vmatpush1.msra.mxu0 0.0
    %1152 = vmatprep.subr.mxu0 0.0
    %1153 = vmatpush1.msra.mxu0 0.0
    %1154 = vmatprep.subr.mxu0 0.0
    %1155 = vmatpush1.msra.mxu0 0.0
    %1156 = vmatprep.subr.mxu0 0.0
    %1157 = vmatpush1.msra.mxu0 %v62
    %1158 = vmatprep.subr.mxu0 0.0
    %1159 = vmatpush2.msra.mxu0 0.0
    %1160 = vmatprep.subr.mxu0 0.0
    %1161 = vmatpush2.msra.mxu0 0.0
    %1162 = vmatprep.subr.mxu0 0.0
    %1163 = vmatpush2.msra.mxu0 0.0
    %1164 = vmatprep.subr.mxu0 0.0
    %1165 = vmatpush2.msra.mxu0 0.0
    %1166 = vmatprep.subr.mxu0 0.0
    %1167 = vmatpush2.msra.mxu0 0.0
    %1168 = vmatprep.subr.mxu0 0.0
    %1169 = vmatpush2.msra.mxu0 0.0
    %1170 = vmatprep.subr.mxu0 0.0
    %1171 = vmatpush2.msra.mxu0 0.0
    %1172 = vmatprep.subr.mxu0 0.0
    %1173 = vmatpush2.msra.mxu0 0.0
    %1174 = vmatprep.subr.mxu0 0.0
    %1175 = vmatpush2.msra.mxu0 0.0
    %1176 = vmatprep.subr.mxu0 0.0
    %1177 = vmatpush2.msra.mxu0 0.0
    %1178 = vmatprep.subr.mxu0 0.0
    %1179 = vmatpush2.msra.mxu0 0.0
    %1180 = vmatprep.subr.mxu0 0.0
    %1181 = vmatpush2.msra.mxu0 0.0
    %1182 = vmatprep.subr.mxu0 0.0
    %1183 = vmatpush2.msra.mxu0 0.0
    %1184 = vmatprep.subr.mxu0 0.0
    %1185 = vmatpush2.msra.mxu0 0.0
    %1186 = vmatprep.subr.mxu0 0.0
    %1187 = vmatpush2.msra.mxu0 0.0
    %1188 = vmatprep.subr.mxu0 0.0
    %1189 = vmatpush2.msra.mxu0 0.0
    %1190 = vmatprep.mubr.f32.mxu0 0.0
    %1191 = vmatmul.mubr.f32.gmra.mxu0 %v1124
    %v1192 = vpop.f32.mrf.mxu0
    %v1193 = vadd.f32 0.0, %v1192
    %v1194 = vpop.f32.mrf.mxu0
    %1195 = vdwg.mxu0
    %v1197 = vsel %vm482, %v1122, 0
    %1199 = vmatprep.subr.mxu0 0.0
    %1200 = vmatpush1.msra.mxu0 0.0
    %1201 = vmatprep.subr.mxu0 0.0
    %1202 = vmatpush1.msra.mxu0 0.0
    %1203 = vmatprep.subr.mxu0 0.0
    %1204 = vmatpush1.msra.mxu0 0.0
    %1205 = vmatprep.subr.mxu0 0.0
    %1206 = vmatpush1.msra.mxu0 0.0
    %1207 = vmatprep.subr.mxu0 0.0
    %1208 = vmatpush1.msra.mxu0 0.0
    %1209 = vmatprep.subr.mxu0 0.0
    %1210 = vmatpush1.msra.mxu0 0.0
    %1211 = vmatprep.subr.mxu0 0.0
    %1212 = vmatpush1.msra.mxu0 0.0
    %1213 = vmatprep.subr.mxu0 0.0
    %1214 = vmatpush1.msra.mxu0 0.0
    %1215 = vmatprep.subr.mxu0 0.0
    %1216 = vmatpush1.msra.mxu0 0.0
    %1217 = vmatprep.subr.mxu0 0.0
    %1218 = vmatpush1.msra.mxu0 0.0
    %1219 = vmatprep.subr.mxu0 0.0
    %1220 = vmatpush1.msra.mxu0 0.0
    %1221 = vmatprep.subr.mxu0 0.0
    %1222 = vmatpush1.msra.mxu0 0.0
    %1223 = vmatprep.subr.mxu0 0.0
    %1224 = vmatpush1.msra.mxu0 0.0
    %1225 = vmatprep.subr.mxu0 0.0
    %1226 = vmatpush1.msra.mxu0 0.0
    %1227 = vmatprep.subr.mxu0 0.0
    %1228 = vmatpush1.msra.mxu0 0.0
    %1229 = vmatprep.subr.mxu0 0.0
    %1230 = vmatpush1.msra.mxu0 %v63
    %1231 = vmatprep.subr.mxu0 0.0
    %1232 = vmatpush2.msra.mxu0 0.0
    %1233 = vmatprep.subr.mxu0 0.0
    %1234 = vmatpush2.msra.mxu0 0.0
    %1235 = vmatprep.subr.mxu0 0.0
    %1236 = vmatpush2.msra.mxu0 0.0
    %1237 = vmatprep.subr.mxu0 0.0
    %1238 = vmatpush2.msra.mxu0 0.0
    %1239 = vmatprep.subr.mxu0 0.0
    %1240 = vmatpush2.msra.mxu0 0.0
    %1241 = vmatprep.subr.mxu0 0.0
    %1242 = vmatpush2.msra.mxu0 0.0
    %1243 = vmatprep.subr.mxu0 0.0
    %1244 = vmatpush2.msra.mxu0 0.0
    %1245 = vmatprep.subr.mxu0 0.0
    %1246 = vmatpush2.msra.mxu0 0.0
    %1247 = vmatprep.subr.mxu0 0.0
    %1248 = vmatpush2.msra.mxu0 0.0
    %1249 = vmatprep.subr.mxu0 0.0
    %1250 = vmatpush2.msra.mxu0 0.0
    %1251 = vmatprep.subr.mxu0 0.0
    %1252 = vmatpush2.msra.mxu0 0.0
    %1253 = vmatprep.subr.mxu0 0.0
    %1254 = vmatpush2.msra.mxu0 0.0
    %1255 = vmatprep.subr.mxu0 0.0
    %1256 = vmatpush2.msra.mxu0 0.0
    %1257 = vmatprep.subr.mxu0 0.0
    %1258 = vmatpush2.msra.mxu0 0.0
    %1259 = vmatprep.subr.mxu0 0.0
    %1260 = vmatpush2.msra.mxu0 0.0
    %1261 = vmatprep.subr.mxu0 0.0
    %1262 = vmatpush2.msra.mxu0 0.0
    %1263 = vmatprep.mubr.f32.mxu0 0.0
    %1264 = vmatmul.mubr.f32.gmra.mxu0 %v1197
    %v1265 = vpop.f32.mrf.mxu0
    %v1266 = vadd.f32 0.0, %v1265
    %v1267 = vpop.f32.mrf.mxu0
    %1268 = vdwg.mxu0
    %v1269 = vsel %vm469, %v1120, 0.0
    %1270 = vadd.xlane.f32.xlu0 %v1269
    %v1271 = vpop.xlane.xlu0 %1270
    %v1272 = vsel %vm469, %v1122, 0.0
    %1273 = vadd.xlane.f32.xlu0 %v1272
    %v1274 = vpop.xlane.xlu0 %1273
    %v1275 = vrcp.pop %v1271
    %v1276 = vrcp.pop %v1274
    %v1277 = vmul.f32 %v1193, %v1275
    %v1278 = vmul.f32 %v1266, %v1276
    %v1281 = vrot.slane %v1278, 7
    %v1282 = vsel %vm642, %v1281, %v1277
    %1284 = vrot.lane.b32.xlu0 %v931, 64
    %v1285 = vpop.permute.xlu0 %1284
    %v1287 = vsel %vm75, %v1282, %v1285
    %v1289 = vsel %vm192, %v1287, 0
    %1291 = vmatprep.subr.mxu0 0.0
    %1292 = vmatpush1.msra.mxu0 0.0
    %1293 = vmatprep.subr.mxu0 0.0
    %1294 = vmatpush1.msra.mxu0 0.0
    %1295 = vmatprep.subr.mxu0 0.0
    %1296 = vmatpush1.msra.mxu0 0.0
    %1297 = vmatprep.subr.mxu0 0.0
    %1298 = vmatpush1.msra.mxu0 0.0
    %1299 = vmatprep.subr.mxu0 0.0
    %1300 = vmatpush1.msra.mxu0 0.0
    %1301 = vmatprep.subr.mxu0 0.0
    %1302 = vmatpush1.msra.mxu0 0.0
    %1303 = vmatprep.subr.mxu0 0.0
    %1304 = vmatpush1.msra.mxu0 0.0
    %1305 = vmatprep.subr.mxu0 0.0
    %1306 = vmatpush1.msra.mxu0 0.0
    %1307 = vmatprep.subr.mxu0 0.0
    %1308 = vmatpush1.msra.mxu0 %v60
    %1309 = vmatprep.subr.mxu0 0.0
    %1310 = vmatpush1.msra.mxu0 %v59
    %1311 = vmatprep.subr.mxu0 0.0
    %1312 = vmatpush1.msra.mxu0 %v58
    %1313 = vmatprep.subr.mxu0 0.0
    %1314 = vmatpush1.msra.mxu0 %v57
    %1315 = vmatprep.subr.mxu0 0.0
    %1316 = vmatpush1.msra.mxu0 %v56
    %1317 = vmatprep.subr.mxu0 0.0
    %1318 = vmatpush1.msra.mxu0 %v55
    %1319 = vmatprep.subr.mxu0 0.0
    %1320 = vmatpush1.msra.mxu0 %v54
    %1321 = vmatprep.subr.mxu0 0.0
    %1322 = vmatpush1.msra.mxu0 %v53
    %1323 = vmatprep.subr.mxu0 0.0
    %1324 = vmatpush2.msra.mxu0 0.0
    %1325 = vmatprep.subr.mxu0 0.0
    %1326 = vmatpush2.msra.mxu0 0.0
    %1327 = vmatprep.subr.mxu0 0.0
    %1328 = vmatpush2.msra.mxu0 0.0
    %1329 = vmatprep.subr.mxu0 0.0
    %1330 = vmatpush2.msra.mxu0 0.0
    %1331 = vmatprep.subr.mxu0 0.0
    %1332 = vmatpush2.msra.mxu0 0.0
    %1333 = vmatprep.subr.mxu0 0.0
    %1334 = vmatpush2.msra.mxu0 0.0
    %1335 = vmatprep.subr.mxu0 0.0
    %1336 = vmatpush2.msra.mxu0 0.0
    %1337 = vmatprep.subr.mxu0 0.0
    %1338 = vmatpush2.msra.mxu0 0.0
    %1339 = vmatprep.subr.mxu0 0.0
    %1340 = vmatpush2.msra.mxu0 0.0
    %1341 = vmatprep.subr.mxu0 0.0
    %1342 = vmatpush2.msra.mxu0 0.0
    %1343 = vmatprep.subr.mxu0 0.0
    %1344 = vmatpush2.msra.mxu0 0.0
    %1345 = vmatprep.subr.mxu0 0.0
    %1346 = vmatpush2.msra.mxu0 0.0
    %1347 = vmatprep.subr.mxu0 0.0
    %1348 = vmatpush2.msra.mxu0 0.0
    %1349 = vmatprep.subr.mxu0 0.0
    %1350 = vmatpush2.msra.mxu0 0.0
    %1351 = vmatprep.subr.mxu0 0.0
    %1352 = vmatpush2.msra.mxu0 0.0
    %1353 = vmatprep.subr.mxu0 0.0
    %1354 = vmatpush2.msra.mxu0 0.0
    %1355 = vmatprep.mubr.f32.mxu0 0.0
    %1356 = vmatmul.mubr.f32.gmra.mxu0 %v1289
    %v1357 = vpop.f32.mrf.mxu0
    %v1358 = vadd.f32 %v653, %v1357
    %v1359 = vpop.f32.mrf.mxu0
    %1360 = vdwg.mxu0
    %v1361 = vtanh.pop %v1358
    %s1362 = scalar_lea.vmem [#allocation2], 2
    %1363 = vst.msk [vmem:[%s1362] sm:$0x3] %vm729, %v1361
    %s1364 = scalar_lea.vmem %s0, 4
    %v1365 = vld [vmem:[%s1364] sm:$0x3]
    %v1366 = vsel %vm75, %v832, 0
    %1368 = vmatprep.subr.mxu0 0.0
    %1369 = vmatpush1.msra.mxu0 0.0
    %1370 = vmatprep.subr.mxu0 0.0
    %1371 = vmatpush1.msra.mxu0 0.0
    %1372 = vmatprep.subr.mxu0 0.0
    %1373 = vmatpush1.msra.mxu0 0.0
    %1374 = vmatprep.subr.mxu0 0.0
    %1375 = vmatpush1.msra.mxu0 0.0
    %1376 = vmatprep.subr.mxu0 0.0
    %1377 = vmatpush1.msra.mxu0 0.0
    %1378 = vmatprep.subr.mxu0 0.0
    %1379 = vmatpush1.msra.mxu0 0.0
    %1380 = vmatprep.subr.mxu0 0.0
    %1381 = vmatpush1.msra.mxu0 0.0
    %1382 = vmatprep.subr.mxu0 0.0
    %1383 = vmatpush1.msra.mxu0 0.0
    %1384 = vmatprep.subr.mxu0 0.0
    %1385 = vmatpush1.msra.mxu0 0.0
    %1386 = vmatprep.subr.mxu0 0.0
    %1387 = vmatpush1.msra.mxu0 0.0
    %1388 = vmatprep.subr.mxu0 0.0
    %1389 = vmatpush1.msra.mxu0 0.0
    %1390 = vmatprep.subr.mxu0 0.0
    %1391 = vmatpush1.msra.mxu0 0.0
    %1392 = vmatprep.subr.mxu0 0.0
    %1393 = vmatpush1.msra.mxu0 %v43
    %1394 = vmatprep.subr.mxu0 0.0
    %1395 = vmatpush1.msra.mxu0 %v42
    %1396 = vmatprep.subr.mxu0 0.0
    %1397 = vmatpush1.msra.mxu0 %v41
    %1398 = vmatprep.subr.mxu0 0.0
    %1399 = vmatpush1.msra.mxu0 %v40
    %1400 = vmatprep.subr.mxu0 0.0
    %1401 = vmatpush2.msra.mxu0 0.0
    %1402 = vmatprep.subr.mxu0 0.0
    %1403 = vmatpush2.msra.mxu0 0.0
    %1404 = vmatprep.subr.mxu0 0.0
    %1405 = vmatpush2.msra.mxu0 0.0
    %1406 = vmatprep.subr.mxu0 0.0
    %1407 = vmatpush2.msra.mxu0 0.0
    %1408 = vmatprep.subr.mxu0 0.0
    %1409 = vmatpush2.msra.mxu0 0.0
    %1410 = vmatprep.subr.mxu0 0.0
    %1411 = vmatpush2.msra.mxu0 0.0
    %1412 = vmatprep.subr.mxu0 0.0
    %1413 = vmatpush2.msra.mxu0 0.0
    %1414 = vmatprep.subr.mxu0 0.0
    %1415 = vmatpush2.msra.mxu0 0.0
    %1416 = vmatprep.subr.mxu0 0.0
    %1417 = vmatpush2.msra.mxu0 0.0
    %1418 = vmatprep.subr.mxu0 0.0
    %1419 = vmatpush2.msra.mxu0 0.0
    %1420 = vmatprep.subr.mxu0 0.0
    %1421 = vmatpush2.msra.mxu0 0.0
    %1422 = vmatprep.subr.mxu0 0.0
    %1423 = vmatpush2.msra.mxu0 0.0
    %1424 = vmatprep.subr.mxu0 0.0
    %1425 = vmatpush2.msra.mxu0 0.0
    %1426 = vmatprep.subr.mxu0 0.0
    %1427 = vmatpush2.msra.mxu0 0.0
    %1428 = vmatprep.subr.mxu0 0.0
    %1429 = vmatpush2.msra.mxu0 0.0
    %1430 = vmatprep.subr.mxu0 0.0
    %1431 = vmatpush2.msra.mxu0 0.0
    %1432 = vmatprep.mubr.f32.mxu0 0.0
    %1433 = vmatmul.mubr.f32.gmra.mxu0 %v1366
    %v1434 = vpop.f32.mrf.mxu0
    %v1435 = vadd.f32 0.0, %v1434
    %v1436 = vpop.f32.mrf.mxu0
    %1437 = vdwg.mxu0
    %v1438 = vadd.f32 %v1365, %v1435
    %v1439 = vxor.u32 %v1438, 2147483648
    %v1440 = vmul.f32 %v1439, 1.442695
    %v1441 = vpow.pop %v1440
    %v1442 = vadd.f32 %v1441, 1.0
    %v1443 = vrcp.pop %v1442
    %v1444 = vmul.f32 1.0, %v1443
    %v1445 = vtanh.pop %v1438
    %v1446 = vmul.f32 %v1444, %v823
    %1448 = vrot.lane.b32.xlu0 %v1445, 64
    %v1449 = vpop.permute.xlu0 %1448
    %v1451 = vmul.f32 %v1444, %v1449
    %1453 = vrot.lane.b32.xlu0 %v1451, 32
    %v1454 = vpop.permute.xlu0 %1453
    %v1456 = vadd.f32 %v1446, %v1454
    %v1457 = vtanh.pop %v1456
    %1459 = vrot.lane.b32.xlu0 %v1457, 64
    %v1460 = vpop.permute.xlu0 %1459
    %v1462 = vmul.f32 %v1444, %v1460
    %1464 = vrot.lane.b32.xlu0 %v1462, 32
    %v1465 = vpop.permute.xlu0 %1464
    %v1467 = vsel %vm75, %v1465, %v1285
    %v1469 = vsel %vm192, %v1467, 0
    %1471 = vmatprep.subr.mxu0 0.0
    %1472 = vmatpush1.msra.mxu0 0.0
    %1473 = vmatprep.subr.mxu0 0.0
    %1474 = vmatpush1.msra.mxu0 0.0
    %1475 = vmatprep.subr.mxu0 0.0
    %1476 = vmatpush1.msra.mxu0 0.0
    %1477 = vmatprep.subr.mxu0 0.0
    %1478 = vmatpush1.msra.mxu0 0.0
    %1479 = vmatprep.subr.mxu0 0.0
    %1480 = vmatpush1.msra.mxu0 0.0
    %1481 = vmatprep.subr.mxu0 0.0
    %1482 = vmatpush1.msra.mxu0 0.0
    %1483 = vmatprep.subr.mxu0 0.0
    %1484 = vmatpush1.msra.mxu0 0.0
    %1485 = vmatprep.subr.mxu0 0.0
    %1486 = vmatpush1.msra.mxu0 0.0
    %1487 = vmatprep.subr.mxu0 0.0
    %1488 = vmatpush1.msra.mxu0 %v51
    %1489 = vmatprep.subr.mxu0 0.0
    %1490 = vmatpush1.msra.mxu0 %v50
    %1491 = vmatprep.subr.mxu0 0.0
    %1492 = vmatpush1.msra.mxu0 %v49
    %1493 = vmatprep.subr.mxu0 0.0
    %1494 = vmatpush1.msra.mxu0 %v48
    %1495 = vmatprep.subr.mxu0 0.0
    %1496 = vmatpush1.msra.mxu0 %v47
    %1497 = vmatprep.subr.mxu0 0.0
    %1498 = vmatpush1.msra.mxu0 %v46
    %1499 = vmatprep.subr.mxu0 0.0
    %1500 = vmatpush1.msra.mxu0 %v45
    %1501 = vmatprep.subr.mxu0 0.0
    %1502 = vmatpush1.msra.mxu0 %v44
    %1503 = vmatprep.subr.mxu0 0.0
    %1504 = vmatpush2.msra.mxu0 0.0
    %1505 = vmatprep.subr.mxu0 0.0
    %1506 = vmatpush2.msra.mxu0 0.0
    %1507 = vmatprep.subr.mxu0 0.0
    %1508 = vmatpush2.msra.mxu0 0.0
    %1509 = vmatprep.subr.mxu0 0.0
    %1510 = vmatpush2.msra.mxu0 0.0
    %1511 = vmatprep.subr.mxu0 0.0
    %1512 = vmatpush2.msra.mxu0 0.0
    %1513 = vmatprep.subr.mxu0 0.0
    %1514 = vmatpush2.msra.mxu0 0.0
    %1515 = vmatprep.subr.mxu0 0.0
    %1516 = vmatpush2.msra.mxu0 0.0
    %1517 = vmatprep.subr.mxu0 0.0
    %1518 = vmatpush2.msra.mxu0 0.0
    %1519 = vmatprep.subr.mxu0 0.0
    %1520 = vmatpush2.msra.mxu0 0.0
    %1521 = vmatprep.subr.mxu0 0.0
    %1522 = vmatpush2.msra.mxu0 0.0
    %1523 = vmatprep.subr.mxu0 0.0
    %1524 = vmatpush2.msra.mxu0 0.0
    %1525 = vmatprep.subr.mxu0 0.0
    %1526 = vmatpush2.msra.mxu0 0.0
    %1527 = vmatprep.subr.mxu0 0.0
    %1528 = vmatpush2.msra.mxu0 0.0
    %1529 = vmatprep.subr.mxu0 0.0
    %1530 = vmatpush2.msra.mxu0 0.0
    %1531 = vmatprep.subr.mxu0 0.0
    %1532 = vmatpush2.msra.mxu0 0.0
    %1533 = vmatprep.subr.mxu0 0.0
    %1534 = vmatpush2.msra.mxu0 0.0
    %1535 = vmatprep.mubr.f32.mxu0 0.0
    %1536 = vmatmul.mubr.f32.gmra.mxu0 %v1469
    %v1537 = vpop.f32.mrf.mxu0
    %v1538 = vadd.f32 %v190, %v1537
    %v1539 = vpop.f32.mrf.mxu0
    %1540 = vdwg.mxu0
    %v1541 = vxor.u32 %v1538, 2147483648
    %v1542 = vmul.f32 %v1541, 1.442695
    %v1543 = vpow.pop %v1542
    %v1544 = vadd.f32 %v1543, 1.0
    %v1545 = vrcp.pop %v1544
    %v1546 = vmul.f32 1.0, %v1545
    %v1547 = vtanh.pop %v1538
    %v1548 = vmul.f32 %v1546, %v925
    %1550 = vrot.lane.b32.xlu0 %v1547, 64
    %v1551 = vpop.permute.xlu0 %1550
    %v1553 = vmul.f32 %v1546, %v1551
    %1555 = vrot.lane.b32.xlu0 %v1553, 32
    %v1556 = vpop.permute.xlu0 %1555
    %v1558 = vadd.f32 %v1548, %v1556
    %v1559 = vtanh.pop %v1558
    %1561 = vrot.lane.b32.xlu0 %v1559, 64
    %v1562 = vpop.permute.xlu0 %1561
    %v1564 = vmul.f32 %v1546, %v1562
    %v1567 = vunpack.c.l.s4 1966171168
    %v1568 = vunpack.c.0.s8 %v1567
    %v1569 = vlaneseq
    %v1570 = vshrl.u32 %v1569, 7
    %v1571 = vsub.s32 %v1568, %v1570
    %v1572 = vrot.slane %v1564, %v1571
    %v1573 = vcombine.high %v1572, %v1572
    %v1575 = vunpack.c.l.s4 1966171168
    %v1576 = vunpack.c.0.s8 %v1575
    %v1577 = vlaneseq
    %v1578 = vshrl.u32 %v1577, 7
    %v1579 = vsub.s32 %v1576, %v1578
    %v1580 = vrot.slane %v1572, %v1579
    %v1582 = vunpack.c.l.s4 1966171168
    %v1583 = vunpack.c.0.s8 %v1582
    %v1584 = vlaneseq
    %v1585 = vshrl.u32 %v1584, 7
    %v1586 = vsub.s32 %v1583, %v1585
    %v1587 = vrot.slane %v1573, %v1586
    %v1588 = vlaneseq
    %v1589 = vshrl.u32 %v1588, 7
    %v1590 = vsub.s32 0, %v1589
    %v1591 = vrot.slane %v1580, %v1590
    %1592 = vrot.lane.b32.xlu0 %v1591, 32
    %v1593 = vpop.permute.xlu0 %1592
    %v1594 = vsel %vm75, %v1593, 0
    %1596 = vmatprep.subr.mxu0 0.0
    %1597 = vmatpush1.msra.mxu0 0.0
    %1598 = vmatprep.subr.mxu0 0.0
    %1599 = vmatpush1.msra.mxu0 0.0
    %1600 = vmatprep.subr.mxu0 0.0
    %1601 = vmatpush1.msra.mxu0 0.0
    %1602 = vmatprep.subr.mxu0 0.0
    %1603 = vmatpush1.msra.mxu0 0.0
    %1604 = vmatprep.subr.mxu0 0.0
    %1605 = vmatpush1.msra.mxu0 0.0
    %1606 = vmatprep.subr.mxu0 0.0
    %1607 = vmatpush1.msra.mxu0 0.0
    %1608 = vmatprep.subr.mxu0 0.0
    %1609 = vmatpush1.msra.mxu0 0.0
    %1610 = vmatprep.subr.mxu0 0.0
    %1611 = vmatpush1.msra.mxu0 0.0
    %1612 = vmatprep.subr.mxu0 0.0
    %1613 = vmatpush1.msra.mxu0 0.0
    %1614 = vmatprep.subr.mxu0 0.0
    %1615 = vmatpush1.msra.mxu0 0.0
    %1616 = vmatprep.subr.mxu0 0.0
    %1617 = vmatpush1.msra.mxu0 0.0
    %1618 = vmatprep.subr.mxu0 0.0
    %1619 = vmatpush1.msra.mxu0 0.0
    %1620 = vmatprep.subr.mxu0 0.0
    %1621 = vmatpush1.msra.mxu0 %v67
    %1622 = vmatprep.subr.mxu0 0.0
    %1623 = vmatpush1.msra.mxu0 %v66
    %1624 = vmatprep.subr.mxu0 0.0
    %1625 = vmatpush1.msra.mxu0 %v65
    %1626 = vmatprep.subr.mxu0 0.0
    %1627 = vmatpush1.msra.mxu0 %v64
    %1628 = vmatprep.subr.mxu0 0.0
    %1629 = vmatpush2.msra.mxu0 0.0
    %1630 = vmatprep.subr.mxu0 0.0
    %1631 = vmatpush2.msra.mxu0 0.0
    %1632 = vmatprep.subr.mxu0 0.0
    %1633 = vmatpush2.msra.mxu0 0.0
    %1634 = vmatprep.subr.mxu0 0.0
    %1635 = vmatpush2.msra.mxu0 0.0
    %1636 = vmatprep.subr.mxu0 0.0
    %1637 = vmatpush2.msra.mxu0 0.0
    %1638 = vmatprep.subr.mxu0 0.0
    %1639 = vmatpush2.msra.mxu0 0.0
    %1640 = vmatprep.subr.mxu0 0.0
    %1641 = vmatpush2.msra.mxu0 0.0
    %1642 = vmatprep.subr.mxu0 0.0
    %1643 = vmatpush2.msra.mxu0 0.0
    %1644 = vmatprep.subr.mxu0 0.0
    %1645 = vmatpush2.msra.mxu0 0.0
    %1646 = vmatprep.subr.mxu0 0.0
    %1647 = vmatpush2.msra.mxu0 0.0
    %1648 = vmatprep.subr.mxu0 0.0
    %1649 = vmatpush2.msra.mxu0 0.0
    %1650 = vmatprep.subr.mxu0 0.0
    %1651 = vmatpush2.msra.mxu0 0.0
    %1652 = vmatprep.subr.mxu0 0.0
    %1653 = vmatpush2.msra.mxu0 0.0
    %1654 = vmatprep.subr.mxu0 0.0
    %1655 = vmatpush2.msra.mxu0 0.0
    %1656 = vmatprep.subr.mxu0 0.0
    %1657 = vmatpush2.msra.mxu0 0.0
    %1658 = vmatprep.subr.mxu0 0.0
    %1659 = vmatpush2.msra.mxu0 0.0
    %1660 = vmatprep.mubr.f32.mxu0 0.0
    %1661 = vmatmul.mubr.f32.gmra.mxu0 %v1594
    %v1662 = vpop.f32.mrf.mxu0
    %v1663 = vadd.f32 0.0, %v1662
    %v1664 = vpop.f32.mrf.mxu0
    %1665 = vdwg.mxu0
    %v1666 = vlaneseq
    %v1667 = vshrl.u32 %v1666, 7
    %v1668 = vsub.s32 0, %v1667
    %v1669 = vrot.slane %v1587, %v1668
    %1670 = vrot.lane.b32.xlu0 %v1669, 32
    %v1671 = vpop.permute.xlu0 %1670
    %v1672 = vsel %vm75, %v1671, 0
    %1674 = vmatprep.subr.mxu0 0.0
    %1675 = vmatpush1.msra.mxu0 0.0
    %1676 = vmatprep.subr.mxu0 0.0
    %1677 = vmatpush1.msra.mxu0 0.0
    %1678 = vmatprep.subr.mxu0 0.0
    %1679 = vmatpush1.msra.mxu0 0.0
    %1680 = vmatprep.subr.mxu0 0.0
    %1681 = vmatpush1.msra.mxu0 0.0
    %1682 = vmatprep.subr.mxu0 0.0
    %1683 = vmatpush1.msra.mxu0 0.0
    %1684 = vmatprep.subr.mxu0 0.0
    %1685 = vmatpush1.msra.mxu0 0.0
    %1686 = vmatprep.subr.mxu0 0.0
    %1687 = vmatpush1.msra.mxu0 0.0
    %1688 = vmatprep.subr.mxu0 0.0
    %1689 = vmatpush1.msra.mxu0 0.0
    %1690 = vmatprep.subr.mxu0 0.0
    %1691 = vmatpush1.msra.mxu0 0.0
    %1692 = vmatprep.subr.mxu0 0.0
    %1693 = vmatpush1.msra.mxu0 0.0
    %1694 = vmatprep.subr.mxu0 0.0
    %1695 = vmatpush1.msra.mxu0 0.0
    %1696 = vmatprep.subr.mxu0 0.0
    %1697 = vmatpush1.msra.mxu0 0.0
    %1698 = vmatprep.subr.mxu0 0.0
    %1699 = vmatpush1.msra.mxu0 %v71
    %1700 = vmatprep.subr.mxu0 0.0
    %1701 = vmatpush1.msra.mxu0 %v70
    %1702 = vmatprep.subr.mxu0 0.0
    %1703 = vmatpush1.msra.mxu0 %v69
    %1704 = vmatprep.subr.mxu0 0.0
    %1705 = vmatpush1.msra.mxu0 %v68
    %1706 = vmatprep.subr.mxu0 0.0
    %1707 = vmatpush2.msra.mxu0 0.0
    %1708 = vmatprep.subr.mxu0 0.0
    %1709 = vmatpush2.msra.mxu0 0.0
    %1710 = vmatprep.subr.mxu0 0.0
    %1711 = vmatpush2.msra.mxu0 0.0
    %1712 = vmatprep.subr.mxu0 0.0
    %1713 = vmatpush2.msra.mxu0 0.0
    %1714 = vmatprep.subr.mxu0 0.0
    %1715 = vmatpush2.msra.mxu0 0.0
    %1716 = vmatprep.subr.mxu0 0.0
    %1717 = vmatpush2.msra.mxu0 0.0
    %1718 = vmatprep.subr.mxu0 0.0
    %1719 = vmatpush2.msra.mxu0 0.0
    %1720 = vmatprep.subr.mxu0 0.0
    %1721 = vmatpush2.msra.mxu0 0.0
    %1722 = vmatprep.subr.mxu0 0.0
    %1723 = vmatpush2.msra.mxu0 0.0
    %1724 = vmatprep.subr.mxu0 0.0
    %1725 = vmatpush2.msra.mxu0 0.0
    %1726 = vmatprep.subr.mxu0 0.0
    %1727 = vmatpush2.msra.mxu0 0.0
    %1728 = vmatprep.subr.mxu0 0.0
    %1729 = vmatpush2.msra.mxu0 0.0
    %1730 = vmatprep.subr.mxu0 0.0
    %1731 = vmatpush2.msra.mxu0 0.0
    %1732 = vmatprep.subr.mxu0 0.0
    %1733 = vmatpush2.msra.mxu0 0.0
    %1734 = vmatprep.subr.mxu0 0.0
    %1735 = vmatpush2.msra.mxu0 0.0
    %1736 = vmatprep.subr.mxu0 0.0
    %1737 = vmatpush2.msra.mxu0 0.0
    %1738 = vmatprep.mubr.f32.mxu0 0.0
    %1739 = vmatmul.mubr.f32.gmra.mxu0 %v1672
    %v1740 = vpop.f32.mrf.mxu0
    %v1741 = vadd.f32 0.0, %v1740
    %v1742 = vpop.f32.mrf.mxu0
    %1743 = vdwg.mxu0
    %v1744 = vsel %vm469, %v1663, -inf
    %1745 = vmax.xlane.f32.xlu0 %v1744
    %v1746 = vpop.xlane.xlu0 %1745
    %v1747 = vsel %vm469, %v1741, -inf
    %1748 = vmax.xlane.f32.xlu0 %v1747
    %v1749 = vpop.xlane.xlu0 %1748
    %v1750 = vsub.f32 %v1663, %v1746
    %v1751 = vsub.f32 %v1741, %v1749
    %v1752 = vmul.f32 %v1750, 1.442695
    %v1753 = vpow.pop %v1752
    %v1754 = vmul.f32 %v1751, 1.442695
    %v1755 = vpow.pop %v1754
    %v1757 = vsel %vm482, %v1753, 0
    %1759 = vmatprep.subr.mxu0 0.0
    %1760 = vmatpush1.msra.mxu0 0.0
    %1761 = vmatprep.subr.mxu0 0.0
    %1762 = vmatpush1.msra.mxu0 0.0
    %1763 = vmatprep.subr.mxu0 0.0
    %1764 = vmatpush1.msra.mxu0 0.0
    %1765 = vmatprep.subr.mxu0 0.0
    %1766 = vmatpush1.msra.mxu0 0.0
    %1767 = vmatprep.subr.mxu0 0.0
    %1768 = vmatpush1.msra.mxu0 0.0
    %1769 = vmatprep.subr.mxu0 0.0
    %1770 = vmatpush1.msra.mxu0 0.0
    %1771 = vmatprep.subr.mxu0 0.0
    %1772 = vmatpush1.msra.mxu0 0.0
    %1773 = vmatprep.subr.mxu0 0.0
    %1774 = vmatpush1.msra.mxu0 0.0
    %1775 = vmatprep.subr.mxu0 0.0
    %1776 = vmatpush1.msra.mxu0 0.0
    %1777 = vmatprep.subr.mxu0 0.0
    %1778 = vmatpush1.msra.mxu0 0.0
    %1779 = vmatprep.subr.mxu0 0.0
    %1780 = vmatpush1.msra.mxu0 0.0
    %1781 = vmatprep.subr.mxu0 0.0
    %1782 = vmatpush1.msra.mxu0 0.0
    %1783 = vmatprep.subr.mxu0 0.0
    %1784 = vmatpush1.msra.mxu0 0.0
    %1785 = vmatprep.subr.mxu0 0.0
    %1786 = vmatpush1.msra.mxu0 0.0
    %1787 = vmatprep.subr.mxu0 0.0
    %1788 = vmatpush1.msra.mxu0 0.0
    %1789 = vmatprep.subr.mxu0 0.0
    %1790 = vmatpush1.msra.mxu0 %v62
    %1791 = vmatprep.subr.mxu0 0.0
    %1792 = vmatpush2.msra.mxu0 0.0
    %1793 = vmatprep.subr.mxu0 0.0
    %1794 = vmatpush2.msra.mxu0 0.0
    %1795 = vmatprep.subr.mxu0 0.0
    %1796 = vmatpush2.msra.mxu0 0.0
    %1797 = vmatprep.subr.mxu0 0.0
    %1798 = vmatpush2.msra.mxu0 0.0
    %1799 = vmatprep.subr.mxu0 0.0
    %1800 = vmatpush2.msra.mxu0 0.0
    %1801 = vmatprep.subr.mxu0 0.0
    %1802 = vmatpush2.msra.mxu0 0.0
    %1803 = vmatprep.subr.mxu0 0.0
    %1804 = vmatpush2.msra.mxu0 0.0
    %1805 = vmatprep.subr.mxu0 0.0
    %1806 = vmatpush2.msra.mxu0 0.0
    %1807 = vmatprep.subr.mxu0 0.0
    %1808 = vmatpush2.msra.mxu0 0.0
    %1809 = vmatprep.subr.mxu0 0.0
    %1810 = vmatpush2.msra.mxu0 0.0
    %1811 = vmatprep.subr.mxu0 0.0
    %1812 = vmatpush2.msra.mxu0 0.0
    %1813 = vmatprep.subr.mxu0 0.0
    %1814 = vmatpush2.msra.mxu0 0.0
    %1815 = vmatprep.subr.mxu0 0.0
    %1816 = vmatpush2.msra.mxu0 0.0
    %1817 = vmatprep.subr.mxu0 0.0
    %1818 = vmatpush2.msra.mxu0 0.0
    %1819 = vmatprep.subr.mxu0 0.0
    %1820 = vmatpush2.msra.mxu0 0.0
    %1821 = vmatprep.subr.mxu0 0.0
    %1822 = vmatpush2.msra.mxu0 0.0
    %1823 = vmatprep.mubr.f32.mxu0 0.0
    %1824 = vmatmul.mubr.f32.gmra.mxu0 %v1757
    %v1825 = vpop.f32.mrf.mxu0
    %v1826 = vadd.f32 0.0, %v1825
    %v1827 = vpop.f32.mrf.mxu0
    %1828 = vdwg.mxu0
    %v1830 = vsel %vm482, %v1755, 0
    %1832 = vmatprep.subr.mxu0 0.0
    %1833 = vmatpush1.msra.mxu0 0.0
    %1834 = vmatprep.subr.mxu0 0.0
    %1835 = vmatpush1.msra.mxu0 0.0
    %1836 = vmatprep.subr.mxu0 0.0
    %1837 = vmatpush1.msra.mxu0 0.0
    %1838 = vmatprep.subr.mxu0 0.0
    %1839 = vmatpush1.msra.mxu0 0.0
    %1840 = vmatprep.subr.mxu0 0.0
    %1841 = vmatpush1.msra.mxu0 0.0
    %1842 = vmatprep.subr.mxu0 0.0
    %1843 = vmatpush1.msra.mxu0 0.0
    %1844 = vmatprep.subr.mxu0 0.0
    %1845 = vmatpush1.msra.mxu0 0.0
    %1846 = vmatprep.subr.mxu0 0.0
    %1847 = vmatpush1.msra.mxu0 0.0
    %1848 = vmatprep.subr.mxu0 0.0
    %1849 = vmatpush1.msra.mxu0 0.0
    %1850 = vmatprep.subr.mxu0 0.0
    %1851 = vmatpush1.msra.mxu0 0.0
    %1852 = vmatprep.subr.mxu0 0.0
    %1853 = vmatpush1.msra.mxu0 0.0
    %1854 = vmatprep.subr.mxu0 0.0
    %1855 = vmatpush1.msra.mxu0 0.0
    %1856 = vmatprep.subr.mxu0 0.0
    %1857 = vmatpush1.msra.mxu0 0.0
    %1858 = vmatprep.subr.mxu0 0.0
    %1859 = vmatpush1.msra.mxu0 0.0
    %1860 = vmatprep.subr.mxu0 0.0
    %1861 = vmatpush1.msra.mxu0 0.0
    %1862 = vmatprep.subr.mxu0 0.0
    %1863 = vmatpush1.msra.mxu0 %v63
    %1864 = vmatprep.subr.mxu0 0.0
    %1865 = vmatpush2.msra.mxu0 0.0
    %1866 = vmatprep.subr.mxu0 0.0
    %1867 = vmatpush2.msra.mxu0 0.0
    %1868 = vmatprep.subr.mxu0 0.0
    %1869 = vmatpush2.msra.mxu0 0.0
    %1870 = vmatprep.subr.mxu0 0.0
    %1871 = vmatpush2.msra.mxu0 0.0
    %1872 = vmatprep.subr.mxu0 0.0
    %1873 = vmatpush2.msra.mxu0 0.0
    %1874 = vmatprep.subr.mxu0 0.0
    %1875 = vmatpush2.msra.mxu0 0.0
    %1876 = vmatprep.subr.mxu0 0.0
    %1877 = vmatpush2.msra.mxu0 0.0
    %1878 = vmatprep.subr.mxu0 0.0
    %1879 = vmatpush2.msra.mxu0 0.0
    %1880 = vmatprep.subr.mxu0 0.0
    %1881 = vmatpush2.msra.mxu0 0.0
    %1882 = vmatprep.subr.mxu0 0.0
    %1883 = vmatpush2.msra.mxu0 0.0
    %1884 = vmatprep.subr.mxu0 0.0
    %1885 = vmatpush2.msra.mxu0 0.0
    %1886 = vmatprep.subr.mxu0 0.0
    %1887 = vmatpush2.msra.mxu0 0.0
    %1888 = vmatprep.subr.mxu0 0.0
    %1889 = vmatpush2.msra.mxu0 0.0
    %1890 = vmatprep.subr.mxu0 0.0
    %1891 = vmatpush2.msra.mxu0 0.0
    %1892 = vmatprep.subr.mxu0 0.0
    %1893 = vmatpush2.msra.mxu0 0.0
    %1894 = vmatprep.subr.mxu0 0.0
    %1895 = vmatpush2.msra.mxu0 0.0
    %1896 = vmatprep.mubr.f32.mxu0 0.0
    %1897 = vmatmul.mubr.f32.gmra.mxu0 %v1830
    %v1898 = vpop.f32.mrf.mxu0
    %v1899 = vadd.f32 0.0, %v1898
    %v1900 = vpop.f32.mrf.mxu0
    %1901 = vdwg.mxu0
    %v1902 = vsel %vm469, %v1753, 0.0
    %1903 = vadd.xlane.f32.xlu0 %v1902
    %v1904 = vpop.xlane.xlu0 %1903
    %v1905 = vsel %vm469, %v1755, 0.0
    %1906 = vadd.xlane.f32.xlu0 %v1905
    %v1907 = vpop.xlane.xlu0 %1906
    %v1908 = vrcp.pop %v1904
    %v1909 = vrcp.pop %v1907
    %v1910 = vmul.f32 %v1826, %v1908
    %v1911 = vmul.f32 %v1899, %v1909
    %v1914 = vrot.slane %v1911, 7
    %v1915 = vsel %vm642, %v1914, %v1910
    %1917 = vrot.lane.b32.xlu0 %v1564, 64
    %v1918 = vpop.permute.xlu0 %1917
    %v1920 = vsel %vm75, %v1915, %v1918
    %v1922 = vsel %vm192, %v1920, 0
    %1924 = vmatprep.subr.mxu0 0.0
    %1925 = vmatpush1.msra.mxu0 0.0
    %1926 = vmatprep.subr.mxu0 0.0
    %1927 = vmatpush1.msra.mxu0 0.0
    %1928 = vmatprep.subr.mxu0 0.0
    %1929 = vmatpush1.msra.mxu0 0.0
    %1930 = vmatprep.subr.mxu0 0.0
    %1931 = vmatpush1.msra.mxu0 0.0
    %1932 = vmatprep.subr.mxu0 0.0
    %1933 = vmatpush1.msra.mxu0 0.0
    %1934 = vmatprep.subr.mxu0 0.0
    %1935 = vmatpush1.msra.mxu0 0.0
    %1936 = vmatprep.subr.mxu0 0.0
    %1937 = vmatpush1.msra.mxu0 0.0
    %1938 = vmatprep.subr.mxu0 0.0
    %1939 = vmatpush1.msra.mxu0 0.0
    %1940 = vmatprep.subr.mxu0 0.0
    %1941 = vmatpush1.msra.mxu0 %v60
    %1942 = vmatprep.subr.mxu0 0.0
    %1943 = vmatpush1.msra.mxu0 %v59
    %1944 = vmatprep.subr.mxu0 0.0
    %1945 = vmatpush1.msra.mxu0 %v58
    %1946 = vmatprep.subr.mxu0 0.0
    %1947 = vmatpush1.msra.mxu0 %v57
    %1948 = vmatprep.subr.mxu0 0.0
    %1949 = vmatpush1.msra.mxu0 %v56
    %1950 = vmatprep.subr.mxu0 0.0
    %1951 = vmatpush1.msra.mxu0 %v55
    %1952 = vmatprep.subr.mxu0 0.0
    %1953 = vmatpush1.msra.mxu0 %v54
    %1954 = vmatprep.subr.mxu0 0.0
    %1955 = vmatpush1.msra.mxu0 %v53
    %1956 = vmatprep.subr.mxu0 0.0
    %1957 = vmatpush2.msra.mxu0 0.0
    %1958 = vmatprep.subr.mxu0 0.0
    %1959 = vmatpush2.msra.mxu0 0.0
    %1960 = vmatprep.subr.mxu0 0.0
    %1961 = vmatpush2.msra.mxu0 0.0
    %1962 = vmatprep.subr.mxu0 0.0
    %1963 = vmatpush2.msra.mxu0 0.0
    %1964 = vmatprep.subr.mxu0 0.0
    %1965 = vmatpush2.msra.mxu0 0.0
    %1966 = vmatprep.subr.mxu0 0.0
    %1967 = vmatpush2.msra.mxu0 0.0
    %1968 = vmatprep.subr.mxu0 0.0
    %1969 = vmatpush2.msra.mxu0 0.0
    %1970 = vmatprep.subr.mxu0 0.0
    %1971 = vmatpush2.msra.mxu0 0.0
    %1972 = vmatprep.subr.mxu0 0.0
    %1973 = vmatpush2.msra.mxu0 0.0
    %1974 = vmatprep.subr.mxu0 0.0
    %1975 = vmatpush2.msra.mxu0 0.0
    %1976 = vmatprep.subr.mxu0 0.0
    %1977 = vmatpush2.msra.mxu0 0.0
    %1978 = vmatprep.subr.mxu0 0.0
    %1979 = vmatpush2.msra.mxu0 0.0
    %1980 = vmatprep.subr.mxu0 0.0
    %1981 = vmatpush2.msra.mxu0 0.0
    %1982 = vmatprep.subr.mxu0 0.0
    %1983 = vmatpush2.msra.mxu0 0.0
    %1984 = vmatprep.subr.mxu0 0.0
    %1985 = vmatpush2.msra.mxu0 0.0
    %1986 = vmatprep.subr.mxu0 0.0
    %1987 = vmatpush2.msra.mxu0 0.0
    %1988 = vmatprep.mubr.f32.mxu0 0.0
    %1989 = vmatmul.mubr.f32.gmra.mxu0 %v1922
    %v1990 = vpop.f32.mrf.mxu0
    %v1991 = vadd.f32 %v653, %v1990
    %v1992 = vpop.f32.mrf.mxu0
    %1993 = vdwg.mxu0
    %v1994 = vtanh.pop %v1991
    %s1995 = scalar_lea.vmem [#allocation2], 4
    %1996 = vst.msk [vmem:[%s1995] sm:$0x3] %vm729, %v1994
    %s1997 = scalar_lea.vmem %s0, 6
    %v1998 = vld [vmem:[%s1997] sm:$0x3]
    %v1999 = vsel %vm75, %v1465, 0
    %2001 = vmatprep.subr.mxu0 0.0
    %2002 = vmatpush1.msra.mxu0 0.0
    %2003 = vmatprep.subr.mxu0 0.0
    %2004 = vmatpush1.msra.mxu0 0.0
    %2005 = vmatprep.subr.mxu0 0.0
    %2006 = vmatpush1.msra.mxu0 0.0
    %2007 = vmatprep.subr.mxu0 0.0
    %2008 = vmatpush1.msra.mxu0 0.0
    %2009 = vmatprep.subr.mxu0 0.0
    %2010 = vmatpush1.msra.mxu0 0.0
    %2011 = vmatprep.subr.mxu0 0.0
    %2012 = vmatpush1.msra.mxu0 0.0
    %2013 = vmatprep.subr.mxu0 0.0
    %2014 = vmatpush1.msra.mxu0 0.0
    %2015 = vmatprep.subr.mxu0 0.0
    %2016 = vmatpush1.msra.mxu0 0.0
    %2017 = vmatprep.subr.mxu0 0.0
    %2018 = vmatpush1.msra.mxu0 0.0
    %2019 = vmatprep.subr.mxu0 0.0
    %2020 = vmatpush1.msra.mxu0 0.0
    %2021 = vmatprep.subr.mxu0 0.0
    %2022 = vmatpush1.msra.mxu0 0.0
    %2023 = vmatprep.subr.mxu0 0.0
    %2024 = vmatpush1.msra.mxu0 0.0
    %2025 = vmatprep.subr.mxu0 0.0
    %2026 = vmatpush1.msra.mxu0 %v43
    %2027 = vmatprep.subr.mxu0 0.0
    %2028 = vmatpush1.msra.mxu0 %v42
    %2029 = vmatprep.subr.mxu0 0.0
    %2030 = vmatpush1.msra.mxu0 %v41
    %2031 = vmatprep.subr.mxu0 0.0
    %2032 = vmatpush1.msra.mxu0 %v40
    %2033 = vmatprep.subr.mxu0 0.0
    %2034 = vmatpush2.msra.mxu0 0.0
    %2035 = vmatprep.subr.mxu0 0.0
    %2036 = vmatpush2.msra.mxu0 0.0
    %2037 = vmatprep.subr.mxu0 0.0
    %2038 = vmatpush2.msra.mxu0 0.0
    %2039 = vmatprep.subr.mxu0 0.0
    %2040 = vmatpush2.msra.mxu0 0.0
    %2041 = vmatprep.subr.mxu0 0.0
    %2042 = vmatpush2.msra.mxu0 0.0
    %2043 = vmatprep.subr.mxu0 0.0
    %2044 = vmatpush2.msra.mxu0 0.0
    %2045 = vmatprep.subr.mxu0 0.0
    %2046 = vmatpush2.msra.mxu0 0.0
    %2047 = vmatprep.subr.mxu0 0.0
    %2048 = vmatpush2.msra.mxu0 0.0
    %2049 = vmatprep.subr.mxu0 0.0
    %2050 = vmatpush2.msra.mxu0 0.0
    %2051 = vmatprep.subr.mxu0 0.0
    %2052 = vmatpush2.msra.mxu0 0.0
    %2053 = vmatprep.subr.mxu0 0.0
    %2054 = vmatpush2.msra.mxu0 0.0
    %2055 = vmatprep.subr.mxu0 0.0
    %2056 = vmatpush2.msra.mxu0 0.0
    %2057 = vmatprep.subr.mxu0 0.0
    %2058 = vmatpush2.msra.mxu0 0.0
    %2059 = vmatprep.subr.mxu0 0.0
    %2060 = vmatpush2.msra.mxu0 0.0
    %2061 = vmatprep.subr.mxu0 0.0
    %2062 = vmatpush2.msra.mxu0 0.0
    %2063 = vmatprep.subr.mxu0 0.0
    %2064 = vmatpush2.msra.mxu0 0.0
    %2065 = vmatprep.mubr.f32.mxu0 0.0
    %2066 = vmatmul.mubr.f32.gmra.mxu0 %v1999
    %v2067 = vpop.f32.mrf.mxu0
    %v2068 = vadd.f32 0.0, %v2067
    %v2069 = vpop.f32.mrf.mxu0
    %2070 = vdwg.mxu0
    %v2071 = vadd.f32 %v1998, %v2068
    %v2072 = vxor.u32 %v2071, 2147483648
    %v2073 = vmul.f32 %v2072, 1.442695
    %v2074 = vpow.pop %v2073
    %v2075 = vadd.f32 %v2074, 1.0
    %v2076 = vrcp.pop %v2075
    %v2077 = vmul.f32 1.0, %v2076
    %v2078 = vtanh.pop %v2071
    %v2079 = vmul.f32 %v2077, %v1456
    %2081 = vrot.lane.b32.xlu0 %v2078, 64
    %v2082 = vpop.permute.xlu0 %2081
    %v2084 = vmul.f32 %v2077, %v2082
    %2086 = vrot.lane.b32.xlu0 %v2084, 32
    %v2087 = vpop.permute.xlu0 %2086
    %v2089 = vadd.f32 %v2079, %v2087
    %v2090 = vtanh.pop %v2089
    %2092 = vrot.lane.b32.xlu0 %v2090, 64
    %v2093 = vpop.permute.xlu0 %2092
    %v2095 = vmul.f32 %v2077, %v2093
    %2097 = vrot.lane.b32.xlu0 %v2095, 32
    %v2098 = vpop.permute.xlu0 %2097
    %v2100 = vsel %vm75, %v2098, %v1918
    %v2102 = vsel %vm192, %v2100, 0
    %2104 = vmatprep.subr.mxu0 0.0
    %2105 = vmatpush1.msra.mxu0 0.0
    %2106 = vmatprep.subr.mxu0 0.0
    %2107 = vmatpush1.msra.mxu0 0.0
    %2108 = vmatprep.subr.mxu0 0.0
    %2109 = vmatpush1.msra.mxu0 0.0
    %2110 = vmatprep.subr.mxu0 0.0
    %2111 = vmatpush1.msra.mxu0 0.0
    %2112 = vmatprep.subr.mxu0 0.0
    %2113 = vmatpush1.msra.mxu0 0.0
    %2114 = vmatprep.subr.mxu0 0.0
    %2115 = vmatpush1.msra.mxu0 0.0
    %2116 = vmatprep.subr.mxu0 0.0
    %2117 = vmatpush1.msra.mxu0 0.0
    %2118 = vmatprep.subr.mxu0 0.0
    %2119 = vmatpush1.msra.mxu0 0.0
    %2120 = vmatprep.subr.mxu0 0.0
    %2121 = vmatpush1.msra.mxu0 %v51
    %2122 = vmatprep.subr.mxu0 0.0
    %2123 = vmatpush1.msra.mxu0 %v50
    %2124 = vmatprep.subr.mxu0 0.0
    %2125 = vmatpush1.msra.mxu0 %v49
    %2126 = vmatprep.subr.mxu0 0.0
    %2127 = vmatpush1.msra.mxu0 %v48
    %2128 = vmatprep.subr.mxu0 0.0
    %2129 = vmatpush1.msra.mxu0 %v47
    %2130 = vmatprep.subr.mxu0 0.0
    %2131 = vmatpush1.msra.mxu0 %v46
    %2132 = vmatprep.subr.mxu0 0.0
    %2133 = vmatpush1.msra.mxu0 %v45
    %2134 = vmatprep.subr.mxu0 0.0
    %2135 = vmatpush1.msra.mxu0 %v44
    %2136 = vmatprep.subr.mxu0 0.0
    %2137 = vmatpush2.msra.mxu0 0.0
    %2138 = vmatprep.subr.mxu0 0.0
    %2139 = vmatpush2.msra.mxu0 0.0
    %2140 = vmatprep.subr.mxu0 0.0
    %2141 = vmatpush2.msra.mxu0 0.0
    %2142 = vmatprep.subr.mxu0 0.0
    %2143 = vmatpush2.msra.mxu0 0.0
    %2144 = vmatprep.subr.mxu0 0.0
    %2145 = vmatpush2.msra.mxu0 0.0
    %2146 = vmatprep.subr.mxu0 0.0
    %2147 = vmatpush2.msra.mxu0 0.0
    %2148 = vmatprep.subr.mxu0 0.0
    %2149 = vmatpush2.msra.mxu0 0.0
    %2150 = vmatprep.subr.mxu0 0.0
    %2151 = vmatpush2.msra.mxu0 0.0
    %2152 = vmatprep.subr.mxu0 0.0
    %2153 = vmatpush2.msra.mxu0 0.0
    %2154 = vmatprep.subr.mxu0 0.0
    %2155 = vmatpush2.msra.mxu0 0.0
    %2156 = vmatprep.subr.mxu0 0.0
    %2157 = vmatpush2.msra.mxu0 0.0
    %2158 = vmatprep.subr.mxu0 0.0
    %2159 = vmatpush2.msra.mxu0 0.0
    %2160 = vmatprep.subr.mxu0 0.0
    %2161 = vmatpush2.msra.mxu0 0.0
    %2162 = vmatprep.subr.mxu0 0.0
    %2163 = vmatpush2.msra.mxu0 0.0
    %2164 = vmatprep.subr.mxu0 0.0
    %2165 = vmatpush2.msra.mxu0 0.0
    %2166 = vmatprep.subr.mxu0 0.0
    %2167 = vmatpush2.msra.mxu0 0.0
    %2168 = vmatprep.mubr.f32.mxu0 0.0
    %2169 = vmatmul.mubr.f32.gmra.mxu0 %v2102
    %v2170 = vpop.f32.mrf.mxu0
    %v2171 = vadd.f32 %v190, %v2170
    %v2172 = vpop.f32.mrf.mxu0
    %2173 = vdwg.mxu0
    %v2174 = vxor.u32 %v2171, 2147483648
    %v2175 = vmul.f32 %v2174, 1.442695
    %v2176 = vpow.pop %v2175
    %v2177 = vadd.f32 %v2176, 1.0
    %v2178 = vrcp.pop %v2177
    %v2179 = vmul.f32 1.0, %v2178
    %v2180 = vtanh.pop %v2171
    %v2181 = vmul.f32 %v2179, %v1558
    %2183 = vrot.lane.b32.xlu0 %v2180, 64
    %v2184 = vpop.permute.xlu0 %2183
    %v2186 = vmul.f32 %v2179, %v2184
    %2188 = vrot.lane.b32.xlu0 %v2186, 32
    %v2189 = vpop.permute.xlu0 %2188
    %v2191 = vadd.f32 %v2181, %v2189
    %v2192 = vtanh.pop %v2191
    %2194 = vrot.lane.b32.xlu0 %v2192, 64
    %v2195 = vpop.permute.xlu0 %2194
    %v2197 = vmul.f32 %v2179, %v2195
    %v2200 = vunpack.c.l.s4 1966171168
    %v2201 = vunpack.c.0.s8 %v2200
    %v2202 = vlaneseq
    %v2203 = vshrl.u32 %v2202, 7
    %v2204 = vsub.s32 %v2201, %v2203
    %v2205 = vrot.slane %v2197, %v2204
    %v2206 = vcombine.high %v2205, %v2205
    %v2208 = vunpack.c.l.s4 1966171168
    %v2209 = vunpack.c.0.s8 %v2208
    %v2210 = vlaneseq
    %v2211 = vshrl.u32 %v2210, 7
    %v2212 = vsub.s32 %v2209, %v2211
    %v2213 = vrot.slane %v2205, %v2212
    %v2215 = vunpack.c.l.s4 1966171168
    %v2216 = vunpack.c.0.s8 %v2215
    %v2217 = vlaneseq
    %v2218 = vshrl.u32 %v2217, 7
    %v2219 = vsub.s32 %v2216, %v2218
    %v2220 = vrot.slane %v2206, %v2219
    %v2221 = vlaneseq
    %v2222 = vshrl.u32 %v2221, 7
    %v2223 = vsub.s32 0, %v2222
    %v2224 = vrot.slane %v2213, %v2223
    %2225 = vrot.lane.b32.xlu0 %v2224, 32
    %v2226 = vpop.permute.xlu0 %2225
    %v2227 = vsel %vm75, %v2226, 0
    %2229 = vmatprep.subr.mxu0 0.0
    %2230 = vmatpush1.msra.mxu0 0.0
    %2231 = vmatprep.subr.mxu0 0.0
    %2232 = vmatpush1.msra.mxu0 0.0
    %2233 = vmatprep.subr.mxu0 0.0
    %2234 = vmatpush1.msra.mxu0 0.0
    %2235 = vmatprep.subr.mxu0 0.0
    %2236 = vmatpush1.msra.mxu0 0.0
    %2237 = vmatprep.subr.mxu0 0.0
    %2238 = vmatpush1.msra.mxu0 0.0
    %2239 = vmatprep.subr.mxu0 0.0
    %2240 = vmatpush1.msra.mxu0 0.0
    %2241 = vmatprep.subr.mxu0 0.0
    %2242 = vmatpush1.msra.mxu0 0.0
    %2243 = vmatprep.subr.mxu0 0.0
    %2244 = vmatpush1.msra.mxu0 0.0
    %2245 = vmatprep.subr.mxu0 0.0
    %2246 = vmatpush1.msra.mxu0 0.0
    %2247 = vmatprep.subr.mxu0 0.0
    %2248 = vmatpush1.msra.mxu0 0.0
    %2249 = vmatprep.subr.mxu0 0.0
    %2250 = vmatpush1.msra.mxu0 0.0
    %2251 = vmatprep.subr.mxu0 0.0
    %2252 = vmatpush1.msra.mxu0 0.0
    %2253 = vmatprep.subr.mxu0 0.0
    %2254 = vmatpush1.msra.mxu0 %v67
    %2255 = vmatprep.subr.mxu0 0.0
    %2256 = vmatpush1.msra.mxu0 %v66
    %2257 = vmatprep.subr.mxu0 0.0
    %2258 = vmatpush1.msra.mxu0 %v65
    %2259 = vmatprep.subr.mxu0 0.0
    %2260 = vmatpush1.msra.mxu0 %v64
    %2261 = vmatprep.subr.mxu0 0.0
    %2262 = vmatpush2.msra.mxu0 0.0
    %2263 = vmatprep.subr.mxu0 0.0
    %2264 = vmatpush2.msra.mxu0 0.0
    %2265 = vmatprep.subr.mxu0 0.0
    %2266 = vmatpush2.msra.mxu0 0.0
    %2267 = vmatprep.subr.mxu0 0.0
    %2268 = vmatpush2.msra.mxu0 0.0
    %2269 = vmatprep.subr.mxu0 0.0
    %2270 = vmatpush2.msra.mxu0 0.0
    %2271 = vmatprep.subr.mxu0 0.0
    %2272 = vmatpush2.msra.mxu0 0.0
    %2273 = vmatprep.subr.mxu0 0.0
    %2274 = vmatpush2.msra.mxu0 0.0
    %2275 = vmatprep.subr.mxu0 0.0
    %2276 = vmatpush2.msra.mxu0 0.0
    %2277 = vmatprep.subr.mxu0 0.0
    %2278 = vmatpush2.msra.mxu0 0.0
    %2279 = vmatprep.subr.mxu0 0.0
    %2280 = vmatpush2.msra.mxu0 0.0
    %2281 = vmatprep.subr.mxu0 0.0
    %2282 = vmatpush2.msra.mxu0 0.0
    %2283 = vmatprep.subr.mxu0 0.0
    %2284 = vmatpush2.msra.mxu0 0.0
    %2285 = vmatprep.subr.mxu0 0.0
    %2286 = vmatpush2.msra.mxu0 0.0
    %2287 = vmatprep.subr.mxu0 0.0
    %2288 = vmatpush2.msra.mxu0 0.0
    %2289 = vmatprep.subr.mxu0 0.0
    %2290 = vmatpush2.msra.mxu0 0.0
    %2291 = vmatprep.subr.mxu0 0.0
    %2292 = vmatpush2.msra.mxu0 0.0
    %2293 = vmatprep.mubr.f32.mxu0 0.0
    %2294 = vmatmul.mubr.f32.gmra.mxu0 %v2227
    %v2295 = vpop.f32.mrf.mxu0
    %v2296 = vadd.f32 0.0, %v2295
    %v2297 = vpop.f32.mrf.mxu0
    %2298 = vdwg.mxu0
    %v2299 = vlaneseq
    %v2300 = vshrl.u32 %v2299, 7
    %v2301 = vsub.s32 0, %v2300
    %v2302 = vrot.slane %v2220, %v2301
    %2303 = vrot.lane.b32.xlu0 %v2302, 32
    %v2304 = vpop.permute.xlu0 %2303
    %v2305 = vsel %vm75, %v2304, 0
    %2307 = vmatprep.subr.mxu0 0.0
    %2308 = vmatpush1.msra.mxu0 0.0
    %2309 = vmatprep.subr.mxu0 0.0
    %2310 = vmatpush1.msra.mxu0 0.0
    %2311 = vmatprep.subr.mxu0 0.0
    %2312 = vmatpush1.msra.mxu0 0.0
    %2313 = vmatprep.subr.mxu0 0.0
    %2314 = vmatpush1.msra.mxu0 0.0
    %2315 = vmatprep.subr.mxu0 0.0
    %2316 = vmatpush1.msra.mxu0 0.0
    %2317 = vmatprep.subr.mxu0 0.0
    %2318 = vmatpush1.msra.mxu0 0.0
    %2319 = vmatprep.subr.mxu0 0.0
    %2320 = vmatpush1.msra.mxu0 0.0
    %2321 = vmatprep.subr.mxu0 0.0
    %2322 = vmatpush1.msra.mxu0 0.0
    %2323 = vmatprep.subr.mxu0 0.0
    %2324 = vmatpush1.msra.mxu0 0.0
    %2325 = vmatprep.subr.mxu0 0.0
    %2326 = vmatpush1.msra.mxu0 0.0
    %2327 = vmatprep.subr.mxu0 0.0
    %2328 = vmatpush1.msra.mxu0 0.0
    %2329 = vmatprep.subr.mxu0 0.0
    %2330 = vmatpush1.msra.mxu0 0.0
    %2331 = vmatprep.subr.mxu0 0.0
    %2332 = vmatpush1.msra.mxu0 %v71
    %2333 = vmatprep.subr.mxu0 0.0
    %2334 = vmatpush1.msra.mxu0 %v70
    %2335 = vmatprep.subr.mxu0 0.0
    %2336 = vmatpush1.msra.mxu0 %v69
    %2337 = vmatprep.subr.mxu0 0.0
    %2338 = vmatpush1.msra.mxu0 %v68
    %2339 = vmatprep.subr.mxu0 0.0
    %2340 = vmatpush2.msra.mxu0 0.0
    %2341 = vmatprep.subr.mxu0 0.0
    %2342 = vmatpush2.msra.mxu0 0.0
    %2343 = vmatprep.subr.mxu0 0.0
    %2344 = vmatpush2.msra.mxu0 0.0
    %2345 = vmatprep.subr.mxu0 0.0
    %2346 = vmatpush2.msra.mxu0 0.0
    %2347 = vmatprep.subr.mxu0 0.0
    %2348 = vmatpush2.msra.mxu0 0.0
    %2349 = vmatprep.subr.mxu0 0.0
    %2350 = vmatpush2.msra.mxu0 0.0
    %2351 = vmatprep.subr.mxu0 0.0
    %2352 = vmatpush2.msra.mxu0 0.0
    %2353 = vmatprep.subr.mxu0 0.0
    %2354 = vmatpush2.msra.mxu0 0.0
    %2355 = vmatprep.subr.mxu0 0.0
    %2356 = vmatpush2.msra.mxu0 0.0
    %2357 = vmatprep.subr.mxu0 0.0
    %2358 = vmatpush2.msra.mxu0 0.0
    %2359 = vmatprep.subr.mxu0 0.0
    %2360 = vmatpush2.msra.mxu0 0.0
    %2361 = vmatprep.subr.mxu0 0.0
    %2362 = vmatpush2.msra.mxu0 0.0
    %2363 = vmatprep.subr.mxu0 0.0
    %2364 = vmatpush2.msra.mxu0 0.0
    %2365 = vmatprep.subr.mxu0 0.0
    %2366 = vmatpush2.msra.mxu0 0.0
    %2367 = vmatprep.subr.mxu0 0.0
    %2368 = vmatpush2.msra.mxu0 0.0
    %2369 = vmatprep.subr.mxu0 0.0
    %2370 = vmatpush2.msra.mxu0 0.0
    %2371 = vmatprep.mubr.f32.mxu0 0.0
    %2372 = vmatmul.mubr.f32.gmra.mxu0 %v2305
    %v2373 = vpop.f32.mrf.mxu0
    %v2374 = vadd.f32 0.0, %v2373
    %v2375 = vpop.f32.mrf.mxu0
    %2376 = vdwg.mxu0
    %v2377 = vsel %vm469, %v2296, -inf
    %2378 = vmax.xlane.f32.xlu0 %v2377
    %v2379 = vpop.xlane.xlu0 %2378
    %v2380 = vsel %vm469, %v2374, -inf
    %2381 = vmax.xlane.f32.xlu0 %v2380
    %v2382 = vpop.xlane.xlu0 %2381
    %v2383 = vsub.f32 %v2296, %v2379
    %v2384 = vsub.f32 %v2374, %v2382
    %v2385 = vmul.f32 %v2383, 1.442695
    %v2386 = vpow.pop %v2385
    %v2387 = vmul.f32 %v2384, 1.442695
    %v2388 = vpow.pop %v2387
    %v2390 = vsel %vm482, %v2386, 0
    %2392 = vmatprep.subr.mxu0 0.0
    %2393 = vmatpush1.msra.mxu0 0.0
    %2394 = vmatprep.subr.mxu0 0.0
    %2395 = vmatpush1.msra.mxu0 0.0
    %2396 = vmatprep.subr.mxu0 0.0
    %2397 = vmatpush1.msra.mxu0 0.0
    %2398 = vmatprep.subr.mxu0 0.0
    %2399 = vmatpush1.msra.mxu0 0.0
    %2400 = vmatprep.subr.mxu0 0.0
    %2401 = vmatpush1.msra.mxu0 0.0
    %2402 = vmatprep.subr.mxu0 0.0
    %2403 = vmatpush1.msra.mxu0 0.0
    %2404 = vmatprep.subr.mxu0 0.0
    %2405 = vmatpush1.msra.mxu0 0.0
    %2406 = vmatprep.subr.mxu0 0.0
    %2407 = vmatpush1.msra.mxu0 0.0
    %2408 = vmatprep.subr.mxu0 0.0
    %2409 = vmatpush1.msra.mxu0 0.0
    %2410 = vmatprep.subr.mxu0 0.0
    %2411 = vmatpush1.msra.mxu0 0.0
    %2412 = vmatprep.subr.mxu0 0.0
    %2413 = vmatpush1.msra.mxu0 0.0
    %2414 = vmatprep.subr.mxu0 0.0
    %2415 = vmatpush1.msra.mxu0 0.0
    %2416 = vmatprep.subr.mxu0 0.0
    %2417 = vmatpush1.msra.mxu0 0.0
    %2418 = vmatprep.subr.mxu0 0.0
    %2419 = vmatpush1.msra.mxu0 0.0
    %2420 = vmatprep.subr.mxu0 0.0
    %2421 = vmatpush1.msra.mxu0 0.0
    %2422 = vmatprep.subr.mxu0 0.0
    %2423 = vmatpush1.msra.mxu0 %v62
    %2424 = vmatprep.subr.mxu0 0.0
    %2425 = vmatpush2.msra.mxu0 0.0
    %2426 = vmatprep.subr.mxu0 0.0
    %2427 = vmatpush2.msra.mxu0 0.0
    %2428 = vmatprep.subr.mxu0 0.0
    %2429 = vmatpush2.msra.mxu0 0.0
    %2430 = vmatprep.subr.mxu0 0.0
    %2431 = vmatpush2.msra.mxu0 0.0
    %2432 = vmatprep.subr.mxu0 0.0
    %2433 = vmatpush2.msra.mxu0 0.0
    %2434 = vmatprep.subr.mxu0 0.0
    %2435 = vmatpush2.msra.mxu0 0.0
    %2436 = vmatprep.subr.mxu0 0.0
    %2437 = vmatpush2.msra.mxu0 0.0
    %2438 = vmatprep.subr.mxu0 0.0
    %2439 = vmatpush2.msra.mxu0 0.0
    %2440 = vmatprep.subr.mxu0 0.0
    %2441 = vmatpush2.msra.mxu0 0.0
    %2442 = vmatprep.subr.mxu0 0.0
    %2443 = vmatpush2.msra.mxu0 0.0
    %2444 = vmatprep.subr.mxu0 0.0
    %2445 = vmatpush2.msra.mxu0 0.0
    %2446 = vmatprep.subr.mxu0 0.0
    %2447 = vmatpush2.msra.mxu0 0.0
    %2448 = vmatprep.subr.mxu0 0.0
    %2449 = vmatpush2.msra.mxu0 0.0
    %2450 = vmatprep.subr.mxu0 0.0
    %2451 = vmatpush2.msra.mxu0 0.0
    %2452 = vmatprep.subr.mxu0 0.0
    %2453 = vmatpush2.msra.mxu0 0.0
    %2454 = vmatprep.subr.mxu0 0.0
    %2455 = vmatpush2.msra.mxu0 0.0
    %2456 = vmatprep.mubr.f32.mxu0 0.0
    %2457 = vmatmul.mubr.f32.gmra.mxu0 %v2390
    %v2458 = vpop.f32.mrf.mxu0
    %v2459 = vadd.f32 0.0, %v2458
    %v2460 = vpop.f32.mrf.mxu0
    %2461 = vdwg.mxu0
    %v2463 = vsel %vm482, %v2388, 0
    %2465 = vmatprep.subr.mxu0 0.0
    %2466 = vmatpush1.msra.mxu0 0.0
    %2467 = vmatprep.subr.mxu0 0.0
    %2468 = vmatpush1.msra.mxu0 0.0
    %2469 = vmatprep.subr.mxu0 0.0
    %2470 = vmatpush1.msra.mxu0 0.0
    %2471 = vmatprep.subr.mxu0 0.0
    %2472 = vmatpush1.msra.mxu0 0.0
    %2473 = vmatprep.subr.mxu0 0.0
    %2474 = vmatpush1.msra.mxu0 0.0
    %2475 = vmatprep.subr.mxu0 0.0
    %2476 = vmatpush1.msra.mxu0 0.0
    %2477 = vmatprep.subr.mxu0 0.0
    %2478 = vmatpush1.msra.mxu0 0.0
    %2479 = vmatprep.subr.mxu0 0.0
    %2480 = vmatpush1.msra.mxu0 0.0
    %2481 = vmatprep.subr.mxu0 0.0
    %2482 = vmatpush1.msra.mxu0 0.0
    %2483 = vmatprep.subr.mxu0 0.0
    %2484 = vmatpush1.msra.mxu0 0.0
    %2485 = vmatprep.subr.mxu0 0.0
    %2486 = vmatpush1.msra.mxu0 0.0
    %2487 = vmatprep.subr.mxu0 0.0
    %2488 = vmatpush1.msra.mxu0 0.0
    %2489 = vmatprep.subr.mxu0 0.0
    %2490 = vmatpush1.msra.mxu0 0.0
    %2491 = vmatprep.subr.mxu0 0.0
    %2492 = vmatpush1.msra.mxu0 0.0
    %2493 = vmatprep.subr.mxu0 0.0
    %2494 = vmatpush1.msra.mxu0 0.0
    %2495 = vmatprep.subr.mxu0 0.0
    %2496 = vmatpush1.msra.mxu0 %v63
    %2497 = vmatprep.subr.mxu0 0.0
    %2498 = vmatpush2.msra.mxu0 0.0
    %2499 = vmatprep.subr.mxu0 0.0
    %2500 = vmatpush2.msra.mxu0 0.0
    %2501 = vmatprep.subr.mxu0 0.0
    %2502 = vmatpush2.msra.mxu0 0.0
    %2503 = vmatprep.subr.mxu0 0.0
    %2504 = vmatpush2.msra.mxu0 0.0
    %2505 = vmatprep.subr.mxu0 0.0
    %2506 = vmatpush2.msra.mxu0 0.0
    %2507 = vmatprep.subr.mxu0 0.0
    %2508 = vmatpush2.msra.mxu0 0.0
    %2509 = vmatprep.subr.mxu0 0.0
    %2510 = vmatpush2.msra.mxu0 0.0
    %2511 = vmatprep.subr.mxu0 0.0
    %2512 = vmatpush2.msra.mxu0 0.0
    %2513 = vmatprep.subr.mxu0 0.0
    %2514 = vmatpush2.msra.mxu0 0.0
    %2515 = vmatprep.subr.mxu0 0.0
    %2516 = vmatpush2.msra.mxu0 0.0
    %2517 = vmatprep.subr.mxu0 0.0
    %2518 = vmatpush2.msra.mxu0 0.0
    %2519 = vmatprep.subr.mxu0 0.0
    %2520 = vmatpush2.msra.mxu0 0.0
    %2521 = vmatprep.subr.mxu0 0.0
    %2522 = vmatpush2.msra.mxu0 0.0
    %2523 = vmatprep.subr.mxu0 0.0
    %2524 = vmatpush2.msra.mxu0 0.0
    %2525 = vmatprep.subr.mxu0 0.0
    %2526 = vmatpush2.msra.mxu0 0.0
    %2527 = vmatprep.subr.mxu0 0.0
    %2528 = vmatpush2.msra.mxu0 0.0
    %2529 = vmatprep.mubr.f32.mxu0 0.0
    %2530 = vmatmul.mubr.f32.gmra.mxu0 %v2463
    %v2531 = vpop.f32.mrf.mxu0
    %v2532 = vadd.f32 0.0, %v2531
    %v2533 = vpop.f32.mrf.mxu0
    %2534 = vdwg.mxu0
    %v2535 = vsel %vm469, %v2386, 0.0
    %2536 = vadd.xlane.f32.xlu0 %v2535
    %v2537 = vpop.xlane.xlu0 %2536
    %v2538 = vsel %vm469, %v2388, 0.0
    %2539 = vadd.xlane.f32.xlu0 %v2538
    %v2540 = vpop.xlane.xlu0 %2539
    %v2541 = vrcp.pop %v2537
    %v2542 = vrcp.pop %v2540
    %v2543 = vmul.f32 %v2459, %v2541
    %v2544 = vmul.f32 %v2532, %v2542
    %v2547 = vrot.slane %v2544, 7
    %v2548 = vsel %vm642, %v2547, %v2543
    %2550 = vrot.lane.b32.xlu0 %v2197, 64
    %v2551 = vpop.permute.xlu0 %2550
    %v2553 = vsel %vm75, %v2548, %v2551
    %v2555 = vsel %vm192, %v2553, 0
    %2557 = vmatprep.subr.mxu0 0.0
    %2558 = vmatpush1.msra.mxu0 0.0
    %2559 = vmatprep.subr.mxu0 0.0
    %2560 = vmatpush1.msra.mxu0 0.0
    %2561 = vmatprep.subr.mxu0 0.0
    %2562 = vmatpush1.msra.mxu0 0.0
    %2563 = vmatprep.subr.mxu0 0.0
    %2564 = vmatpush1.msra.mxu0 0.0
    %2565 = vmatprep.subr.mxu0 0.0
    %2566 = vmatpush1.msra.mxu0 0.0
    %2567 = vmatprep.subr.mxu0 0.0
    %2568 = vmatpush1.msra.mxu0 0.0
    %2569 = vmatprep.subr.mxu0 0.0
    %2570 = vmatpush1.msra.mxu0 0.0
    %2571 = vmatprep.subr.mxu0 0.0
    %2572 = vmatpush1.msra.mxu0 0.0
    %2573 = vmatprep.subr.mxu0 0.0
    %2574 = vmatpush1.msra.mxu0 %v60
    %2575 = vmatprep.subr.mxu0 0.0
    %2576 = vmatpush1.msra.mxu0 %v59
    %2577 = vmatprep.subr.mxu0 0.0
    %2578 = vmatpush1.msra.mxu0 %v58
    %2579 = vmatprep.subr.mxu0 0.0
    %2580 = vmatpush1.msra.mxu0 %v57
    %2581 = vmatprep.subr.mxu0 0.0
    %2582 = vmatpush1.msra.mxu0 %v56
    %2583 = vmatprep.subr.mxu0 0.0
    %2584 = vmatpush1.msra.mxu0 %v55
    %2585 = vmatprep.subr.mxu0 0.0
    %2586 = vmatpush1.msra.mxu0 %v54
    %2587 = vmatprep.subr.mxu0 0.0
    %2588 = vmatpush1.msra.mxu0 %v53
    %2589 = vmatprep.subr.mxu0 0.0
    %2590 = vmatpush2.msra.mxu0 0.0
    %2591 = vmatprep.subr.mxu0 0.0
    %2592 = vmatpush2.msra.mxu0 0.0
    %2593 = vmatprep.subr.mxu0 0.0
    %2594 = vmatpush2.msra.mxu0 0.0
    %2595 = vmatprep.subr.mxu0 0.0
    %2596 = vmatpush2.msra.mxu0 0.0
    %2597 = vmatprep.subr.mxu0 0.0
    %2598 = vmatpush2.msra.mxu0 0.0
    %2599 = vmatprep.subr.mxu0 0.0
    %2600 = vmatpush2.msra.mxu0 0.0
    %2601 = vmatprep.subr.mxu0 0.0
    %2602 = vmatpush2.msra.mxu0 0.0
    %2603 = vmatprep.subr.mxu0 0.0
    %2604 = vmatpush2.msra.mxu0 0.0
    %2605 = vmatprep.subr.mxu0 0.0
    %2606 = vmatpush2.msra.mxu0 0.0
    %2607 = vmatprep.subr.mxu0 0.0
    %2608 = vmatpush2.msra.mxu0 0.0
    %2609 = vmatprep.subr.mxu0 0.0
    %2610 = vmatpush2.msra.mxu0 0.0
    %2611 = vmatprep.subr.mxu0 0.0
    %2612 = vmatpush2.msra.mxu0 0.0
    %2613 = vmatprep.subr.mxu0 0.0
    %2614 = vmatpush2.msra.mxu0 0.0
    %2615 = vmatprep.subr.mxu0 0.0
    %2616 = vmatpush2.msra.mxu0 0.0
    %2617 = vmatprep.subr.mxu0 0.0
    %2618 = vmatpush2.msra.mxu0 0.0
    %2619 = vmatprep.subr.mxu0 0.0
    %2620 = vmatpush2.msra.mxu0 0.0
    %2621 = vmatprep.mubr.f32.mxu0 0.0
    %2622 = vmatmul.mubr.f32.gmra.mxu0 %v2555
    %v2623 = vpop.f32.mrf.mxu0
    %v2624 = vadd.f32 %v653, %v2623
    %v2625 = vpop.f32.mrf.mxu0
    %2626 = vdwg.mxu0
    %v2627 = vtanh.pop %v2624
    %s2628 = scalar_lea.vmem [#allocation2], 6
    %2629 = vst.msk [vmem:[%s2628] sm:$0x3] %vm729, %v2627
    %s2630 = scalar_lea.vmem %s0, 8
    %v2631 = vld [vmem:[%s2630] sm:$0x3]
    %v2632 = vsel %vm75, %v2098, 0
    %2634 = vmatprep.subr.mxu0 0.0
    %2635 = vmatpush1.msra.mxu0 0.0
    %2636 = vmatprep.subr.mxu0 0.0
    %2637 = vmatpush1.msra.mxu0 0.0
    %2638 = vmatprep.subr.mxu0 0.0
    %2639 = vmatpush1.msra.mxu0 0.0
    %2640 = vmatprep.subr.mxu0 0.0
    %2641 = vmatpush1.msra.mxu0 0.0
    %2642 = vmatprep.subr.mxu0 0.0
    %2643 = vmatpush1.msra.mxu0 0.0
    %2644 = vmatprep.subr.mxu0 0.0
    %2645 = vmatpush1.msra.mxu0 0.0
    %2646 = vmatprep.subr.mxu0 0.0
    %2647 = vmatpush1.msra.mxu0 0.0
    %2648 = vmatprep.subr.mxu0 0.0
    %2649 = vmatpush1.msra.mxu0 0.0
    %2650 = vmatprep.subr.mxu0 0.0
    %2651 = vmatpush1.msra.mxu0 0.0
    %2652 = vmatprep.subr.mxu0 0.0
    %2653 = vmatpush1.msra.mxu0 0.0
    %2654 = vmatprep.subr.mxu0 0.0
    %2655 = vmatpush1.msra.mxu0 0.0
    %2656 = vmatprep.subr.mxu0 0.0
    %2657 = vmatpush1.msra.mxu0 0.0
    %2658 = vmatprep.subr.mxu0 0.0
    %2659 = vmatpush1.msra.mxu0 %v43
    %2660 = vmatprep.subr.mxu0 0.0
    %2661 = vmatpush1.msra.mxu0 %v42
    %2662 = vmatprep.subr.mxu0 0.0
    %2663 = vmatpush1.msra.mxu0 %v41
    %2664 = vmatprep.subr.mxu0 0.0
    %2665 = vmatpush1.msra.mxu0 %v40
    %2666 = vmatprep.subr.mxu0 0.0
    %2667 = vmatpush2.msra.mxu0 0.0
    %2668 = vmatprep.subr.mxu0 0.0
    %2669 = vmatpush2.msra.mxu0 0.0
    %2670 = vmatprep.subr.mxu0 0.0
    %2671 = vmatpush2.msra.mxu0 0.0
    %2672 = vmatprep.subr.mxu0 0.0
    %2673 = vmatpush2.msra.mxu0 0.0
    %2674 = vmatprep.subr.mxu0 0.0
    %2675 = vmatpush2.msra.mxu0 0.0
    %2676 = vmatprep.subr.mxu0 0.0
    %2677 = vmatpush2.msra.mxu0 0.0
    %2678 = vmatprep.subr.mxu0 0.0
    %2679 = vmatpush2.msra.mxu0 0.0
    %2680 = vmatprep.subr.mxu0 0.0
    %2681 = vmatpush2.msra.mxu0 0.0
    %2682 = vmatprep.subr.mxu0 0.0
    %2683 = vmatpush2.msra.mxu0 0.0
    %2684 = vmatprep.subr.mxu0 0.0
    %2685 = vmatpush2.msra.mxu0 0.0
    %2686 = vmatprep.subr.mxu0 0.0
    %2687 = vmatpush2.msra.mxu0 0.0
    %2688 = vmatprep.subr.mxu0 0.0
    %2689 = vmatpush2.msra.mxu0 0.0
    %2690 = vmatprep.subr.mxu0 0.0
    %2691 = vmatpush2.msra.mxu0 0.0
    %2692 = vmatprep.subr.mxu0 0.0
    %2693 = vmatpush2.msra.mxu0 0.0
    %2694 = vmatprep.subr.mxu0 0.0
    %2695 = vmatpush2.msra.mxu0 0.0
    %2696 = vmatprep.subr.mxu0 0.0
    %2697 = vmatpush2.msra.mxu0 0.0
    %2698 = vmatprep.mubr.f32.mxu0 0.0
    %2699 = vmatmul.mubr.f32.gmra.mxu0 %v2632
    %v2700 = vpop.f32.mrf.mxu0
    %v2701 = vadd.f32 0.0, %v2700
    %v2702 = vpop.f32.mrf.mxu0
    %2703 = vdwg.mxu0
    %v2704 = vadd.f32 %v2631, %v2701
    %v2705 = vxor.u32 %v2704, 2147483648
    %v2706 = vmul.f32 %v2705, 1.442695
    %v2707 = vpow.pop %v2706
    %v2708 = vadd.f32 %v2707, 1.0
    %v2709 = vrcp.pop %v2708
    %v2710 = vmul.f32 1.0, %v2709
    %v2711 = vtanh.pop %v2704
    %v2712 = vmul.f32 %v2710, %v2089
    %2714 = vrot.lane.b32.xlu0 %v2711, 64
    %v2715 = vpop.permute.xlu0 %2714
    %v2717 = vmul.f32 %v2710, %v2715
    %2719 = vrot.lane.b32.xlu0 %v2717, 32
    %v2720 = vpop.permute.xlu0 %2719
    %v2722 = vadd.f32 %v2712, %v2720
    %v2723 = vtanh.pop %v2722
    %2725 = vrot.lane.b32.xlu0 %v2723, 64
    %v2726 = vpop.permute.xlu0 %2725
    %v2728 = vmul.f32 %v2710, %v2726
    %2730 = vrot.lane.b32.xlu0 %v2728, 32
    %v2731 = vpop.permute.xlu0 %2730
    %v2733 = vsel %vm75, %v2731, %v2551
    %v2735 = vsel %vm192, %v2733, 0
    %2737 = vmatprep.subr.mxu0 0.0
    %2738 = vmatpush1.msra.mxu0 0.0
    %2739 = vmatprep.subr.mxu0 0.0
    %2740 = vmatpush1.msra.mxu0 0.0
    %2741 = vmatprep.subr.mxu0 0.0
    %2742 = vmatpush1.msra.mxu0 0.0
    %2743 = vmatprep.subr.mxu0 0.0
    %2744 = vmatpush1.msra.mxu0 0.0
    %2745 = vmatprep.subr.mxu0 0.0
    %2746 = vmatpush1.msra.mxu0 0.0
    %2747 = vmatprep.subr.mxu0 0.0
    %2748 = vmatpush1.msra.mxu0 0.0
    %2749 = vmatprep.subr.mxu0 0.0
    %2750 = vmatpush1.msra.mxu0 0.0
    %2751 = vmatprep.subr.mxu0 0.0
    %2752 = vmatpush1.msra.mxu0 0.0
    %2753 = vmatprep.subr.mxu0 0.0
    %2754 = vmatpush1.msra.mxu0 %v51
    %2755 = vmatprep.subr.mxu0 0.0
    %2756 = vmatpush1.msra.mxu0 %v50
    %2757 = vmatprep.subr.mxu0 0.0
    %2758 = vmatpush1.msra.mxu0 %v49
    %2759 = vmatprep.subr.mxu0 0.0
    %2760 = vmatpush1.msra.mxu0 %v48
    %2761 = vmatprep.subr.mxu0 0.0
    %2762 = vmatpush1.msra.mxu0 %v47
    %2763 = vmatprep.subr.mxu0 0.0
    %2764 = vmatpush1.msra.mxu0 %v46
    %2765 = vmatprep.subr.mxu0 0.0
    %2766 = vmatpush1.msra.mxu0 %v45
    %2767 = vmatprep.subr.mxu0 0.0
    %2768 = vmatpush1.msra.mxu0 %v44
    %2769 = vmatprep.subr.mxu0 0.0
    %2770 = vmatpush2.msra.mxu0 0.0
    %2771 = vmatprep.subr.mxu0 0.0
    %2772 = vmatpush2.msra.mxu0 0.0
    %2773 = vmatprep.subr.mxu0 0.0
    %2774 = vmatpush2.msra.mxu0 0.0
    %2775 = vmatprep.subr.mxu0 0.0
    %2776 = vmatpush2.msra.mxu0 0.0
    %2777 = vmatprep.subr.mxu0 0.0
    %2778 = vmatpush2.msra.mxu0 0.0
    %2779 = vmatprep.subr.mxu0 0.0
    %2780 = vmatpush2.msra.mxu0 0.0
    %2781 = vmatprep.subr.mxu0 0.0
    %2782 = vmatpush2.msra.mxu0 0.0
    %2783 = vmatprep.subr.mxu0 0.0
    %2784 = vmatpush2.msra.mxu0 0.0
    %2785 = vmatprep.subr.mxu0 0.0
    %2786 = vmatpush2.msra.mxu0 0.0
    %2787 = vmatprep.subr.mxu0 0.0
    %2788 = vmatpush2.msra.mxu0 0.0
    %2789 = vmatprep.subr.mxu0 0.0
    %2790 = vmatpush2.msra.mxu0 0.0
    %2791 = vmatprep.subr.mxu0 0.0
    %2792 = vmatpush2.msra.mxu0 0.0
    %2793 = vmatprep.subr.mxu0 0.0
    %2794 = vmatpush2.msra.mxu0 0.0
    %2795 = vmatprep.subr.mxu0 0.0
    %2796 = vmatpush2.msra.mxu0 0.0
    %2797 = vmatprep.subr.mxu0 0.0
    %2798 = vmatpush2.msra.mxu0 0.0
    %2799 = vmatprep.subr.mxu0 0.0
    %2800 = vmatpush2.msra.mxu0 0.0
    %2801 = vmatprep.mubr.f32.mxu0 0.0
    %2802 = vmatmul.mubr.f32.gmra.mxu0 %v2735
    %v2803 = vpop.f32.mrf.mxu0
    %v2804 = vadd.f32 %v190, %v2803
    %v2805 = vpop.f32.mrf.mxu0
    %2806 = vdwg.mxu0
    %v2807 = vxor.u32 %v2804, 2147483648
    %v2808 = vmul.f32 %v2807, 1.442695
    %v2809 = vpow.pop %v2808
    %v2810 = vadd.f32 %v2809, 1.0
    %v2811 = vrcp.pop %v2810
    %v2812 = vmul.f32 1.0, %v2811
    %v2813 = vtanh.pop %v2804
    %v2814 = vmul.f32 %v2812, %v2191
    %2816 = vrot.lane.b32.xlu0 %v2813, 64
    %v2817 = vpop.permute.xlu0 %2816
    %v2819 = vmul.f32 %v2812, %v2817
    %2821 = vrot.lane.b32.xlu0 %v2819, 32
    %v2822 = vpop.permute.xlu0 %2821
    %v2824 = vadd.f32 %v2814, %v2822
    %v2825 = vtanh.pop %v2824
    %2827 = vrot.lane.b32.xlu0 %v2825, 64
    %v2828 = vpop.permute.xlu0 %2827
    %v2830 = vmul.f32 %v2812, %v2828
    %v2833 = vunpack.c.l.s4 1966171168
    %v2834 = vunpack.c.0.s8 %v2833
    %v2835 = vlaneseq
    %v2836 = vshrl.u32 %v2835, 7
    %v2837 = vsub.s32 %v2834, %v2836
    %v2838 = vrot.slane %v2830, %v2837
    %v2839 = vcombine.high %v2838, %v2838
    %v2841 = vunpack.c.l.s4 1966171168
    %v2842 = vunpack.c.0.s8 %v2841
    %v2843 = vlaneseq
    %v2844 = vshrl.u32 %v2843, 7
    %v2845 = vsub.s32 %v2842, %v2844
    %v2846 = vrot.slane %v2838, %v2845
    %v2848 = vunpack.c.l.s4 1966171168
    %v2849 = vunpack.c.0.s8 %v2848
    %v2850 = vlaneseq
    %v2851 = vshrl.u32 %v2850, 7
    %v2852 = vsub.s32 %v2849, %v2851
    %v2853 = vrot.slane %v2839, %v2852
    %v2854 = vlaneseq
    %v2855 = vshrl.u32 %v2854, 7
    %v2856 = vsub.s32 0, %v2855
    %v2857 = vrot.slane %v2846, %v2856
    %2858 = vrot.lane.b32.xlu0 %v2857, 32
    %v2859 = vpop.permute.xlu0 %2858
    %v2860 = vsel %vm75, %v2859, 0
    %2862 = vmatprep.subr.mxu0 0.0
    %2863 = vmatpush1.msra.mxu0 0.0
    %2864 = vmatprep.subr.mxu0 0.0
    %2865 = vmatpush1.msra.mxu0 0.0
    %2866 = vmatprep.subr.mxu0 0.0
    %2867 = vmatpush1.msra.mxu0 0.0
    %2868 = vmatprep.subr.mxu0 0.0
    %2869 = vmatpush1.msra.mxu0 0.0
    %2870 = vmatprep.subr.mxu0 0.0
    %2871 = vmatpush1.msra.mxu0 0.0
    %2872 = vmatprep.subr.mxu0 0.0
    %2873 = vmatpush1.msra.mxu0 0.0
    %2874 = vmatprep.subr.mxu0 0.0
    %2875 = vmatpush1.msra.mxu0 0.0
    %2876 = vmatprep.subr.mxu0 0.0
    %2877 = vmatpush1.msra.mxu0 0.0
    %2878 = vmatprep.subr.mxu0 0.0
    %2879 = vmatpush1.msra.mxu0 0.0
    %2880 = vmatprep.subr.mxu0 0.0
    %2881 = vmatpush1.msra.mxu0 0.0
    %2882 = vmatprep.subr.mxu0 0.0
    %2883 = vmatpush1.msra.mxu0 0.0
    %2884 = vmatprep.subr.mxu0 0.0
    %2885 = vmatpush1.msra.mxu0 0.0
    %2886 = vmatprep.subr.mxu0 0.0
    %2887 = vmatpush1.msra.mxu0 %v67
    %2888 = vmatprep.subr.mxu0 0.0
    %2889 = vmatpush1.msra.mxu0 %v66
    %2890 = vmatprep.subr.mxu0 0.0
    %2891 = vmatpush1.msra.mxu0 %v65
    %2892 = vmatprep.subr.mxu0 0.0
    %2893 = vmatpush1.msra.mxu0 %v64
    %2894 = vmatprep.subr.mxu0 0.0
    %2895 = vmatpush2.msra.mxu0 0.0
    %2896 = vmatprep.subr.mxu0 0.0
    %2897 = vmatpush2.msra.mxu0 0.0
    %2898 = vmatprep.subr.mxu0 0.0
    %2899 = vmatpush2.msra.mxu0 0.0
    %2900 = vmatprep.subr.mxu0 0.0
    %2901 = vmatpush2.msra.mxu0 0.0
    %2902 = vmatprep.subr.mxu0 0.0
    %2903 = vmatpush2.msra.mxu0 0.0
    %2904 = vmatprep.subr.mxu0 0.0
    %2905 = vmatpush2.msra.mxu0 0.0
    %2906 = vmatprep.subr.mxu0 0.0
    %2907 = vmatpush2.msra.mxu0 0.0
    %2908 = vmatprep.subr.mxu0 0.0
    %2909 = vmatpush2.msra.mxu0 0.0
    %2910 = vmatprep.subr.mxu0 0.0
    %2911 = vmatpush2.msra.mxu0 0.0
    %2912 = vmatprep.subr.mxu0 0.0
    %2913 = vmatpush2.msra.mxu0 0.0
    %2914 = vmatprep.subr.mxu0 0.0
    %2915 = vmatpush2.msra.mxu0 0.0
    %2916 = vmatprep.subr.mxu0 0.0
    %2917 = vmatpush2.msra.mxu0 0.0
    %2918 = vmatprep.subr.mxu0 0.0
    %2919 = vmatpush2.msra.mxu0 0.0
    %2920 = vmatprep.subr.mxu0 0.0
    %2921 = vmatpush2.msra.mxu0 0.0
    %2922 = vmatprep.subr.mxu0 0.0
    %2923 = vmatpush2.msra.mxu0 0.0
    %2924 = vmatprep.subr.mxu0 0.0
    %2925 = vmatpush2.msra.mxu0 0.0
    %2926 = vmatprep.mubr.f32.mxu0 0.0
    %2927 = vmatmul.mubr.f32.gmra.mxu0 %v2860
    %v2928 = vpop.f32.mrf.mxu0
    %v2929 = vadd.f32 0.0, %v2928
    %v2930 = vpop.f32.mrf.mxu0
    %2931 = vdwg.mxu0
    %v2932 = vlaneseq
    %v2933 = vshrl.u32 %v2932, 7
    %v2934 = vsub.s32 0, %v2933
    %v2935 = vrot.slane %v2853, %v2934
    %2936 = vrot.lane.b32.xlu0 %v2935, 32
    %v2937 = vpop.permute.xlu0 %2936
    %v2938 = vsel %vm75, %v2937, 0
    %2940 = vmatprep.subr.mxu0 0.0
    %2941 = vmatpush1.msra.mxu0 0.0
    %2942 = vmatprep.subr.mxu0 0.0
    %2943 = vmatpush1.msra.mxu0 0.0
    %2944 = vmatprep.subr.mxu0 0.0
    %2945 = vmatpush1.msra.mxu0 0.0
    %2946 = vmatprep.subr.mxu0 0.0
    %2947 = vmatpush1.msra.mxu0 0.0
    %2948 = vmatprep.subr.mxu0 0.0
    %2949 = vmatpush1.msra.mxu0 0.0
    %2950 = vmatprep.subr.mxu0 0.0
    %2951 = vmatpush1.msra.mxu0 0.0
    %2952 = vmatprep.subr.mxu0 0.0
    %2953 = vmatpush1.msra.mxu0 0.0
    %2954 = vmatprep.subr.mxu0 0.0
    %2955 = vmatpush1.msra.mxu0 0.0
    %2956 = vmatprep.subr.mxu0 0.0
    %2957 = vmatpush1.msra.mxu0 0.0
    %2958 = vmatprep.subr.mxu0 0.0
    %2959 = vmatpush1.msra.mxu0 0.0
    %2960 = vmatprep.subr.mxu0 0.0
    %2961 = vmatpush1.msra.mxu0 0.0
    %2962 = vmatprep.subr.mxu0 0.0
    %2963 = vmatpush1.msra.mxu0 0.0
    %2964 = vmatprep.subr.mxu0 0.0
    %2965 = vmatpush1.msra.mxu0 %v71
    %2966 = vmatprep.subr.mxu0 0.0
    %2967 = vmatpush1.msra.mxu0 %v70
    %2968 = vmatprep.subr.mxu0 0.0
    %2969 = vmatpush1.msra.mxu0 %v69
    %2970 = vmatprep.subr.mxu0 0.0
    %2971 = vmatpush1.msra.mxu0 %v68
    %2972 = vmatprep.subr.mxu0 0.0
    %2973 = vmatpush2.msra.mxu0 0.0
    %2974 = vmatprep.subr.mxu0 0.0
    %2975 = vmatpush2.msra.mxu0 0.0
    %2976 = vmatprep.subr.mxu0 0.0
    %2977 = vmatpush2.msra.mxu0 0.0
    %2978 = vmatprep.subr.mxu0 0.0
    %2979 = vmatpush2.msra.mxu0 0.0
    %2980 = vmatprep.subr.mxu0 0.0
    %2981 = vmatpush2.msra.mxu0 0.0
    %2982 = vmatprep.subr.mxu0 0.0
    %2983 = vmatpush2.msra.mxu0 0.0
    %2984 = vmatprep.subr.mxu0 0.0
    %2985 = vmatpush2.msra.mxu0 0.0
    %2986 = vmatprep.subr.mxu0 0.0
    %2987 = vmatpush2.msra.mxu0 0.0
    %2988 = vmatprep.subr.mxu0 0.0
    %2989 = vmatpush2.msra.mxu0 0.0
    %2990 = vmatprep.subr.mxu0 0.0
    %2991 = vmatpush2.msra.mxu0 0.0
    %2992 = vmatprep.subr.mxu0 0.0
    %2993 = vmatpush2.msra.mxu0 0.0
    %2994 = vmatprep.subr.mxu0 0.0
    %2995 = vmatpush2.msra.mxu0 0.0
    %2996 = vmatprep.subr.mxu0 0.0
    %2997 = vmatpush2.msra.mxu0 0.0
    %2998 = vmatprep.subr.mxu0 0.0
    %2999 = vmatpush2.msra.mxu0 0.0
    %3000 = vmatprep.subr.mxu0 0.0
    %3001 = vmatpush2.msra.mxu0 0.0
    %3002 = vmatprep.subr.mxu0 0.0
    %3003 = vmatpush2.msra.mxu0 0.0
    %3004 = vmatprep.mubr.f32.mxu0 0.0
    %3005 = vmatmul.mubr.f32.gmra.mxu0 %v2938
    %v3006 = vpop.f32.mrf.mxu0
    %v3007 = vadd.f32 0.0, %v3006
    %v3008 = vpop.f32.mrf.mxu0
    %3009 = vdwg.mxu0
    %v3010 = vsel %vm469, %v2929, -inf
    %3011 = vmax.xlane.f32.xlu0 %v3010
    %v3012 = vpop.xlane.xlu0 %3011
    %v3013 = vsel %vm469, %v3007, -inf
    %3014 = vmax.xlane.f32.xlu0 %v3013
    %v3015 = vpop.xlane.xlu0 %3014
    %v3016 = vsub.f32 %v2929, %v3012
    %v3017 = vsub.f32 %v3007, %v3015
    %v3018 = vmul.f32 %v3016, 1.442695
    %v3019 = vpow.pop %v3018
    %v3020 = vmul.f32 %v3017, 1.442695
    %v3021 = vpow.pop %v3020
    %v3023 = vsel %vm482, %v3019, 0
    %3025 = vmatprep.subr.mxu0 0.0
    %3026 = vmatpush1.msra.mxu0 0.0
    %3027 = vmatprep.subr.mxu0 0.0
    %3028 = vmatpush1.msra.mxu0 0.0
    %3029 = vmatprep.subr.mxu0 0.0
    %3030 = vmatpush1.msra.mxu0 0.0
    %3031 = vmatprep.subr.mxu0 0.0
    %3032 = vmatpush1.msra.mxu0 0.0
    %3033 = vmatprep.subr.mxu0 0.0
    %3034 = vmatpush1.msra.mxu0 0.0
    %3035 = vmatprep.subr.mxu0 0.0
    %3036 = vmatpush1.msra.mxu0 0.0
    %3037 = vmatprep.subr.mxu0 0.0
    %3038 = vmatpush1.msra.mxu0 0.0
    %3039 = vmatprep.subr.mxu0 0.0
    %3040 = vmatpush1.msra.mxu0 0.0
    %3041 = vmatprep.subr.mxu0 0.0
    %3042 = vmatpush1.msra.mxu0 0.0
    %3043 = vmatprep.subr.mxu0 0.0
    %3044 = vmatpush1.msra.mxu0 0.0
    %3045 = vmatprep.subr.mxu0 0.0
    %3046 = vmatpush1.msra.mxu0 0.0
    %3047 = vmatprep.subr.mxu0 0.0
    %3048 = vmatpush1.msra.mxu0 0.0
    %3049 = vmatprep.subr.mxu0 0.0
    %3050 = vmatpush1.msra.mxu0 0.0
    %3051 = vmatprep.subr.mxu0 0.0
    %3052 = vmatpush1.msra.mxu0 0.0
    %3053 = vmatprep.subr.mxu0 0.0
    %3054 = vmatpush1.msra.mxu0 0.0
    %3055 = vmatprep.subr.mxu0 0.0
    %3056 = vmatpush1.msra.mxu0 %v62
    %3057 = vmatprep.subr.mxu0 0.0
    %3058 = vmatpush2.msra.mxu0 0.0
    %3059 = vmatprep.subr.mxu0 0.0
    %3060 = vmatpush2.msra.mxu0 0.0
    %3061 = vmatprep.subr.mxu0 0.0
    %3062 = vmatpush2.msra.mxu0 0.0
    %3063 = vmatprep.subr.mxu0 0.0
    %3064 = vmatpush2.msra.mxu0 0.0
    %3065 = vmatprep.subr.mxu0 0.0
    %3066 = vmatpush2.msra.mxu0 0.0
    %3067 = vmatprep.subr.mxu0 0.0
    %3068 = vmatpush2.msra.mxu0 0.0
    %3069 = vmatprep.subr.mxu0 0.0
    %3070 = vmatpush2.msra.mxu0 0.0
    %3071 = vmatprep.subr.mxu0 0.0
    %3072 = vmatpush2.msra.mxu0 0.0
    %3073 = vmatprep.subr.mxu0 0.0
    %3074 = vmatpush2.msra.mxu0 0.0
    %3075 = vmatprep.subr.mxu0 0.0
    %3076 = vmatpush2.msra.mxu0 0.0
    %3077 = vmatprep.subr.mxu0 0.0
    %3078 = vmatpush2.msra.mxu0 0.0
    %3079 = vmatprep.subr.mxu0 0.0
    %3080 = vmatpush2.msra.mxu0 0.0
    %3081 = vmatprep.subr.mxu0 0.0
    %3082 = vmatpush2.msra.mxu0 0.0
    %3083 = vmatprep.subr.mxu0 0.0
    %3084 = vmatpush2.msra.mxu0 0.0
    %3085 = vmatprep.subr.mxu0 0.0
    %3086 = vmatpush2.msra.mxu0 0.0
    %3087 = vmatprep.subr.mxu0 0.0
    %3088 = vmatpush2.msra.mxu0 0.0
    %3089 = vmatprep.mubr.f32.mxu0 0.0
    %3090 = vmatmul.mubr.f32.gmra.mxu0 %v3023
    %v3091 = vpop.f32.mrf.mxu0
    %v3092 = vadd.f32 0.0, %v3091
    %v3093 = vpop.f32.mrf.mxu0
    %3094 = vdwg.mxu0
    %v3096 = vsel %vm482, %v3021, 0
    %3098 = vmatprep.subr.mxu0 0.0
    %3099 = vmatpush1.msra.mxu0 0.0
    %3100 = vmatprep.subr.mxu0 0.0
    %3101 = vmatpush1.msra.mxu0 0.0
    %3102 = vmatprep.subr.mxu0 0.0
    %3103 = vmatpush1.msra.mxu0 0.0
    %3104 = vmatprep.subr.mxu0 0.0
    %3105 = vmatpush1.msra.mxu0 0.0
    %3106 = vmatprep.subr.mxu0 0.0
    %3107 = vmatpush1.msra.mxu0 0.0
    %3108 = vmatprep.subr.mxu0 0.0
    %3109 = vmatpush1.msra.mxu0 0.0
    %3110 = vmatprep.subr.mxu0 0.0
    %3111 = vmatpush1.msra.mxu0 0.0
    %3112 = vmatprep.subr.mxu0 0.0
    %3113 = vmatpush1.msra.mxu0 0.0
    %3114 = vmatprep.subr.mxu0 0.0
    %3115 = vmatpush1.msra.mxu0 0.0
    %3116 = vmatprep.subr.mxu0 0.0
    %3117 = vmatpush1.msra.mxu0 0.0
    %3118 = vmatprep.subr.mxu0 0.0
    %3119 = vmatpush1.msra.mxu0 0.0
    %3120 = vmatprep.subr.mxu0 0.0
    %3121 = vmatpush1.msra.mxu0 0.0
    %3122 = vmatprep.subr.mxu0 0.0
    %3123 = vmatpush1.msra.mxu0 0.0
    %3124 = vmatprep.subr.mxu0 0.0
    %3125 = vmatpush1.msra.mxu0 0.0
    %3126 = vmatprep.subr.mxu0 0.0
    %3127 = vmatpush1.msra.mxu0 0.0
    %3128 = vmatprep.subr.mxu0 0.0
    %3129 = vmatpush1.msra.mxu0 %v63
    %3130 = vmatprep.subr.mxu0 0.0
    %3131 = vmatpush2.msra.mxu0 0.0
    %3132 = vmatprep.subr.mxu0 0.0
    %3133 = vmatpush2.msra.mxu0 0.0
    %3134 = vmatprep.subr.mxu0 0.0
    %3135 = vmatpush2.msra.mxu0 0.0
    %3136 = vmatprep.subr.mxu0 0.0
    %3137 = vmatpush2.msra.mxu0 0.0
    %3138 = vmatprep.subr.mxu0 0.0
    %3139 = vmatpush2.msra.mxu0 0.0
    %3140 = vmatprep.subr.mxu0 0.0
    %3141 = vmatpush2.msra.mxu0 0.0
    %3142 = vmatprep.subr.mxu0 0.0
    %3143 = vmatpush2.msra.mxu0 0.0
    %3144 = vmatprep.subr.mxu0 0.0
    %3145 = vmatpush2.msra.mxu0 0.0
    %3146 = vmatprep.subr.mxu0 0.0
    %3147 = vmatpush2.msra.mxu0 0.0
    %3148 = vmatprep.subr.mxu0 0.0
    %3149 = vmatpush2.msra.mxu0 0.0
    %3150 = vmatprep.subr.mxu0 0.0
    %3151 = vmatpush2.msra.mxu0 0.0
    %3152 = vmatprep.subr.mxu0 0.0
    %3153 = vmatpush2.msra.mxu0 0.0
    %3154 = vmatprep.subr.mxu0 0.0
    %3155 = vmatpush2.msra.mxu0 0.0
    %3156 = vmatprep.subr.mxu0 0.0
    %3157 = vmatpush2.msra.mxu0 0.0
    %3158 = vmatprep.subr.mxu0 0.0
    %3159 = vmatpush2.msra.mxu0 0.0
    %3160 = vmatprep.subr.mxu0 0.0
    %3161 = vmatpush2.msra.mxu0 0.0
    %3162 = vmatprep.mubr.f32.mxu0 0.0
    %3163 = vmatmul.mubr.f32.gmra.mxu0 %v3096
    %v3164 = vpop.f32.mrf.mxu0
    %v3165 = vadd.f32 0.0, %v3164
    %v3166 = vpop.f32.mrf.mxu0
    %3167 = vdwg.mxu0
    %v3168 = vsel %vm469, %v3019, 0.0
    %3169 = vadd.xlane.f32.xlu0 %v3168
    %v3170 = vpop.xlane.xlu0 %3169
    %v3171 = vsel %vm469, %v3021, 0.0
    %3172 = vadd.xlane.f32.xlu0 %v3171
    %v3173 = vpop.xlane.xlu0 %3172
    %v3174 = vrcp.pop %v3170
    %v3175 = vrcp.pop %v3173
    %v3176 = vmul.f32 %v3092, %v3174
    %v3177 = vmul.f32 %v3165, %v3175
    %v3180 = vrot.slane %v3177, 7
    %v3181 = vsel %vm642, %v3180, %v3176
    %3183 = vrot.lane.b32.xlu0 %v2830, 64
    %v3184 = vpop.permute.xlu0 %3183
    %v3186 = vsel %vm75, %v3181, %v3184
    %v3188 = vsel %vm192, %v3186, 0
    %3190 = vmatprep.subr.mxu0 0.0
    %3191 = vmatpush1.msra.mxu0 0.0
    %3192 = vmatprep.subr.mxu0 0.0
    %3193 = vmatpush1.msra.mxu0 0.0
    %3194 = vmatprep.subr.mxu0 0.0
    %3195 = vmatpush1.msra.mxu0 0.0
    %3196 = vmatprep.subr.mxu0 0.0
    %3197 = vmatpush1.msra.mxu0 0.0
    %3198 = vmatprep.subr.mxu0 0.0
    %3199 = vmatpush1.msra.mxu0 0.0
    %3200 = vmatprep.subr.mxu0 0.0
    %3201 = vmatpush1.msra.mxu0 0.0
    %3202 = vmatprep.subr.mxu0 0.0
    %3203 = vmatpush1.msra.mxu0 0.0
    %3204 = vmatprep.subr.mxu0 0.0
    %3205 = vmatpush1.msra.mxu0 0.0
    %3206 = vmatprep.subr.mxu0 0.0
    %3207 = vmatpush1.msra.mxu0 %v60
    %3208 = vmatprep.subr.mxu0 0.0
    %3209 = vmatpush1.msra.mxu0 %v59
    %3210 = vmatprep.subr.mxu0 0.0
    %3211 = vmatpush1.msra.mxu0 %v58
    %3212 = vmatprep.subr.mxu0 0.0
    %3213 = vmatpush1.msra.mxu0 %v57
    %3214 = vmatprep.subr.mxu0 0.0
    %3215 = vmatpush1.msra.mxu0 %v56
    %3216 = vmatprep.subr.mxu0 0.0
    %3217 = vmatpush1.msra.mxu0 %v55
    %3218 = vmatprep.subr.mxu0 0.0
    %3219 = vmatpush1.msra.mxu0 %v54
    %3220 = vmatprep.subr.mxu0 0.0
    %3221 = vmatpush1.msra.mxu0 %v53
    %3222 = vmatprep.subr.mxu0 0.0
    %3223 = vmatpush2.msra.mxu0 0.0
    %3224 = vmatprep.subr.mxu0 0.0
    %3225 = vmatpush2.msra.mxu0 0.0
    %3226 = vmatprep.subr.mxu0 0.0
    %3227 = vmatpush2.msra.mxu0 0.0
    %3228 = vmatprep.subr.mxu0 0.0
    %3229 = vmatpush2.msra.mxu0 0.0
    %3230 = vmatprep.subr.mxu0 0.0
    %3231 = vmatpush2.msra.mxu0 0.0
    %3232 = vmatprep.subr.mxu0 0.0
    %3233 = vmatpush2.msra.mxu0 0.0
    %3234 = vmatprep.subr.mxu0 0.0
    %3235 = vmatpush2.msra.mxu0 0.0
    %3236 = vmatprep.subr.mxu0 0.0
    %3237 = vmatpush2.msra.mxu0 0.0
    %3238 = vmatprep.subr.mxu0 0.0
    %3239 = vmatpush2.msra.mxu0 0.0
    %3240 = vmatprep.subr.mxu0 0.0
    %3241 = vmatpush2.msra.mxu0 0.0
    %3242 = vmatprep.subr.mxu0 0.0
    %3243 = vmatpush2.msra.mxu0 0.0
    %3244 = vmatprep.subr.mxu0 0.0
    %3245 = vmatpush2.msra.mxu0 0.0
    %3246 = vmatprep.subr.mxu0 0.0
    %3247 = vmatpush2.msra.mxu0 0.0
    %3248 = vmatprep.subr.mxu0 0.0
    %3249 = vmatpush2.msra.mxu0 0.0
    %3250 = vmatprep.subr.mxu0 0.0
    %3251 = vmatpush2.msra.mxu0 0.0
    %3252 = vmatprep.subr.mxu0 0.0
    %3253 = vmatpush2.msra.mxu0 0.0
    %3254 = vmatprep.mubr.f32.mxu0 0.0
    %3255 = vmatmul.mubr.f32.gmra.mxu0 %v3188
    %v3256 = vpop.f32.mrf.mxu0
    %v3257 = vadd.f32 %v653, %v3256
    %v3258 = vpop.f32.mrf.mxu0
    %3259 = vdwg.mxu0
    %v3260 = vtanh.pop %v3257
    %s3261 = scalar_lea.vmem [#allocation2], 8
    %3262 = vst.msk [vmem:[%s3261] sm:$0x3] %vm729, %v3260
    %s3263 = scalar_lea.vmem %s0, 10
    %v3264 = vld [vmem:[%s3263] sm:$0x3]
    %v3265 = vsel %vm75, %v2731, 0
    %3267 = vmatprep.subr.mxu0 0.0
    %3268 = vmatpush1.msra.mxu0 0.0
    %3269 = vmatprep.subr.mxu0 0.0
    %3270 = vmatpush1.msra.mxu0 0.0
    %3271 = vmatprep.subr.mxu0 0.0
    %3272 = vmatpush1.msra.mxu0 0.0
    %3273 = vmatprep.subr.mxu0 0.0
    %3274 = vmatpush1.msra.mxu0 0.0
    %3275 = vmatprep.subr.mxu0 0.0
    %3276 = vmatpush1.msra.mxu0 0.0
    %3277 = vmatprep.subr.mxu0 0.0
    %3278 = vmatpush1.msra.mxu0 0.0
    %3279 = vmatprep.subr.mxu0 0.0
    %3280 = vmatpush1.msra.mxu0 0.0
    %3281 = vmatprep.subr.mxu0 0.0
    %3282 = vmatpush1.msra.mxu0 0.0
    %3283 = vmatprep.subr.mxu0 0.0
    %3284 = vmatpush1.msra.mxu0 0.0
    %3285 = vmatprep.subr.mxu0 0.0
    %3286 = vmatpush1.msra.mxu0 0.0
    %3287 = vmatprep.subr.mxu0 0.0
    %3288 = vmatpush1.msra.mxu0 0.0
    %3289 = vmatprep.subr.mxu0 0.0
    %3290 = vmatpush1.msra.mxu0 0.0
    %3291 = vmatprep.subr.mxu0 0.0
    %3292 = vmatpush1.msra.mxu0 %v43
    %3293 = vmatprep.subr.mxu0 0.0
    %3294 = vmatpush1.msra.mxu0 %v42
    %3295 = vmatprep.subr.mxu0 0.0
    %3296 = vmatpush1.msra.mxu0 %v41
    %3297 = vmatprep.subr.mxu0 0.0
    %3298 = vmatpush1.msra.mxu0 %v40
    %3299 = vmatprep.subr.mxu0 0.0
    %3300 = vmatpush2.msra.mxu0 0.0
    %3301 = vmatprep.subr.mxu0 0.0
    %3302 = vmatpush2.msra.mxu0 0.0
    %3303 = vmatprep.subr.mxu0 0.0
    %3304 = vmatpush2.msra.mxu0 0.0
    %3305 = vmatprep.subr.mxu0 0.0
    %3306 = vmatpush2.msra.mxu0 0.0
    %3307 = vmatprep.subr.mxu0 0.0
    %3308 = vmatpush2.msra.mxu0 0.0
    %3309 = vmatprep.subr.mxu0 0.0
    %3310 = vmatpush2.msra.mxu0 0.0
    %3311 = vmatprep.subr.mxu0 0.0
    %3312 = vmatpush2.msra.mxu0 0.0
    %3313 = vmatprep.subr.mxu0 0.0
    %3314 = vmatpush2.msra.mxu0 0.0
    %3315 = vmatprep.subr.mxu0 0.0
    %3316 = vmatpush2.msra.mxu0 0.0
    %3317 = vmatprep.subr.mxu0 0.0
    %3318 = vmatpush2.msra.mxu0 0.0
    %3319 = vmatprep.subr.mxu0 0.0
    %3320 = vmatpush2.msra.mxu0 0.0
    %3321 = vmatprep.subr.mxu0 0.0
    %3322 = vmatpush2.msra.mxu0 0.0
    %3323 = vmatprep.subr.mxu0 0.0
    %3324 = vmatpush2.msra.mxu0 0.0
    %3325 = vmatprep.subr.mxu0 0.0
    %3326 = vmatpush2.msra.mxu0 0.0
    %3327 = vmatprep.subr.mxu0 0.0
    %3328 = vmatpush2.msra.mxu0 0.0
    %3329 = vmatprep.subr.mxu0 0.0
    %3330 = vmatpush2.msra.mxu0 0.0
    %3331 = vmatprep.mubr.f32.mxu0 0.0
    %3332 = vmatmul.mubr.f32.gmra.mxu0 %v3265
    %v3333 = vpop.f32.mrf.mxu0
    %v3334 = vadd.f32 0.0, %v3333
    %v3335 = vpop.f32.mrf.mxu0
    %3336 = vdwg.mxu0
    %v3337 = vadd.f32 %v3264, %v3334
    %v3338 = vxor.u32 %v3337, 2147483648
    %v3339 = vmul.f32 %v3338, 1.442695
    %v3340 = vpow.pop %v3339
    %v3341 = vadd.f32 %v3340, 1.0
    %v3342 = vrcp.pop %v3341
    %v3343 = vmul.f32 1.0, %v3342
    %v3344 = vtanh.pop %v3337
    %v3345 = vmul.f32 %v3343, %v2722
    %3347 = vrot.lane.b32.xlu0 %v3344, 64
    %v3348 = vpop.permute.xlu0 %3347
    %v3350 = vmul.f32 %v3343, %v3348
    %3352 = vrot.lane.b32.xlu0 %v3350, 32
    %v3353 = vpop.permute.xlu0 %3352
    %v3355 = vadd.f32 %v3345, %v3353
    %v3356 = vtanh.pop %v3355
    %3358 = vrot.lane.b32.xlu0 %v3356, 64
    %v3359 = vpop.permute.xlu0 %3358
    %v3361 = vmul.f32 %v3343, %v3359
    %3363 = vrot.lane.b32.xlu0 %v3361, 32
    %v3364 = vpop.permute.xlu0 %3363
    %v3366 = vsel %vm75, %v3364, %v3184
    %v3368 = vsel %vm192, %v3366, 0
    %3370 = vmatprep.subr.mxu0 0.0
    %3371 = vmatpush1.msra.mxu0 0.0
    %3372 = vmatprep.subr.mxu0 0.0
    %3373 = vmatpush1.msra.mxu0 0.0
    %3374 = vmatprep.subr.mxu0 0.0
    %3375 = vmatpush1.msra.mxu0 0.0
    %3376 = vmatprep.subr.mxu0 0.0
    %3377 = vmatpush1.msra.mxu0 0.0
    %3378 = vmatprep.subr.mxu0 0.0
    %3379 = vmatpush1.msra.mxu0 0.0
    %3380 = vmatprep.subr.mxu0 0.0
    %3381 = vmatpush1.msra.mxu0 0.0
    %3382 = vmatprep.subr.mxu0 0.0
    %3383 = vmatpush1.msra.mxu0 0.0
    %3384 = vmatprep.subr.mxu0 0.0
    %3385 = vmatpush1.msra.mxu0 0.0
    %3386 = vmatprep.subr.mxu0 0.0
    %3387 = vmatpush1.msra.mxu0 %v51
    %3388 = vmatprep.subr.mxu0 0.0
    %3389 = vmatpush1.msra.mxu0 %v50
    %3390 = vmatprep.subr.mxu0 0.0
    %3391 = vmatpush1.msra.mxu0 %v49
    %3392 = vmatprep.subr.mxu0 0.0
    %3393 = vmatpush1.msra.mxu0 %v48
    %3394 = vmatprep.subr.mxu0 0.0
    %3395 = vmatpush1.msra.mxu0 %v47
    %3396 = vmatprep.subr.mxu0 0.0
    %3397 = vmatpush1.msra.mxu0 %v46
    %3398 = vmatprep.subr.mxu0 0.0
    %3399 = vmatpush1.msra.mxu0 %v45
    %3400 = vmatprep.subr.mxu0 0.0
    %3401 = vmatpush1.msra.mxu0 %v44
    %3402 = vmatprep.subr.mxu0 0.0
    %3403 = vmatpush2.msra.mxu0 0.0
    %3404 = vmatprep.subr.mxu0 0.0
    %3405 = vmatpush2.msra.mxu0 0.0
    %3406 = vmatprep.subr.mxu0 0.0
    %3407 = vmatpush2.msra.mxu0 0.0
    %3408 = vmatprep.subr.mxu0 0.0
    %3409 = vmatpush2.msra.mxu0 0.0
    %3410 = vmatprep.subr.mxu0 0.0
    %3411 = vmatpush2.msra.mxu0 0.0
    %3412 = vmatprep.subr.mxu0 0.0
    %3413 = vmatpush2.msra.mxu0 0.0
    %3414 = vmatprep.subr.mxu0 0.0
    %3415 = vmatpush2.msra.mxu0 0.0
    %3416 = vmatprep.subr.mxu0 0.0
    %3417 = vmatpush2.msra.mxu0 0.0
    %3418 = vmatprep.subr.mxu0 0.0
    %3419 = vmatpush2.msra.mxu0 0.0
    %3420 = vmatprep.subr.mxu0 0.0
    %3421 = vmatpush2.msra.mxu0 0.0
    %3422 = vmatprep.subr.mxu0 0.0
    %3423 = vmatpush2.msra.mxu0 0.0
    %3424 = vmatprep.subr.mxu0 0.0
    %3425 = vmatpush2.msra.mxu0 0.0
    %3426 = vmatprep.subr.mxu0 0.0
    %3427 = vmatpush2.msra.mxu0 0.0
    %3428 = vmatprep.subr.mxu0 0.0
    %3429 = vmatpush2.msra.mxu0 0.0
    %3430 = vmatprep.subr.mxu0 0.0
    %3431 = vmatpush2.msra.mxu0 0.0
    %3432 = vmatprep.subr.mxu0 0.0
    %3433 = vmatpush2.msra.mxu0 0.0
    %3434 = vmatprep.mubr.f32.mxu0 0.0
    %3435 = vmatmul.mubr.f32.gmra.mxu0 %v3368
    %v3436 = vpop.f32.mrf.mxu0
    %v3437 = vadd.f32 %v190, %v3436
    %v3438 = vpop.f32.mrf.mxu0
    %3439 = vdwg.mxu0
    %v3440 = vxor.u32 %v3437, 2147483648
    %v3441 = vmul.f32 %v3440, 1.442695
    %v3442 = vpow.pop %v3441
    %v3443 = vadd.f32 %v3442, 1.0
    %v3444 = vrcp.pop %v3443
    %v3445 = vmul.f32 1.0, %v3444
    %v3446 = vtanh.pop %v3437
    %v3447 = vmul.f32 %v3445, %v2824
    %3449 = vrot.lane.b32.xlu0 %v3446, 64
    %v3450 = vpop.permute.xlu0 %3449
    %v3452 = vmul.f32 %v3445, %v3450
    %3454 = vrot.lane.b32.xlu0 %v3452, 32
    %v3455 = vpop.permute.xlu0 %3454
    %v3457 = vadd.f32 %v3447, %v3455
    %v3458 = vtanh.pop %v3457
    %3460 = vrot.lane.b32.xlu0 %v3458, 64
    %v3461 = vpop.permute.xlu0 %3460
    %v3463 = vmul.f32 %v3445, %v3461
    %v3466 = vunpack.c.l.s4 1966171168
    %v3467 = vunpack.c.0.s8 %v3466
    %v3468 = vlaneseq
    %v3469 = vshrl.u32 %v3468, 7
    %v3470 = vsub.s32 %v3467, %v3469
    %v3471 = vrot.slane %v3463, %v3470
    %v3472 = vcombine.high %v3471, %v3471
    %v3474 = vunpack.c.l.s4 1966171168
    %v3475 = vunpack.c.0.s8 %v3474
    %v3476 = vlaneseq
    %v3477 = vshrl.u32 %v3476, 7
    %v3478 = vsub.s32 %v3475, %v3477
    %v3479 = vrot.slane %v3471, %v3478
    %v3481 = vunpack.c.l.s4 1966171168
    %v3482 = vunpack.c.0.s8 %v3481
    %v3483 = vlaneseq
    %v3484 = vshrl.u32 %v3483, 7
    %v3485 = vsub.s32 %v3482, %v3484
    %v3486 = vrot.slane %v3472, %v3485
    %v3487 = vlaneseq
    %v3488 = vshrl.u32 %v3487, 7
    %v3489 = vsub.s32 0, %v3488
    %v3490 = vrot.slane %v3479, %v3489
    %3491 = vrot.lane.b32.xlu0 %v3490, 32
    %v3492 = vpop.permute.xlu0 %3491
    %v3493 = vsel %vm75, %v3492, 0
    %3495 = vmatprep.subr.mxu0 0.0
    %3496 = vmatpush1.msra.mxu0 0.0
    %3497 = vmatprep.subr.mxu0 0.0
    %3498 = vmatpush1.msra.mxu0 0.0
    %3499 = vmatprep.subr.mxu0 0.0
    %3500 = vmatpush1.msra.mxu0 0.0
    %3501 = vmatprep.subr.mxu0 0.0
    %3502 = vmatpush1.msra.mxu0 0.0
    %3503 = vmatprep.subr.mxu0 0.0
    %3504 = vmatpush1.msra.mxu0 0.0
    %3505 = vmatprep.subr.mxu0 0.0
    %3506 = vmatpush1.msra.mxu0 0.0
    %3507 = vmatprep.subr.mxu0 0.0
    %3508 = vmatpush1.msra.mxu0 0.0
    %3509 = vmatprep.subr.mxu0 0.0
    %3510 = vmatpush1.msra.mxu0 0.0
    %3511 = vmatprep.subr.mxu0 0.0
    %3512 = vmatpush1.msra.mxu0 0.0
    %3513 = vmatprep.subr.mxu0 0.0
    %3514 = vmatpush1.msra.mxu0 0.0
    %3515 = vmatprep.subr.mxu0 0.0
    %3516 = vmatpush1.msra.mxu0 0.0
    %3517 = vmatprep.subr.mxu0 0.0
    %3518 = vmatpush1.msra.mxu0 0.0
    %3519 = vmatprep.subr.mxu0 0.0
    %3520 = vmatpush1.msra.mxu0 %v67
    %3521 = vmatprep.subr.mxu0 0.0
    %3522 = vmatpush1.msra.mxu0 %v66
    %3523 = vmatprep.subr.mxu0 0.0
    %3524 = vmatpush1.msra.mxu0 %v65
    %3525 = vmatprep.subr.mxu0 0.0
    %3526 = vmatpush1.msra.mxu0 %v64
    %3527 = vmatprep.subr.mxu0 0.0
    %3528 = vmatpush2.msra.mxu0 0.0
    %3529 = vmatprep.subr.mxu0 0.0
    %3530 = vmatpush2.msra.mxu0 0.0
    %3531 = vmatprep.subr.mxu0 0.0
    %3532 = vmatpush2.msra.mxu0 0.0
    %3533 = vmatprep.subr.mxu0 0.0
    %3534 = vmatpush2.msra.mxu0 0.0
    %3535 = vmatprep.subr.mxu0 0.0
    %3536 = vmatpush2.msra.mxu0 0.0
    %3537 = vmatprep.subr.mxu0 0.0
    %3538 = vmatpush2.msra.mxu0 0.0
    %3539 = vmatprep.subr.mxu0 0.0
    %3540 = vmatpush2.msra.mxu0 0.0
    %3541 = vmatprep.subr.mxu0 0.0
    %3542 = vmatpush2.msra.mxu0 0.0
    %3543 = vmatprep.subr.mxu0 0.0
    %3544 = vmatpush2.msra.mxu0 0.0
    %3545 = vmatprep.subr.mxu0 0.0
    %3546 = vmatpush2.msra.mxu0 0.0
    %3547 = vmatprep.subr.mxu0 0.0
    %3548 = vmatpush2.msra.mxu0 0.0
    %3549 = vmatprep.subr.mxu0 0.0
    %3550 = vmatpush2.msra.mxu0 0.0
    %3551 = vmatprep.subr.mxu0 0.0
    %3552 = vmatpush2.msra.mxu0 0.0
    %3553 = vmatprep.subr.mxu0 0.0
    %3554 = vmatpush2.msra.mxu0 0.0
    %3555 = vmatprep.subr.mxu0 0.0
    %3556 = vmatpush2.msra.mxu0 0.0
    %3557 = vmatprep.subr.mxu0 0.0
    %3558 = vmatpush2.msra.mxu0 0.0
    %3559 = vmatprep.mubr.f32.mxu0 0.0
    %3560 = vmatmul.mubr.f32.gmra.mxu0 %v3493
    %v3561 = vpop.f32.mrf.mxu0
    %v3562 = vadd.f32 0.0, %v3561
    %v3563 = vpop.f32.mrf.mxu0
    %3564 = vdwg.mxu0
    %v3565 = vlaneseq
    %v3566 = vshrl.u32 %v3565, 7
    %v3567 = vsub.s32 0, %v3566
    %v3568 = vrot.slane %v3486, %v3567
    %3569 = vrot.lane.b32.xlu0 %v3568, 32
    %v3570 = vpop.permute.xlu0 %3569
    %v3571 = vsel %vm75, %v3570, 0
    %3573 = vmatprep.subr.mxu0 0.0
    %3574 = vmatpush1.msra.mxu0 0.0
    %3575 = vmatprep.subr.mxu0 0.0
    %3576 = vmatpush1.msra.mxu0 0.0
    %3577 = vmatprep.subr.mxu0 0.0
    %3578 = vmatpush1.msra.mxu0 0.0
    %3579 = vmatprep.subr.mxu0 0.0
    %3580 = vmatpush1.msra.mxu0 0.0
    %3581 = vmatprep.subr.mxu0 0.0
    %3582 = vmatpush1.msra.mxu0 0.0
    %3583 = vmatprep.subr.mxu0 0.0
    %3584 = vmatpush1.msra.mxu0 0.0
    %3585 = vmatprep.subr.mxu0 0.0
    %3586 = vmatpush1.msra.mxu0 0.0
    %3587 = vmatprep.subr.mxu0 0.0
    %3588 = vmatpush1.msra.mxu0 0.0
    %3589 = vmatprep.subr.mxu0 0.0
    %3590 = vmatpush1.msra.mxu0 0.0
    %3591 = vmatprep.subr.mxu0 0.0
    %3592 = vmatpush1.msra.mxu0 0.0
    %3593 = vmatprep.subr.mxu0 0.0
    %3594 = vmatpush1.msra.mxu0 0.0
    %3595 = vmatprep.subr.mxu0 0.0
    %3596 = vmatpush1.msra.mxu0 0.0
    %3597 = vmatprep.subr.mxu0 0.0
    %3598 = vmatpush1.msra.mxu0 %v71
    %3599 = vmatprep.subr.mxu0 0.0
    %3600 = vmatpush1.msra.mxu0 %v70
    %3601 = vmatprep.subr.mxu0 0.0
    %3602 = vmatpush1.msra.mxu0 %v69
    %3603 = vmatprep.subr.mxu0 0.0
    %3604 = vmatpush1.msra.mxu0 %v68
    %3605 = vmatprep.subr.mxu0 0.0
    %3606 = vmatpush2.msra.mxu0 0.0
    %3607 = vmatprep.subr.mxu0 0.0
    %3608 = vmatpush2.msra.mxu0 0.0
    %3609 = vmatprep.subr.mxu0 0.0
    %3610 = vmatpush2.msra.mxu0 0.0
    %3611 = vmatprep.subr.mxu0 0.0
    %3612 = vmatpush2.msra.mxu0 0.0
    %3613 = vmatprep.subr.mxu0 0.0
    %3614 = vmatpush2.msra.mxu0 0.0
    %3615 = vmatprep.subr.mxu0 0.0
    %3616 = vmatpush2.msra.mxu0 0.0
    %3617 = vmatprep.subr.mxu0 0.0
    %3618 = vmatpush2.msra.mxu0 0.0
    %3619 = vmatprep.subr.mxu0 0.0
    %3620 = vmatpush2.msra.mxu0 0.0
    %3621 = vmatprep.subr.mxu0 0.0
    %3622 = vmatpush2.msra.mxu0 0.0
    %3623 = vmatprep.subr.mxu0 0.0
    %3624 = vmatpush2.msra.mxu0 0.0
    %3625 = vmatprep.subr.mxu0 0.0
    %3626 = vmatpush2.msra.mxu0 0.0
    %3627 = vmatprep.subr.mxu0 0.0
    %3628 = vmatpush2.msra.mxu0 0.0
    %3629 = vmatprep.subr.mxu0 0.0
    %3630 = vmatpush2.msra.mxu0 0.0
    %3631 = vmatprep.subr.mxu0 0.0
    %3632 = vmatpush2.msra.mxu0 0.0
    %3633 = vmatprep.subr.mxu0 0.0
    %3634 = vmatpush2.msra.mxu0 0.0
    %3635 = vmatprep.subr.mxu0 0.0
    %3636 = vmatpush2.msra.mxu0 0.0
    %3637 = vmatprep.mubr.f32.mxu0 0.0
    %3638 = vmatmul.mubr.f32.gmra.mxu0 %v3571
    %v3639 = vpop.f32.mrf.mxu0
    %v3640 = vadd.f32 0.0, %v3639
    %v3641 = vpop.f32.mrf.mxu0
    %3642 = vdwg.mxu0
    %v3643 = vsel %vm469, %v3562, -inf
    %3644 = vmax.xlane.f32.xlu0 %v3643
    %v3645 = vpop.xlane.xlu0 %3644
    %v3646 = vsel %vm469, %v3640, -inf
    %3647 = vmax.xlane.f32.xlu0 %v3646
    %v3648 = vpop.xlane.xlu0 %3647
    %v3649 = vsub.f32 %v3562, %v3645
    %v3650 = vsub.f32 %v3640, %v3648
    %v3651 = vmul.f32 %v3649, 1.442695
    %v3652 = vpow.pop %v3651
    %v3653 = vmul.f32 %v3650, 1.442695
    %v3654 = vpow.pop %v3653
    %v3656 = vsel %vm482, %v3652, 0
    %3658 = vmatprep.subr.mxu0 0.0
    %3659 = vmatpush1.msra.mxu0 0.0
    %3660 = vmatprep.subr.mxu0 0.0
    %3661 = vmatpush1.msra.mxu0 0.0
    %3662 = vmatprep.subr.mxu0 0.0
    %3663 = vmatpush1.msra.mxu0 0.0
    %3664 = vmatprep.subr.mxu0 0.0
    %3665 = vmatpush1.msra.mxu0 0.0
    %3666 = vmatprep.subr.mxu0 0.0
    %3667 = vmatpush1.msra.mxu0 0.0
    %3668 = vmatprep.subr.mxu0 0.0
    %3669 = vmatpush1.msra.mxu0 0.0
    %3670 = vmatprep.subr.mxu0 0.0
    %3671 = vmatpush1.msra.mxu0 0.0
    %3672 = vmatprep.subr.mxu0 0.0
    %3673 = vmatpush1.msra.mxu0 0.0
    %3674 = vmatprep.subr.mxu0 0.0
    %3675 = vmatpush1.msra.mxu0 0.0
    %3676 = vmatprep.subr.mxu0 0.0
    %3677 = vmatpush1.msra.mxu0 0.0
    %3678 = vmatprep.subr.mxu0 0.0
    %3679 = vmatpush1.msra.mxu0 0.0
    %3680 = vmatprep.subr.mxu0 0.0
    %3681 = vmatpush1.msra.mxu0 0.0
    %3682 = vmatprep.subr.mxu0 0.0
    %3683 = vmatpush1.msra.mxu0 0.0
    %3684 = vmatprep.subr.mxu0 0.0
    %3685 = vmatpush1.msra.mxu0 0.0
    %3686 = vmatprep.subr.mxu0 0.0
    %3687 = vmatpush1.msra.mxu0 0.0
    %3688 = vmatprep.subr.mxu0 0.0
    %3689 = vmatpush1.msra.mxu0 %v62
    %3690 = vmatprep.subr.mxu0 0.0
    %3691 = vmatpush2.msra.mxu0 0.0
    %3692 = vmatprep.subr.mxu0 0.0
    %3693 = vmatpush2.msra.mxu0 0.0
    %3694 = vmatprep.subr.mxu0 0.0
    %3695 = vmatpush2.msra.mxu0 0.0
    %3696 = vmatprep.subr.mxu0 0.0
    %3697 = vmatpush2.msra.mxu0 0.0
    %3698 = vmatprep.subr.mxu0 0.0
    %3699 = vmatpush2.msra.mxu0 0.0
    %3700 = vmatprep.subr.mxu0 0.0
    %3701 = vmatpush2.msra.mxu0 0.0
    %3702 = vmatprep.subr.mxu0 0.0
    %3703 = vmatpush2.msra.mxu0 0.0
    %3704 = vmatprep.subr.mxu0 0.0
    %3705 = vmatpush2.msra.mxu0 0.0
    %3706 = vmatprep.subr.mxu0 0.0
    %3707 = vmatpush2.msra.mxu0 0.0
    %3708 = vmatprep.subr.mxu0 0.0
    %3709 = vmatpush2.msra.mxu0 0.0
    %3710 = vmatprep.subr.mxu0 0.0
    %3711 = vmatpush2.msra.mxu0 0.0
    %3712 = vmatprep.subr.mxu0 0.0
    %3713 = vmatpush2.msra.mxu0 0.0
    %3714 = vmatprep.subr.mxu0 0.0
    %3715 = vmatpush2.msra.mxu0 0.0
    %3716 = vmatprep.subr.mxu0 0.0
    %3717 = vmatpush2.msra.mxu0 0.0
    %3718 = vmatprep.subr.mxu0 0.0
    %3719 = vmatpush2.msra.mxu0 0.0
    %3720 = vmatprep.subr.mxu0 0.0
    %3721 = vmatpush2.msra.mxu0 0.0
    %3722 = vmatprep.mubr.f32.mxu0 0.0
    %3723 = vmatmul.mubr.f32.gmra.mxu0 %v3656
    %v3724 = vpop.f32.mrf.mxu0
    %v3725 = vadd.f32 0.0, %v3724
    %v3726 = vpop.f32.mrf.mxu0
    %3727 = vdwg.mxu0
    %v3729 = vsel %vm482, %v3654, 0
    %3731 = vmatprep.subr.mxu0 0.0
    %3732 = vmatpush1.msra.mxu0 0.0
    %3733 = vmatprep.subr.mxu0 0.0
    %3734 = vmatpush1.msra.mxu0 0.0
    %3735 = vmatprep.subr.mxu0 0.0
    %3736 = vmatpush1.msra.mxu0 0.0
    %3737 = vmatprep.subr.mxu0 0.0
    %3738 = vmatpush1.msra.mxu0 0.0
    %3739 = vmatprep.subr.mxu0 0.0
    %3740 = vmatpush1.msra.mxu0 0.0
    %3741 = vmatprep.subr.mxu0 0.0
    %3742 = vmatpush1.msra.mxu0 0.0
    %3743 = vmatprep.subr.mxu0 0.0
    %3744 = vmatpush1.msra.mxu0 0.0
    %3745 = vmatprep.subr.mxu0 0.0
    %3746 = vmatpush1.msra.mxu0 0.0
    %3747 = vmatprep.subr.mxu0 0.0
    %3748 = vmatpush1.msra.mxu0 0.0
    %3749 = vmatprep.subr.mxu0 0.0
    %3750 = vmatpush1.msra.mxu0 0.0
    %3751 = vmatprep.subr.mxu0 0.0
    %3752 = vmatpush1.msra.mxu0 0.0
    %3753 = vmatprep.subr.mxu0 0.0
    %3754 = vmatpush1.msra.mxu0 0.0
    %3755 = vmatprep.subr.mxu0 0.0
    %3756 = vmatpush1.msra.mxu0 0.0
    %3757 = vmatprep.subr.mxu0 0.0
    %3758 = vmatpush1.msra.mxu0 0.0
    %3759 = vmatprep.subr.mxu0 0.0
    %3760 = vmatpush1.msra.mxu0 0.0
    %3761 = vmatprep.subr.mxu0 0.0
    %3762 = vmatpush1.msra.mxu0 %v63
    %3763 = vmatprep.subr.mxu0 0.0
    %3764 = vmatpush2.msra.mxu0 0.0
    %3765 = vmatprep.subr.mxu0 0.0
    %3766 = vmatpush2.msra.mxu0 0.0
    %3767 = vmatprep.subr.mxu0 0.0
    %3768 = vmatpush2.msra.mxu0 0.0
    %3769 = vmatprep.subr.mxu0 0.0
    %3770 = vmatpush2.msra.mxu0 0.0
    %3771 = vmatprep.subr.mxu0 0.0
    %3772 = vmatpush2.msra.mxu0 0.0
    %3773 = vmatprep.subr.mxu0 0.0
    %3774 = vmatpush2.msra.mxu0 0.0
    %3775 = vmatprep.subr.mxu0 0.0
    %3776 = vmatpush2.msra.mxu0 0.0
    %3777 = vmatprep.subr.mxu0 0.0
    %3778 = vmatpush2.msra.mxu0 0.0
    %3779 = vmatprep.subr.mxu0 0.0
    %3780 = vmatpush2.msra.mxu0 0.0
    %3781 = vmatprep.subr.mxu0 0.0
    %3782 = vmatpush2.msra.mxu0 0.0
    %3783 = vmatprep.subr.mxu0 0.0
    %3784 = vmatpush2.msra.mxu0 0.0
    %3785 = vmatprep.subr.mxu0 0.0
    %3786 = vmatpush2.msra.mxu0 0.0
    %3787 = vmatprep.subr.mxu0 0.0
    %3788 = vmatpush2.msra.mxu0 0.0
    %3789 = vmatprep.subr.mxu0 0.0
    %3790 = vmatpush2.msra.mxu0 0.0
    %3791 = vmatprep.subr.mxu0 0.0
    %3792 = vmatpush2.msra.mxu0 0.0
    %3793 = vmatprep.subr.mxu0 0.0
    %3794 = vmatpush2.msra.mxu0 0.0
    %3795 = vmatprep.mubr.f32.mxu0 0.0
    %3796 = vmatmul.mubr.f32.gmra.mxu0 %v3729
    %v3797 = vpop.f32.mrf.mxu0
    %v3798 = vadd.f32 0.0, %v3797
    %v3799 = vpop.f32.mrf.mxu0
    %3800 = vdwg.mxu0
    %v3801 = vsel %vm469, %v3652, 0.0
    %3802 = vadd.xlane.f32.xlu0 %v3801
    %v3803 = vpop.xlane.xlu0 %3802
    %v3804 = vsel %vm469, %v3654, 0.0
    %3805 = vadd.xlane.f32.xlu0 %v3804
    %v3806 = vpop.xlane.xlu0 %3805
    %v3807 = vrcp.pop %v3803
    %v3808 = vrcp.pop %v3806
    %v3809 = vmul.f32 %v3725, %v3807
    %v3810 = vmul.f32 %v3798, %v3808
    %v3813 = vrot.slane %v3810, 7
    %v3814 = vsel %vm642, %v3813, %v3809
    %3816 = vrot.lane.b32.xlu0 %v3463, 64
    %v3817 = vpop.permute.xlu0 %3816
    %v3819 = vsel %vm75, %v3814, %v3817
    %v3821 = vsel %vm192, %v3819, 0
    %3823 = vmatprep.subr.mxu0 0.0
    %3824 = vmatpush1.msra.mxu0 0.0
    %3825 = vmatprep.subr.mxu0 0.0
    %3826 = vmatpush1.msra.mxu0 0.0
    %3827 = vmatprep.subr.mxu0 0.0
    %3828 = vmatpush1.msra.mxu0 0.0
    %3829 = vmatprep.subr.mxu0 0.0
    %3830 = vmatpush1.msra.mxu0 0.0
    %3831 = vmatprep.subr.mxu0 0.0
    %3832 = vmatpush1.msra.mxu0 0.0
    %3833 = vmatprep.subr.mxu0 0.0
    %3834 = vmatpush1.msra.mxu0 0.0
    %3835 = vmatprep.subr.mxu0 0.0
    %3836 = vmatpush1.msra.mxu0 0.0
    %3837 = vmatprep.subr.mxu0 0.0
    %3838 = vmatpush1.msra.mxu0 0.0
    %3839 = vmatprep.subr.mxu0 0.0
    %3840 = vmatpush1.msra.mxu0 %v60
    %3841 = vmatprep.subr.mxu0 0.0
    %3842 = vmatpush1.msra.mxu0 %v59
    %3843 = vmatprep.subr.mxu0 0.0
    %3844 = vmatpush1.msra.mxu0 %v58
    %3845 = vmatprep.subr.mxu0 0.0
    %3846 = vmatpush1.msra.mxu0 %v57
    %3847 = vmatprep.subr.mxu0 0.0
    %3848 = vmatpush1.msra.mxu0 %v56
    %3849 = vmatprep.subr.mxu0 0.0
    %3850 = vmatpush1.msra.mxu0 %v55
    %3851 = vmatprep.subr.mxu0 0.0
    %3852 = vmatpush1.msra.mxu0 %v54
    %3853 = vmatprep.subr.mxu0 0.0
    %3854 = vmatpush1.msra.mxu0 %v53
    %3855 = vmatprep.subr.mxu0 0.0
    %3856 = vmatpush2.msra.mxu0 0.0
    %3857 = vmatprep.subr.mxu0 0.0
    %3858 = vmatpush2.msra.mxu0 0.0
    %3859 = vmatprep.subr.mxu0 0.0
    %3860 = vmatpush2.msra.mxu0 0.0
    %3861 = vmatprep.subr.mxu0 0.0
    %3862 = vmatpush2.msra.mxu0 0.0
    %3863 = vmatprep.subr.mxu0 0.0
    %3864 = vmatpush2.msra.mxu0 0.0
    %3865 = vmatprep.subr.mxu0 0.0
    %3866 = vmatpush2.msra.mxu0 0.0
    %3867 = vmatprep.subr.mxu0 0.0
    %3868 = vmatpush2.msra.mxu0 0.0
    %3869 = vmatprep.subr.mxu0 0.0
    %3870 = vmatpush2.msra.mxu0 0.0
    %3871 = vmatprep.subr.mxu0 0.0
    %3872 = vmatpush2.msra.mxu0 0.0
    %3873 = vmatprep.subr.mxu0 0.0
    %3874 = vmatpush2.msra.mxu0 0.0
    %3875 = vmatprep.subr.mxu0 0.0
    %3876 = vmatpush2.msra.mxu0 0.0
    %3877 = vmatprep.subr.mxu0 0.0
    %3878 = vmatpush2.msra.mxu0 0.0
    %3879 = vmatprep.subr.mxu0 0.0
    %3880 = vmatpush2.msra.mxu0 0.0
    %3881 = vmatprep.subr.mxu0 0.0
    %3882 = vmatpush2.msra.mxu0 0.0
    %3883 = vmatprep.subr.mxu0 0.0
    %3884 = vmatpush2.msra.mxu0 0.0
    %3885 = vmatprep.subr.mxu0 0.0
    %3886 = vmatpush2.msra.mxu0 0.0
    %3887 = vmatprep.mubr.f32.mxu0 0.0
    %3888 = vmatmul.mubr.f32.gmra.mxu0 %v3821
    %v3889 = vpop.f32.mrf.mxu0
    %v3890 = vadd.f32 %v653, %v3889
    %v3891 = vpop.f32.mrf.mxu0
    %3892 = vdwg.mxu0
    %v3893 = vtanh.pop %v3890
    %s3894 = scalar_lea.vmem [#allocation2], 10
    %3895 = vst.msk [vmem:[%s3894] sm:$0x3] %vm729, %v3893
    %s3896 = scalar_lea.vmem %s0, 12
    %v3897 = vld [vmem:[%s3896] sm:$0x3]
    %v3898 = vsel %vm75, %v3364, 0
    %3900 = vmatprep.subr.mxu0 0.0
    %3901 = vmatpush1.msra.mxu0 0.0
    %3902 = vmatprep.subr.mxu0 0.0
    %3903 = vmatpush1.msra.mxu0 0.0
    %3904 = vmatprep.subr.mxu0 0.0
    %3905 = vmatpush1.msra.mxu0 0.0
    %3906 = vmatprep.subr.mxu0 0.0
    %3907 = vmatpush1.msra.mxu0 0.0
    %3908 = vmatprep.subr.mxu0 0.0
    %3909 = vmatpush1.msra.mxu0 0.0
    %3910 = vmatprep.subr.mxu0 0.0
    %3911 = vmatpush1.msra.mxu0 0.0
    %3912 = vmatprep.subr.mxu0 0.0
    %3913 = vmatpush1.msra.mxu0 0.0
    %3914 = vmatprep.subr.mxu0 0.0
    %3915 = vmatpush1.msra.mxu0 0.0
    %3916 = vmatprep.subr.mxu0 0.0
    %3917 = vmatpush1.msra.mxu0 0.0
    %3918 = vmatprep.subr.mxu0 0.0
    %3919 = vmatpush1.msra.mxu0 0.0
    %3920 = vmatprep.subr.mxu0 0.0
    %3921 = vmatpush1.msra.mxu0 0.0
    %3922 = vmatprep.subr.mxu0 0.0
    %3923 = vmatpush1.msra.mxu0 0.0
    %3924 = vmatprep.subr.mxu0 0.0
    %3925 = vmatpush1.msra.mxu0 %v43
    %3926 = vmatprep.subr.mxu0 0.0
    %3927 = vmatpush1.msra.mxu0 %v42
    %3928 = vmatprep.subr.mxu0 0.0
    %3929 = vmatpush1.msra.mxu0 %v41
    %3930 = vmatprep.subr.mxu0 0.0
    %3931 = vmatpush1.msra.mxu0 %v40
    %3932 = vmatprep.subr.mxu0 0.0
    %3933 = vmatpush2.msra.mxu0 0.0
    %3934 = vmatprep.subr.mxu0 0.0
    %3935 = vmatpush2.msra.mxu0 0.0
    %3936 = vmatprep.subr.mxu0 0.0
    %3937 = vmatpush2.msra.mxu0 0.0
    %3938 = vmatprep.subr.mxu0 0.0
    %3939 = vmatpush2.msra.mxu0 0.0
    %3940 = vmatprep.subr.mxu0 0.0
    %3941 = vmatpush2.msra.mxu0 0.0
    %3942 = vmatprep.subr.mxu0 0.0
    %3943 = vmatpush2.msra.mxu0 0.0
    %3944 = vmatprep.subr.mxu0 0.0
    %3945 = vmatpush2.msra.mxu0 0.0
    %3946 = vmatprep.subr.mxu0 0.0
    %3947 = vmatpush2.msra.mxu0 0.0
    %3948 = vmatprep.subr.mxu0 0.0
    %3949 = vmatpush2.msra.mxu0 0.0
    %3950 = vmatprep.subr.mxu0 0.0
    %3951 = vmatpush2.msra.mxu0 0.0
    %3952 = vmatprep.subr.mxu0 0.0
    %3953 = vmatpush2.msra.mxu0 0.0
    %3954 = vmatprep.subr.mxu0 0.0
    %3955 = vmatpush2.msra.mxu0 0.0
    %3956 = vmatprep.subr.mxu0 0.0
    %3957 = vmatpush2.msra.mxu0 0.0
    %3958 = vmatprep.subr.mxu0 0.0
    %3959 = vmatpush2.msra.mxu0 0.0
    %3960 = vmatprep.subr.mxu0 0.0
    %3961 = vmatpush2.msra.mxu0 0.0
    %3962 = vmatprep.subr.mxu0 0.0
    %3963 = vmatpush2.msra.mxu0 0.0
    %3964 = vmatprep.mubr.f32.mxu0 0.0
    %3965 = vmatmul.mubr.f32.gmra.mxu0 %v3898
    %v3966 = vpop.f32.mrf.mxu0
    %v3967 = vadd.f32 0.0, %v3966
    %v3968 = vpop.f32.mrf.mxu0
    %3969 = vdwg.mxu0
    %v3970 = vadd.f32 %v3897, %v3967
    %v3971 = vxor.u32 %v3970, 2147483648
    %v3972 = vmul.f32 %v3971, 1.442695
    %v3973 = vpow.pop %v3972
    %v3974 = vadd.f32 %v3973, 1.0
    %v3975 = vrcp.pop %v3974
    %v3976 = vmul.f32 1.0, %v3975
    %v3977 = vtanh.pop %v3970
    %v3978 = vmul.f32 %v3976, %v3355
    %3980 = vrot.lane.b32.xlu0 %v3977, 64
    %v3981 = vpop.permute.xlu0 %3980
    %v3983 = vmul.f32 %v3976, %v3981
    %3985 = vrot.lane.b32.xlu0 %v3983, 32
    %v3986 = vpop.permute.xlu0 %3985
    %v3988 = vadd.f32 %v3978, %v3986
    %v3989 = vtanh.pop %v3988
    %3991 = vrot.lane.b32.xlu0 %v3989, 64
    %v3992 = vpop.permute.xlu0 %3991
    %v3994 = vmul.f32 %v3976, %v3992
    %3996 = vrot.lane.b32.xlu0 %v3994, 32
    %v3997 = vpop.permute.xlu0 %3996
    %v3999 = vsel %vm75, %v3997, %v3817
    %v4001 = vsel %vm192, %v3999, 0
    %4003 = vmatprep.subr.mxu0 0.0
    %4004 = vmatpush1.msra.mxu0 0.0
    %4005 = vmatprep.subr.mxu0 0.0
    %4006 = vmatpush1.msra.mxu0 0.0
    %4007 = vmatprep.subr.mxu0 0.0
    %4008 = vmatpush1.msra.mxu0 0.0
    %4009 = vmatprep.subr.mxu0 0.0
    %4010 = vmatpush1.msra.mxu0 0.0
    %4011 = vmatprep.subr.mxu0 0.0
    %4012 = vmatpush1.msra.mxu0 0.0
    %4013 = vmatprep.subr.mxu0 0.0
    %4014 = vmatpush1.msra.mxu0 0.0
    %4015 = vmatprep.subr.mxu0 0.0
    %4016 = vmatpush1.msra.mxu0 0.0
    %4017 = vmatprep.subr.mxu0 0.0
    %4018 = vmatpush1.msra.mxu0 0.0
    %4019 = vmatprep.subr.mxu0 0.0
    %4020 = vmatpush1.msra.mxu0 %v51
    %4021 = vmatprep.subr.mxu0 0.0
    %4022 = vmatpush1.msra.mxu0 %v50
    %4023 = vmatprep.subr.mxu0 0.0
    %4024 = vmatpush1.msra.mxu0 %v49
    %4025 = vmatprep.subr.mxu0 0.0
    %4026 = vmatpush1.msra.mxu0 %v48
    %4027 = vmatprep.subr.mxu0 0.0
    %4028 = vmatpush1.msra.mxu0 %v47
    %4029 = vmatprep.subr.mxu0 0.0
    %4030 = vmatpush1.msra.mxu0 %v46
    %4031 = vmatprep.subr.mxu0 0.0
    %4032 = vmatpush1.msra.mxu0 %v45
    %4033 = vmatprep.subr.mxu0 0.0
    %4034 = vmatpush1.msra.mxu0 %v44
    %4035 = vmatprep.subr.mxu0 0.0
    %4036 = vmatpush2.msra.mxu0 0.0
    %4037 = vmatprep.subr.mxu0 0.0
    %4038 = vmatpush2.msra.mxu0 0.0
    %4039 = vmatprep.subr.mxu0 0.0
    %4040 = vmatpush2.msra.mxu0 0.0
    %4041 = vmatprep.subr.mxu0 0.0
    %4042 = vmatpush2.msra.mxu0 0.0
    %4043 = vmatprep.subr.mxu0 0.0
    %4044 = vmatpush2.msra.mxu0 0.0
    %4045 = vmatprep.subr.mxu0 0.0
    %4046 = vmatpush2.msra.mxu0 0.0
    %4047 = vmatprep.subr.mxu0 0.0
    %4048 = vmatpush2.msra.mxu0 0.0
    %4049 = vmatprep.subr.mxu0 0.0
    %4050 = vmatpush2.msra.mxu0 0.0
    %4051 = vmatprep.subr.mxu0 0.0
    %4052 = vmatpush2.msra.mxu0 0.0
    %4053 = vmatprep.subr.mxu0 0.0
    %4054 = vmatpush2.msra.mxu0 0.0
    %4055 = vmatprep.subr.mxu0 0.0
    %4056 = vmatpush2.msra.mxu0 0.0
    %4057 = vmatprep.subr.mxu0 0.0
    %4058 = vmatpush2.msra.mxu0 0.0
    %4059 = vmatprep.subr.mxu0 0.0
    %4060 = vmatpush2.msra.mxu0 0.0
    %4061 = vmatprep.subr.mxu0 0.0
    %4062 = vmatpush2.msra.mxu0 0.0
    %4063 = vmatprep.subr.mxu0 0.0
    %4064 = vmatpush2.msra.mxu0 0.0
    %4065 = vmatprep.subr.mxu0 0.0
    %4066 = vmatpush2.msra.mxu0 0.0
    %4067 = vmatprep.mubr.f32.mxu0 0.0
    %4068 = vmatmul.mubr.f32.gmra.mxu0 %v4001
    %v4069 = vpop.f32.mrf.mxu0
    %v4070 = vadd.f32 %v190, %v4069
    %v4071 = vpop.f32.mrf.mxu0
    %4072 = vdwg.mxu0
    %v4073 = vxor.u32 %v4070, 2147483648
    %v4074 = vmul.f32 %v4073, 1.442695
    %v4075 = vpow.pop %v4074
    %v4076 = vadd.f32 %v4075, 1.0
    %v4077 = vrcp.pop %v4076
    %v4078 = vmul.f32 1.0, %v4077
    %v4079 = vtanh.pop %v4070
    %v4080 = vmul.f32 %v4078, %v3457
    %4082 = vrot.lane.b32.xlu0 %v4079, 64
    %v4083 = vpop.permute.xlu0 %4082
    %v4085 = vmul.f32 %v4078, %v4083
    %4087 = vrot.lane.b32.xlu0 %v4085, 32
    %v4088 = vpop.permute.xlu0 %4087
    %v4090 = vadd.f32 %v4080, %v4088
    %v4091 = vtanh.pop %v4090
    %4093 = vrot.lane.b32.xlu0 %v4091, 64
    %v4094 = vpop.permute.xlu0 %4093
    %v4096 = vmul.f32 %v4078, %v4094
    %v4099 = vunpack.c.l.s4 1966171168
    %v4100 = vunpack.c.0.s8 %v4099
    %v4101 = vlaneseq
    %v4102 = vshrl.u32 %v4101, 7
    %v4103 = vsub.s32 %v4100, %v4102
    %v4104 = vrot.slane %v4096, %v4103
    %v4105 = vcombine.high %v4104, %v4104
    %v4107 = vunpack.c.l.s4 1966171168
    %v4108 = vunpack.c.0.s8 %v4107
    %v4109 = vlaneseq
    %v4110 = vshrl.u32 %v4109, 7
    %v4111 = vsub.s32 %v4108, %v4110
    %v4112 = vrot.slane %v4104, %v4111
    %v4114 = vunpack.c.l.s4 1966171168
    %v4115 = vunpack.c.0.s8 %v4114
    %v4116 = vlaneseq
    %v4117 = vshrl.u32 %v4116, 7
    %v4118 = vsub.s32 %v4115, %v4117
    %v4119 = vrot.slane %v4105, %v4118
    %v4120 = vlaneseq
    %v4121 = vshrl.u32 %v4120, 7
    %v4122 = vsub.s32 0, %v4121
    %v4123 = vrot.slane %v4112, %v4122
    %4124 = vrot.lane.b32.xlu0 %v4123, 32
    %v4125 = vpop.permute.xlu0 %4124
    %v4126 = vsel %vm75, %v4125, 0
    %4128 = vmatprep.subr.mxu0 0.0
    %4129 = vmatpush1.msra.mxu0 0.0
    %4130 = vmatprep.subr.mxu0 0.0
    %4131 = vmatpush1.msra.mxu0 0.0
    %4132 = vmatprep.subr.mxu0 0.0
    %4133 = vmatpush1.msra.mxu0 0.0
    %4134 = vmatprep.subr.mxu0 0.0
    %4135 = vmatpush1.msra.mxu0 0.0
    %4136 = vmatprep.subr.mxu0 0.0
    %4137 = vmatpush1.msra.mxu0 0.0
    %4138 = vmatprep.subr.mxu0 0.0
    %4139 = vmatpush1.msra.mxu0 0.0
    %4140 = vmatprep.subr.mxu0 0.0
    %4141 = vmatpush1.msra.mxu0 0.0
    %4142 = vmatprep.subr.mxu0 0.0
    %4143 = vmatpush1.msra.mxu0 0.0
    %4144 = vmatprep.subr.mxu0 0.0
    %4145 = vmatpush1.msra.mxu0 0.0
    %4146 = vmatprep.subr.mxu0 0.0
    %4147 = vmatpush1.msra.mxu0 0.0
    %4148 = vmatprep.subr.mxu0 0.0
    %4149 = vmatpush1.msra.mxu0 0.0
    %4150 = vmatprep.subr.mxu0 0.0
    %4151 = vmatpush1.msra.mxu0 0.0
    %4152 = vmatprep.subr.mxu0 0.0
    %4153 = vmatpush1.msra.mxu0 %v67
    %4154 = vmatprep.subr.mxu0 0.0
    %4155 = vmatpush1.msra.mxu0 %v66
    %4156 = vmatprep.subr.mxu0 0.0
    %4157 = vmatpush1.msra.mxu0 %v65
    %4158 = vmatprep.subr.mxu0 0.0
    %4159 = vmatpush1.msra.mxu0 %v64
    %4160 = vmatprep.subr.mxu0 0.0
    %4161 = vmatpush2.msra.mxu0 0.0
    %4162 = vmatprep.subr.mxu0 0.0
    %4163 = vmatpush2.msra.mxu0 0.0
    %4164 = vmatprep.subr.mxu0 0.0
    %4165 = vmatpush2.msra.mxu0 0.0
    %4166 = vmatprep.subr.mxu0 0.0
    %4167 = vmatpush2.msra.mxu0 0.0
    %4168 = vmatprep.subr.mxu0 0.0
    %4169 = vmatpush2.msra.mxu0 0.0
    %4170 = vmatprep.subr.mxu0 0.0
    %4171 = vmatpush2.msra.mxu0 0.0
    %4172 = vmatprep.subr.mxu0 0.0
    %4173 = vmatpush2.msra.mxu0 0.0
    %4174 = vmatprep.subr.mxu0 0.0
    %4175 = vmatpush2.msra.mxu0 0.0
    %4176 = vmatprep.subr.mxu0 0.0
    %4177 = vmatpush2.msra.mxu0 0.0
    %4178 = vmatprep.subr.mxu0 0.0
    %4179 = vmatpush2.msra.mxu0 0.0
    %4180 = vmatprep.subr.mxu0 0.0
    %4181 = vmatpush2.msra.mxu0 0.0
    %4182 = vmatprep.subr.mxu0 0.0
    %4183 = vmatpush2.msra.mxu0 0.0
    %4184 = vmatprep.subr.mxu0 0.0
    %4185 = vmatpush2.msra.mxu0 0.0
    %4186 = vmatprep.subr.mxu0 0.0
    %4187 = vmatpush2.msra.mxu0 0.0
    %4188 = vmatprep.subr.mxu0 0.0
    %4189 = vmatpush2.msra.mxu0 0.0
    %4190 = vmatprep.subr.mxu0 0.0
    %4191 = vmatpush2.msra.mxu0 0.0
    %4192 = vmatprep.mubr.f32.mxu0 0.0
    %4193 = vmatmul.mubr.f32.gmra.mxu0 %v4126
    %v4194 = vpop.f32.mrf.mxu0
    %v4195 = vadd.f32 0.0, %v4194
    %v4196 = vpop.f32.mrf.mxu0
    %4197 = vdwg.mxu0
    %v4198 = vlaneseq
    %v4199 = vshrl.u32 %v4198, 7
    %v4200 = vsub.s32 0, %v4199
    %v4201 = vrot.slane %v4119, %v4200
    %4202 = vrot.lane.b32.xlu0 %v4201, 32
    %v4203 = vpop.permute.xlu0 %4202
    %v4204 = vsel %vm75, %v4203, 0
    %4206 = vmatprep.subr.mxu0 0.0
    %4207 = vmatpush1.msra.mxu0 0.0
    %4208 = vmatprep.subr.mxu0 0.0
    %4209 = vmatpush1.msra.mxu0 0.0
    %4210 = vmatprep.subr.mxu0 0.0
    %4211 = vmatpush1.msra.mxu0 0.0
    %4212 = vmatprep.subr.mxu0 0.0
    %4213 = vmatpush1.msra.mxu0 0.0
    %4214 = vmatprep.subr.mxu0 0.0
    %4215 = vmatpush1.msra.mxu0 0.0
    %4216 = vmatprep.subr.mxu0 0.0
    %4217 = vmatpush1.msra.mxu0 0.0
    %4218 = vmatprep.subr.mxu0 0.0
    %4219 = vmatpush1.msra.mxu0 0.0
    %4220 = vmatprep.subr.mxu0 0.0
    %4221 = vmatpush1.msra.mxu0 0.0
    %4222 = vmatprep.subr.mxu0 0.0
    %4223 = vmatpush1.msra.mxu0 0.0
    %4224 = vmatprep.subr.mxu0 0.0
    %4225 = vmatpush1.msra.mxu0 0.0
    %4226 = vmatprep.subr.mxu0 0.0
    %4227 = vmatpush1.msra.mxu0 0.0
    %4228 = vmatprep.subr.mxu0 0.0
    %4229 = vmatpush1.msra.mxu0 0.0
    %4230 = vmatprep.subr.mxu0 0.0
    %4231 = vmatpush1.msra.mxu0 %v71
    %4232 = vmatprep.subr.mxu0 0.0
    %4233 = vmatpush1.msra.mxu0 %v70
    %4234 = vmatprep.subr.mxu0 0.0
    %4235 = vmatpush1.msra.mxu0 %v69
    %4236 = vmatprep.subr.mxu0 0.0
    %4237 = vmatpush1.msra.mxu0 %v68
    %4238 = vmatprep.subr.mxu0 0.0
    %4239 = vmatpush2.msra.mxu0 0.0
    %4240 = vmatprep.subr.mxu0 0.0
    %4241 = vmatpush2.msra.mxu0 0.0
    %4242 = vmatprep.subr.mxu0 0.0
    %4243 = vmatpush2.msra.mxu0 0.0
    %4244 = vmatprep.subr.mxu0 0.0
    %4245 = vmatpush2.msra.mxu0 0.0
    %4246 = vmatprep.subr.mxu0 0.0
    %4247 = vmatpush2.msra.mxu0 0.0
    %4248 = vmatprep.subr.mxu0 0.0
    %4249 = vmatpush2.msra.mxu0 0.0
    %4250 = vmatprep.subr.mxu0 0.0
    %4251 = vmatpush2.msra.mxu0 0.0
    %4252 = vmatprep.subr.mxu0 0.0
    %4253 = vmatpush2.msra.mxu0 0.0
    %4254 = vmatprep.subr.mxu0 0.0
    %4255 = vmatpush2.msra.mxu0 0.0
    %4256 = vmatprep.subr.mxu0 0.0
    %4257 = vmatpush2.msra.mxu0 0.0
    %4258 = vmatprep.subr.mxu0 0.0
    %4259 = vmatpush2.msra.mxu0 0.0
    %4260 = vmatprep.subr.mxu0 0.0
    %4261 = vmatpush2.msra.mxu0 0.0
    %4262 = vmatprep.subr.mxu0 0.0
    %4263 = vmatpush2.msra.mxu0 0.0
    %4264 = vmatprep.subr.mxu0 0.0
    %4265 = vmatpush2.msra.mxu0 0.0
    %4266 = vmatprep.subr.mxu0 0.0
    %4267 = vmatpush2.msra.mxu0 0.0
    %4268 = vmatprep.subr.mxu0 0.0
    %4269 = vmatpush2.msra.mxu0 0.0
    %4270 = vmatprep.mubr.f32.mxu0 0.0
    %4271 = vmatmul.mubr.f32.gmra.mxu0 %v4204
    %v4272 = vpop.f32.mrf.mxu0
    %v4273 = vadd.f32 0.0, %v4272
    %v4274 = vpop.f32.mrf.mxu0
    %4275 = vdwg.mxu0
    %v4276 = vsel %vm469, %v4195, -inf
    %4277 = vmax.xlane.f32.xlu0 %v4276
    %v4278 = vpop.xlane.xlu0 %4277
    %v4279 = vsel %vm469, %v4273, -inf
    %4280 = vmax.xlane.f32.xlu0 %v4279
    %v4281 = vpop.xlane.xlu0 %4280
    %v4282 = vsub.f32 %v4195, %v4278
    %v4283 = vsub.f32 %v4273, %v4281
    %v4284 = vmul.f32 %v4282, 1.442695
    %v4285 = vpow.pop %v4284
    %v4286 = vmul.f32 %v4283, 1.442695
    %v4287 = vpow.pop %v4286
    %v4289 = vsel %vm482, %v4285, 0
    %4291 = vmatprep.subr.mxu0 0.0
    %4292 = vmatpush1.msra.mxu0 0.0
    %4293 = vmatprep.subr.mxu0 0.0
    %4294 = vmatpush1.msra.mxu0 0.0
    %4295 = vmatprep.subr.mxu0 0.0
    %4296 = vmatpush1.msra.mxu0 0.0
    %4297 = vmatprep.subr.mxu0 0.0
    %4298 = vmatpush1.msra.mxu0 0.0
    %4299 = vmatprep.subr.mxu0 0.0
    %4300 = vmatpush1.msra.mxu0 0.0
    %4301 = vmatprep.subr.mxu0 0.0
    %4302 = vmatpush1.msra.mxu0 0.0
    %4303 = vmatprep.subr.mxu0 0.0
    %4304 = vmatpush1.msra.mxu0 0.0
    %4305 = vmatprep.subr.mxu0 0.0
    %4306 = vmatpush1.msra.mxu0 0.0
    %4307 = vmatprep.subr.mxu0 0.0
    %4308 = vmatpush1.msra.mxu0 0.0
    %4309 = vmatprep.subr.mxu0 0.0
    %4310 = vmatpush1.msra.mxu0 0.0
    %4311 = vmatprep.subr.mxu0 0.0
    %4312 = vmatpush1.msra.mxu0 0.0
    %4313 = vmatprep.subr.mxu0 0.0
    %4314 = vmatpush1.msra.mxu0 0.0
    %4315 = vmatprep.subr.mxu0 0.0
    %4316 = vmatpush1.msra.mxu0 0.0
    %4317 = vmatprep.subr.mxu0 0.0
    %4318 = vmatpush1.msra.mxu0 0.0
    %4319 = vmatprep.subr.mxu0 0.0
    %4320 = vmatpush1.msra.mxu0 0.0
    %4321 = vmatprep.subr.mxu0 0.0
    %4322 = vmatpush1.msra.mxu0 %v62
    %4323 = vmatprep.subr.mxu0 0.0
    %4324 = vmatpush2.msra.mxu0 0.0
    %4325 = vmatprep.subr.mxu0 0.0
    %4326 = vmatpush2.msra.mxu0 0.0
    %4327 = vmatprep.subr.mxu0 0.0
    %4328 = vmatpush2.msra.mxu0 0.0
    %4329 = vmatprep.subr.mxu0 0.0
    %4330 = vmatpush2.msra.mxu0 0.0
    %4331 = vmatprep.subr.mxu0 0.0
    %4332 = vmatpush2.msra.mxu0 0.0
    %4333 = vmatprep.subr.mxu0 0.0
    %4334 = vmatpush2.msra.mxu0 0.0
    %4335 = vmatprep.subr.mxu0 0.0
    %4336 = vmatpush2.msra.mxu0 0.0
    %4337 = vmatprep.subr.mxu0 0.0
    %4338 = vmatpush2.msra.mxu0 0.0
    %4339 = vmatprep.subr.mxu0 0.0
    %4340 = vmatpush2.msra.mxu0 0.0
    %4341 = vmatprep.subr.mxu0 0.0
    %4342 = vmatpush2.msra.mxu0 0.0
    %4343 = vmatprep.subr.mxu0 0.0
    %4344 = vmatpush2.msra.mxu0 0.0
    %4345 = vmatprep.subr.mxu0 0.0
    %4346 = vmatpush2.msra.mxu0 0.0
    %4347 = vmatprep.subr.mxu0 0.0
    %4348 = vmatpush2.msra.mxu0 0.0
    %4349 = vmatprep.subr.mxu0 0.0
    %4350 = vmatpush2.msra.mxu0 0.0
    %4351 = vmatprep.subr.mxu0 0.0
    %4352 = vmatpush2.msra.mxu0 0.0
    %4353 = vmatprep.subr.mxu0 0.0
    %4354 = vmatpush2.msra.mxu0 0.0
    %4355 = vmatprep.mubr.f32.mxu0 0.0
    %4356 = vmatmul.mubr.f32.gmra.mxu0 %v4289
    %v4357 = vpop.f32.mrf.mxu0
    %v4358 = vadd.f32 0.0, %v4357
    %v4359 = vpop.f32.mrf.mxu0
    %4360 = vdwg.mxu0
    %v4362 = vsel %vm482, %v4287, 0
    %4364 = vmatprep.subr.mxu0 0.0
    %4365 = vmatpush1.msra.mxu0 0.0
    %4366 = vmatprep.subr.mxu0 0.0
    %4367 = vmatpush1.msra.mxu0 0.0
    %4368 = vmatprep.subr.mxu0 0.0
    %4369 = vmatpush1.msra.mxu0 0.0
    %4370 = vmatprep.subr.mxu0 0.0
    %4371 = vmatpush1.msra.mxu0 0.0
    %4372 = vmatprep.subr.mxu0 0.0
    %4373 = vmatpush1.msra.mxu0 0.0
    %4374 = vmatprep.subr.mxu0 0.0
    %4375 = vmatpush1.msra.mxu0 0.0
    %4376 = vmatprep.subr.mxu0 0.0
    %4377 = vmatpush1.msra.mxu0 0.0
    %4378 = vmatprep.subr.mxu0 0.0
    %4379 = vmatpush1.msra.mxu0 0.0
    %4380 = vmatprep.subr.mxu0 0.0
    %4381 = vmatpush1.msra.mxu0 0.0
    %4382 = vmatprep.subr.mxu0 0.0
    %4383 = vmatpush1.msra.mxu0 0.0
    %4384 = vmatprep.subr.mxu0 0.0
    %4385 = vmatpush1.msra.mxu0 0.0
    %4386 = vmatprep.subr.mxu0 0.0
    %4387 = vmatpush1.msra.mxu0 0.0
    %4388 = vmatprep.subr.mxu0 0.0
    %4389 = vmatpush1.msra.mxu0 0.0
    %4390 = vmatprep.subr.mxu0 0.0
    %4391 = vmatpush1.msra.mxu0 0.0
    %4392 = vmatprep.subr.mxu0 0.0
    %4393 = vmatpush1.msra.mxu0 0.0
    %4394 = vmatprep.subr.mxu0 0.0
    %4395 = vmatpush1.msra.mxu0 %v63
    %4396 = vmatprep.subr.mxu0 0.0
    %4397 = vmatpush2.msra.mxu0 0.0
    %4398 = vmatprep.subr.mxu0 0.0
    %4399 = vmatpush2.msra.mxu0 0.0
    %4400 = vmatprep.subr.mxu0 0.0
    %4401 = vmatpush2.msra.mxu0 0.0
    %4402 = vmatprep.subr.mxu0 0.0
    %4403 = vmatpush2.msra.mxu0 0.0
    %4404 = vmatprep.subr.mxu0 0.0
    %4405 = vmatpush2.msra.mxu0 0.0
    %4406 = vmatprep.subr.mxu0 0.0
    %4407 = vmatpush2.msra.mxu0 0.0
    %4408 = vmatprep.subr.mxu0 0.0
    %4409 = vmatpush2.msra.mxu0 0.0
    %4410 = vmatprep.subr.mxu0 0.0
    %4411 = vmatpush2.msra.mxu0 0.0
    %4412 = vmatprep.subr.mxu0 0.0
    %4413 = vmatpush2.msra.mxu0 0.0
    %4414 = vmatprep.subr.mxu0 0.0
    %4415 = vmatpush2.msra.mxu0 0.0
    %4416 = vmatprep.subr.mxu0 0.0
    %4417 = vmatpush2.msra.mxu0 0.0
    %4418 = vmatprep.subr.mxu0 0.0
    %4419 = vmatpush2.msra.mxu0 0.0
    %4420 = vmatprep.subr.mxu0 0.0
    %4421 = vmatpush2.msra.mxu0 0.0
    %4422 = vmatprep.subr.mxu0 0.0
    %4423 = vmatpush2.msra.mxu0 0.0
    %4424 = vmatprep.subr.mxu0 0.0
    %4425 = vmatpush2.msra.mxu0 0.0
    %4426 = vmatprep.subr.mxu0 0.0
    %4427 = vmatpush2.msra.mxu0 0.0
    %4428 = vmatprep.mubr.f32.mxu0 0.0
    %4429 = vmatmul.mubr.f32.gmra.mxu0 %v4362
    %v4430 = vpop.f32.mrf.mxu0
    %v4431 = vadd.f32 0.0, %v4430
    %v4432 = vpop.f32.mrf.mxu0
    %4433 = vdwg.mxu0
    %v4434 = vsel %vm469, %v4285, 0.0
    %4435 = vadd.xlane.f32.xlu0 %v4434
    %v4436 = vpop.xlane.xlu0 %4435
    %v4437 = vsel %vm469, %v4287, 0.0
    %4438 = vadd.xlane.f32.xlu0 %v4437
    %v4439 = vpop.xlane.xlu0 %4438
    %v4440 = vrcp.pop %v4436
    %v4441 = vrcp.pop %v4439
    %v4442 = vmul.f32 %v4358, %v4440
    %v4443 = vmul.f32 %v4431, %v4441
    %v4446 = vrot.slane %v4443, 7
    %v4447 = vsel %vm642, %v4446, %v4442
    %4449 = vrot.lane.b32.xlu0 %v4096, 64
    %v4450 = vpop.permute.xlu0 %4449
    %v4452 = vsel %vm75, %v4447, %v4450
    %v4454 = vsel %vm192, %v4452, 0
    %4456 = vmatprep.subr.mxu0 0.0
    %4457 = vmatpush1.msra.mxu0 0.0
    %4458 = vmatprep.subr.mxu0 0.0
    %4459 = vmatpush1.msra.mxu0 0.0
    %4460 = vmatprep.subr.mxu0 0.0
    %4461 = vmatpush1.msra.mxu0 0.0
    %4462 = vmatprep.subr.mxu0 0.0
    %4463 = vmatpush1.msra.mxu0 0.0
    %4464 = vmatprep.subr.mxu0 0.0
    %4465 = vmatpush1.msra.mxu0 0.0
    %4466 = vmatprep.subr.mxu0 0.0
    %4467 = vmatpush1.msra.mxu0 0.0
    %4468 = vmatprep.subr.mxu0 0.0
    %4469 = vmatpush1.msra.mxu0 0.0
    %4470 = vmatprep.subr.mxu0 0.0
    %4471 = vmatpush1.msra.mxu0 0.0
    %4472 = vmatprep.subr.mxu0 0.0
    %4473 = vmatpush1.msra.mxu0 %v60
    %4474 = vmatprep.subr.mxu0 0.0
    %4475 = vmatpush1.msra.mxu0 %v59
    %4476 = vmatprep.subr.mxu0 0.0
    %4477 = vmatpush1.msra.mxu0 %v58
    %4478 = vmatprep.subr.mxu0 0.0
    %4479 = vmatpush1.msra.mxu0 %v57
    %4480 = vmatprep.subr.mxu0 0.0
    %4481 = vmatpush1.msra.mxu0 %v56
    %4482 = vmatprep.subr.mxu0 0.0
    %4483 = vmatpush1.msra.mxu0 %v55
    %4484 = vmatprep.subr.mxu0 0.0
    %4485 = vmatpush1.msra.mxu0 %v54
    %4486 = vmatprep.subr.mxu0 0.0
    %4487 = vmatpush1.msra.mxu0 %v53
    %4488 = vmatprep.subr.mxu0 0.0
    %4489 = vmatpush2.msra.mxu0 0.0
    %4490 = vmatprep.subr.mxu0 0.0
    %4491 = vmatpush2.msra.mxu0 0.0
    %4492 = vmatprep.subr.mxu0 0.0
    %4493 = vmatpush2.msra.mxu0 0.0
    %4494 = vmatprep.subr.mxu0 0.0
    %4495 = vmatpush2.msra.mxu0 0.0
    %4496 = vmatprep.subr.mxu0 0.0
    %4497 = vmatpush2.msra.mxu0 0.0
    %4498 = vmatprep.subr.mxu0 0.0
    %4499 = vmatpush2.msra.mxu0 0.0
    %4500 = vmatprep.subr.mxu0 0.0
    %4501 = vmatpush2.msra.mxu0 0.0
    %4502 = vmatprep.subr.mxu0 0.0
    %4503 = vmatpush2.msra.mxu0 0.0
    %4504 = vmatprep.subr.mxu0 0.0
    %4505 = vmatpush2.msra.mxu0 0.0
    %4506 = vmatprep.subr.mxu0 0.0
    %4507 = vmatpush2.msra.mxu0 0.0
    %4508 = vmatprep.subr.mxu0 0.0
    %4509 = vmatpush2.msra.mxu0 0.0
    %4510 = vmatprep.subr.mxu0 0.0
    %4511 = vmatpush2.msra.mxu0 0.0
    %4512 = vmatprep.subr.mxu0 0.0
    %4513 = vmatpush2.msra.mxu0 0.0
    %4514 = vmatprep.subr.mxu0 0.0
    %4515 = vmatpush2.msra.mxu0 0.0
    %4516 = vmatprep.subr.mxu0 0.0
    %4517 = vmatpush2.msra.mxu0 0.0
    %4518 = vmatprep.subr.mxu0 0.0
    %4519 = vmatpush2.msra.mxu0 0.0
    %4520 = vmatprep.mubr.f32.mxu0 0.0
    %4521 = vmatmul.mubr.f32.gmra.mxu0 %v4454
    %v4522 = vpop.f32.mrf.mxu0
    %v4523 = vadd.f32 %v653, %v4522
    %v4524 = vpop.f32.mrf.mxu0
    %4525 = vdwg.mxu0
    %v4526 = vtanh.pop %v4523
    %s4527 = scalar_lea.vmem [#allocation2], 12
    %4528 = vst.msk [vmem:[%s4527] sm:$0x3] %vm729, %v4526
    %s4529 = scalar_lea.vmem %s0, 14
    %v4530 = vld [vmem:[%s4529] sm:$0x3]
    %v4531 = vsel %vm75, %v3997, 0
    %4533 = vmatprep.subr.mxu0 0.0
    %4534 = vmatpush1.msra.mxu0 0.0
    %4535 = vmatprep.subr.mxu0 0.0
    %4536 = vmatpush1.msra.mxu0 0.0
    %4537 = vmatprep.subr.mxu0 0.0
    %4538 = vmatpush1.msra.mxu0 0.0
    %4539 = vmatprep.subr.mxu0 0.0
    %4540 = vmatpush1.msra.mxu0 0.0
    %4541 = vmatprep.subr.mxu0 0.0
    %4542 = vmatpush1.msra.mxu0 0.0
    %4543 = vmatprep.subr.mxu0 0.0
    %4544 = vmatpush1.msra.mxu0 0.0
    %4545 = vmatprep.subr.mxu0 0.0
    %4546 = vmatpush1.msra.mxu0 0.0
    %4547 = vmatprep.subr.mxu0 0.0
    %4548 = vmatpush1.msra.mxu0 0.0
    %4549 = vmatprep.subr.mxu0 0.0
    %4550 = vmatpush1.msra.mxu0 0.0
    %4551 = vmatprep.subr.mxu0 0.0
    %4552 = vmatpush1.msra.mxu0 0.0
    %4553 = vmatprep.subr.mxu0 0.0
    %4554 = vmatpush1.msra.mxu0 0.0
    %4555 = vmatprep.subr.mxu0 0.0
    %4556 = vmatpush1.msra.mxu0 0.0
    %4557 = vmatprep.subr.mxu0 0.0
    %4558 = vmatpush1.msra.mxu0 %v43
    %4559 = vmatprep.subr.mxu0 0.0
    %4560 = vmatpush1.msra.mxu0 %v42
    %4561 = vmatprep.subr.mxu0 0.0
    %4562 = vmatpush1.msra.mxu0 %v41
    %4563 = vmatprep.subr.mxu0 0.0
    %4564 = vmatpush1.msra.mxu0 %v40
    %4565 = vmatprep.subr.mxu0 0.0
    %4566 = vmatpush2.msra.mxu0 0.0
    %4567 = vmatprep.subr.mxu0 0.0
    %4568 = vmatpush2.msra.mxu0 0.0
    %4569 = vmatprep.subr.mxu0 0.0
    %4570 = vmatpush2.msra.mxu0 0.0
    %4571 = vmatprep.subr.mxu0 0.0
    %4572 = vmatpush2.msra.mxu0 0.0
    %4573 = vmatprep.subr.mxu0 0.0
    %4574 = vmatpush2.msra.mxu0 0.0
    %4575 = vmatprep.subr.mxu0 0.0
    %4576 = vmatpush2.msra.mxu0 0.0
    %4577 = vmatprep.subr.mxu0 0.0
    %4578 = vmatpush2.msra.mxu0 0.0
    %4579 = vmatprep.subr.mxu0 0.0
    %4580 = vmatpush2.msra.mxu0 0.0
    %4581 = vmatprep.subr.mxu0 0.0
    %4582 = vmatpush2.msra.mxu0 0.0
    %4583 = vmatprep.subr.mxu0 0.0
    %4584 = vmatpush2.msra.mxu0 0.0
    %4585 = vmatprep.subr.mxu0 0.0
    %4586 = vmatpush2.msra.mxu0 0.0
    %4587 = vmatprep.subr.mxu0 0.0
    %4588 = vmatpush2.msra.mxu0 0.0
    %4589 = vmatprep.subr.mxu0 0.0
    %4590 = vmatpush2.msra.mxu0 0.0
    %4591 = vmatprep.subr.mxu0 0.0
    %4592 = vmatpush2.msra.mxu0 0.0
    %4593 = vmatprep.subr.mxu0 0.0
    %4594 = vmatpush2.msra.mxu0 0.0
    %4595 = vmatprep.subr.mxu0 0.0
    %4596 = vmatpush2.msra.mxu0 0.0
    %4597 = vmatprep.mubr.f32.mxu0 0.0
    %4598 = vmatmul.mubr.f32.gmra.mxu0 %v4531
    %v4599 = vpop.f32.mrf.mxu0
    %v4600 = vadd.f32 0.0, %v4599
    %v4601 = vpop.f32.mrf.mxu0
    %4602 = vdwg.mxu0
    %v4603 = vadd.f32 %v4530, %v4600
    %v4604 = vxor.u32 %v4603, 2147483648
    %v4605 = vmul.f32 %v4604, 1.442695
    %v4606 = vpow.pop %v4605
    %v4607 = vadd.f32 %v4606, 1.0
    %v4608 = vrcp.pop %v4607
    %v4609 = vmul.f32 1.0, %v4608
    %v4610 = vtanh.pop %v4603
    %v4611 = vmul.f32 %v4609, %v3988
    %4613 = vrot.lane.b32.xlu0 %v4610, 64
    %v4614 = vpop.permute.xlu0 %4613
    %v4616 = vmul.f32 %v4609, %v4614
    %4618 = vrot.lane.b32.xlu0 %v4616, 32
    %v4619 = vpop.permute.xlu0 %4618
    %v4621 = vadd.f32 %v4611, %v4619
    %v4622 = vtanh.pop %v4621
    %4624 = vrot.lane.b32.xlu0 %v4622, 64
    %v4625 = vpop.permute.xlu0 %4624
    %v4627 = vmul.f32 %v4609, %v4625
    %4629 = vrot.lane.b32.xlu0 %v4627, 32
    %v4630 = vpop.permute.xlu0 %4629
    %v4632 = vsel %vm75, %v4630, %v4450
    %v4634 = vsel %vm192, %v4632, 0
    %4636 = vmatprep.subr.mxu0 0.0
    %4637 = vmatpush1.msra.mxu0 0.0
    %4638 = vmatprep.subr.mxu0 0.0
    %4639 = vmatpush1.msra.mxu0 0.0
    %4640 = vmatprep.subr.mxu0 0.0
    %4641 = vmatpush1.msra.mxu0 0.0
    %4642 = vmatprep.subr.mxu0 0.0
    %4643 = vmatpush1.msra.mxu0 0.0
    %4644 = vmatprep.subr.mxu0 0.0
    %4645 = vmatpush1.msra.mxu0 0.0
    %4646 = vmatprep.subr.mxu0 0.0
    %4647 = vmatpush1.msra.mxu0 0.0
    %4648 = vmatprep.subr.mxu0 0.0
    %4649 = vmatpush1.msra.mxu0 0.0
    %4650 = vmatprep.subr.mxu0 0.0
    %4651 = vmatpush1.msra.mxu0 0.0
    %4652 = vmatprep.subr.mxu0 0.0
    %4653 = vmatpush1.msra.mxu0 %v51
    %4654 = vmatprep.subr.mxu0 0.0
    %4655 = vmatpush1.msra.mxu0 %v50
    %4656 = vmatprep.subr.mxu0 0.0
    %4657 = vmatpush1.msra.mxu0 %v49
    %4658 = vmatprep.subr.mxu0 0.0
    %4659 = vmatpush1.msra.mxu0 %v48
    %4660 = vmatprep.subr.mxu0 0.0
    %4661 = vmatpush1.msra.mxu0 %v47
    %4662 = vmatprep.subr.mxu0 0.0
    %4663 = vmatpush1.msra.mxu0 %v46
    %4664 = vmatprep.subr.mxu0 0.0
    %4665 = vmatpush1.msra.mxu0 %v45
    %4666 = vmatprep.subr.mxu0 0.0
    %4667 = vmatpush1.msra.mxu0 %v44
    %4668 = vmatprep.subr.mxu0 0.0
    %4669 = vmatpush2.msra.mxu0 0.0
    %4670 = vmatprep.subr.mxu0 0.0
    %4671 = vmatpush2.msra.mxu0 0.0
    %4672 = vmatprep.subr.mxu0 0.0
    %4673 = vmatpush2.msra.mxu0 0.0
    %4674 = vmatprep.subr.mxu0 0.0
    %4675 = vmatpush2.msra.mxu0 0.0
    %4676 = vmatprep.subr.mxu0 0.0
    %4677 = vmatpush2.msra.mxu0 0.0
    %4678 = vmatprep.subr.mxu0 0.0
    %4679 = vmatpush2.msra.mxu0 0.0
    %4680 = vmatprep.subr.mxu0 0.0
    %4681 = vmatpush2.msra.mxu0 0.0
    %4682 = vmatprep.subr.mxu0 0.0
    %4683 = vmatpush2.msra.mxu0 0.0
    %4684 = vmatprep.subr.mxu0 0.0
    %4685 = vmatpush2.msra.mxu0 0.0
    %4686 = vmatprep.subr.mxu0 0.0
    %4687 = vmatpush2.msra.mxu0 0.0
    %4688 = vmatprep.subr.mxu0 0.0
    %4689 = vmatpush2.msra.mxu0 0.0
    %4690 = vmatprep.subr.mxu0 0.0
    %4691 = vmatpush2.msra.mxu0 0.0
    %4692 = vmatprep.subr.mxu0 0.0
    %4693 = vmatpush2.msra.mxu0 0.0
    %4694 = vmatprep.subr.mxu0 0.0
    %4695 = vmatpush2.msra.mxu0 0.0
    %4696 = vmatprep.subr.mxu0 0.0
    %4697 = vmatpush2.msra.mxu0 0.0
    %4698 = vmatprep.subr.mxu0 0.0
    %4699 = vmatpush2.msra.mxu0 0.0
    %4700 = vmatprep.mubr.f32.mxu0 0.0
    %4701 = vmatmul.mubr.f32.gmra.mxu0 %v4634
    %v4702 = vpop.f32.mrf.mxu0
    %v4703 = vadd.f32 %v190, %v4702
    %v4704 = vpop.f32.mrf.mxu0
    %4705 = vdwg.mxu0
    %v4706 = vxor.u32 %v4703, 2147483648
    %v4707 = vmul.f32 %v4706, 1.442695
    %v4708 = vpow.pop %v4707
    %v4709 = vadd.f32 %v4708, 1.0
    %v4710 = vrcp.pop %v4709
    %v4711 = vmul.f32 1.0, %v4710
    %v4712 = vtanh.pop %v4703
    %v4713 = vmul.f32 %v4711, %v4090
    %4715 = vrot.lane.b32.xlu0 %v4712, 64
    %v4716 = vpop.permute.xlu0 %4715
    %v4718 = vmul.f32 %v4711, %v4716
    %4720 = vrot.lane.b32.xlu0 %v4718, 32
    %v4721 = vpop.permute.xlu0 %4720
    %v4723 = vadd.f32 %v4713, %v4721
    %v4724 = vtanh.pop %v4723
    %4726 = vrot.lane.b32.xlu0 %v4724, 64
    %v4727 = vpop.permute.xlu0 %4726
    %v4729 = vmul.f32 %v4711, %v4727
    %v4732 = vunpack.c.l.s4 1966171168
    %v4733 = vunpack.c.0.s8 %v4732
    %v4734 = vlaneseq
    %v4735 = vshrl.u32 %v4734, 7
    %v4736 = vsub.s32 %v4733, %v4735
    %v4737 = vrot.slane %v4729, %v4736
    %v4738 = vcombine.high %v4737, %v4737
    %v4740 = vunpack.c.l.s4 1966171168
    %v4741 = vunpack.c.0.s8 %v4740
    %v4742 = vlaneseq
    %v4743 = vshrl.u32 %v4742, 7
    %v4744 = vsub.s32 %v4741, %v4743
    %v4745 = vrot.slane %v4737, %v4744
    %v4747 = vunpack.c.l.s4 1966171168
    %v4748 = vunpack.c.0.s8 %v4747
    %v4749 = vlaneseq
    %v4750 = vshrl.u32 %v4749, 7
    %v4751 = vsub.s32 %v4748, %v4750
    %v4752 = vrot.slane %v4738, %v4751
    %v4753 = vlaneseq
    %v4754 = vshrl.u32 %v4753, 7
    %v4755 = vsub.s32 0, %v4754
    %v4756 = vrot.slane %v4745, %v4755
    %4757 = vrot.lane.b32.xlu0 %v4756, 32
    %v4758 = vpop.permute.xlu0 %4757
    %v4759 = vsel %vm75, %v4758, 0
    %4761 = vmatprep.subr.mxu0 0.0
    %4762 = vmatpush1.msra.mxu0 0.0
    %4763 = vmatprep.subr.mxu0 0.0
    %4764 = vmatpush1.msra.mxu0 0.0
    %4765 = vmatprep.subr.mxu0 0.0
    %4766 = vmatpush1.msra.mxu0 0.0
    %4767 = vmatprep.subr.mxu0 0.0
    %4768 = vmatpush1.msra.mxu0 0.0
    %4769 = vmatprep.subr.mxu0 0.0
    %4770 = vmatpush1.msra.mxu0 0.0
    %4771 = vmatprep.subr.mxu0 0.0
    %4772 = vmatpush1.msra.mxu0 0.0
    %4773 = vmatprep.subr.mxu0 0.0
    %4774 = vmatpush1.msra.mxu0 0.0
    %4775 = vmatprep.subr.mxu0 0.0
    %4776 = vmatpush1.msra.mxu0 0.0
    %4777 = vmatprep.subr.mxu0 0.0
    %4778 = vmatpush1.msra.mxu0 0.0
    %4779 = vmatprep.subr.mxu0 0.0
    %4780 = vmatpush1.msra.mxu0 0.0
    %4781 = vmatprep.subr.mxu0 0.0
    %4782 = vmatpush1.msra.mxu0 0.0
    %4783 = vmatprep.subr.mxu0 0.0
    %4784 = vmatpush1.msra.mxu0 0.0
    %4785 = vmatprep.subr.mxu0 0.0
    %4786 = vmatpush1.msra.mxu0 %v67
    %4787 = vmatprep.subr.mxu0 0.0
    %4788 = vmatpush1.msra.mxu0 %v66
    %4789 = vmatprep.subr.mxu0 0.0
    %4790 = vmatpush1.msra.mxu0 %v65
    %4791 = vmatprep.subr.mxu0 0.0
    %4792 = vmatpush1.msra.mxu0 %v64
    %4793 = vmatprep.subr.mxu0 0.0
    %4794 = vmatpush2.msra.mxu0 0.0
    %4795 = vmatprep.subr.mxu0 0.0
    %4796 = vmatpush2.msra.mxu0 0.0
    %4797 = vmatprep.subr.mxu0 0.0
    %4798 = vmatpush2.msra.mxu0 0.0
    %4799 = vmatprep.subr.mxu0 0.0
    %4800 = vmatpush2.msra.mxu0 0.0
    %4801 = vmatprep.subr.mxu0 0.0
    %4802 = vmatpush2.msra.mxu0 0.0
    %4803 = vmatprep.subr.mxu0 0.0
    %4804 = vmatpush2.msra.mxu0 0.0
    %4805 = vmatprep.subr.mxu0 0.0
    %4806 = vmatpush2.msra.mxu0 0.0
    %4807 = vmatprep.subr.mxu0 0.0
    %4808 = vmatpush2.msra.mxu0 0.0
    %4809 = vmatprep.subr.mxu0 0.0
    %4810 = vmatpush2.msra.mxu0 0.0
    %4811 = vmatprep.subr.mxu0 0.0
    %4812 = vmatpush2.msra.mxu0 0.0
    %4813 = vmatprep.subr.mxu0 0.0
    %4814 = vmatpush2.msra.mxu0 0.0
    %4815 = vmatprep.subr.mxu0 0.0
    %4816 = vmatpush2.msra.mxu0 0.0
    %4817 = vmatprep.subr.mxu0 0.0
    %4818 = vmatpush2.msra.mxu0 0.0
    %4819 = vmatprep.subr.mxu0 0.0
    %4820 = vmatpush2.msra.mxu0 0.0
    %4821 = vmatprep.subr.mxu0 0.0
    %4822 = vmatpush2.msra.mxu0 0.0
    %4823 = vmatprep.subr.mxu0 0.0
    %4824 = vmatpush2.msra.mxu0 0.0
    %4825 = vmatprep.mubr.f32.mxu0 0.0
    %4826 = vmatmul.mubr.f32.gmra.mxu0 %v4759
    %v4827 = vpop.f32.mrf.mxu0
    %v4828 = vadd.f32 0.0, %v4827
    %v4829 = vpop.f32.mrf.mxu0
    %4830 = vdwg.mxu0
    %v4831 = vlaneseq
    %v4832 = vshrl.u32 %v4831, 7
    %v4833 = vsub.s32 0, %v4832
    %v4834 = vrot.slane %v4752, %v4833
    %4835 = vrot.lane.b32.xlu0 %v4834, 32
    %v4836 = vpop.permute.xlu0 %4835
    %v4837 = vsel %vm75, %v4836, 0
    %4839 = vmatprep.subr.mxu0 0.0
    %4840 = vmatpush1.msra.mxu0 0.0
    %4841 = vmatprep.subr.mxu0 0.0
    %4842 = vmatpush1.msra.mxu0 0.0
    %4843 = vmatprep.subr.mxu0 0.0
    %4844 = vmatpush1.msra.mxu0 0.0
    %4845 = vmatprep.subr.mxu0 0.0
    %4846 = vmatpush1.msra.mxu0 0.0
    %4847 = vmatprep.subr.mxu0 0.0
    %4848 = vmatpush1.msra.mxu0 0.0
    %4849 = vmatprep.subr.mxu0 0.0
    %4850 = vmatpush1.msra.mxu0 0.0
    %4851 = vmatprep.subr.mxu0 0.0
    %4852 = vmatpush1.msra.mxu0 0.0
    %4853 = vmatprep.subr.mxu0 0.0
    %4854 = vmatpush1.msra.mxu0 0.0
    %4855 = vmatprep.subr.mxu0 0.0
    %4856 = vmatpush1.msra.mxu0 0.0
    %4857 = vmatprep.subr.mxu0 0.0
    %4858 = vmatpush1.msra.mxu0 0.0
    %4859 = vmatprep.subr.mxu0 0.0
    %4860 = vmatpush1.msra.mxu0 0.0
    %4861 = vmatprep.subr.mxu0 0.0
    %4862 = vmatpush1.msra.mxu0 0.0
    %4863 = vmatprep.subr.mxu0 0.0
    %4864 = vmatpush1.msra.mxu0 %v71
    %4865 = vmatprep.subr.mxu0 0.0
    %4866 = vmatpush1.msra.mxu0 %v70
    %4867 = vmatprep.subr.mxu0 0.0
    %4868 = vmatpush1.msra.mxu0 %v69
    %4869 = vmatprep.subr.mxu0 0.0
    %4870 = vmatpush1.msra.mxu0 %v68
    %4871 = vmatprep.subr.mxu0 0.0
    %4872 = vmatpush2.msra.mxu0 0.0
    %4873 = vmatprep.subr.mxu0 0.0
    %4874 = vmatpush2.msra.mxu0 0.0
    %4875 = vmatprep.subr.mxu0 0.0
    %4876 = vmatpush2.msra.mxu0 0.0
    %4877 = vmatprep.subr.mxu0 0.0
    %4878 = vmatpush2.msra.mxu0 0.0
    %4879 = vmatprep.subr.mxu0 0.0
    %4880 = vmatpush2.msra.mxu0 0.0
    %4881 = vmatprep.subr.mxu0 0.0
    %4882 = vmatpush2.msra.mxu0 0.0
    %4883 = vmatprep.subr.mxu0 0.0
    %4884 = vmatpush2.msra.mxu0 0.0
    %4885 = vmatprep.subr.mxu0 0.0
    %4886 = vmatpush2.msra.mxu0 0.0
    %4887 = vmatprep.subr.mxu0 0.0
    %4888 = vmatpush2.msra.mxu0 0.0
    %4889 = vmatprep.subr.mxu0 0.0
    %4890 = vmatpush2.msra.mxu0 0.0
    %4891 = vmatprep.subr.mxu0 0.0
    %4892 = vmatpush2.msra.mxu0 0.0
    %4893 = vmatprep.subr.mxu0 0.0
    %4894 = vmatpush2.msra.mxu0 0.0
    %4895 = vmatprep.subr.mxu0 0.0
    %4896 = vmatpush2.msra.mxu0 0.0
    %4897 = vmatprep.subr.mxu0 0.0
    %4898 = vmatpush2.msra.mxu0 0.0
    %4899 = vmatprep.subr.mxu0 0.0
    %4900 = vmatpush2.msra.mxu0 0.0
    %4901 = vmatprep.subr.mxu0 0.0
    %4902 = vmatpush2.msra.mxu0 0.0
    %4903 = vmatprep.mubr.f32.mxu0 0.0
    %4904 = vmatmul.mubr.f32.gmra.mxu0 %v4837
    %v4905 = vpop.f32.mrf.mxu0
    %v4906 = vadd.f32 0.0, %v4905
    %v4907 = vpop.f32.mrf.mxu0
    %4908 = vdwg.mxu0
    %v4909 = vsel %vm469, %v4828, -inf
    %4910 = vmax.xlane.f32.xlu0 %v4909
    %v4911 = vpop.xlane.xlu0 %4910
    %v4912 = vsel %vm469, %v4906, -inf
    %4913 = vmax.xlane.f32.xlu0 %v4912
    %v4914 = vpop.xlane.xlu0 %4913
    %v4915 = vsub.f32 %v4828, %v4911
    %v4916 = vsub.f32 %v4906, %v4914
    %v4917 = vmul.f32 %v4915, 1.442695
    %v4918 = vpow.pop %v4917
    %v4919 = vmul.f32 %v4916, 1.442695
    %v4920 = vpow.pop %v4919
    %v4922 = vsel %vm482, %v4918, 0
    %4924 = vmatprep.subr.mxu0 0.0
    %4925 = vmatpush1.msra.mxu0 0.0
    %4926 = vmatprep.subr.mxu0 0.0
    %4927 = vmatpush1.msra.mxu0 0.0
    %4928 = vmatprep.subr.mxu0 0.0
    %4929 = vmatpush1.msra.mxu0 0.0
    %4930 = vmatprep.subr.mxu0 0.0
    %4931 = vmatpush1.msra.mxu0 0.0
    %4932 = vmatprep.subr.mxu0 0.0
    %4933 = vmatpush1.msra.mxu0 0.0
    %4934 = vmatprep.subr.mxu0 0.0
    %4935 = vmatpush1.msra.mxu0 0.0
    %4936 = vmatprep.subr.mxu0 0.0
    %4937 = vmatpush1.msra.mxu0 0.0
    %4938 = vmatprep.subr.mxu0 0.0
    %4939 = vmatpush1.msra.mxu0 0.0
    %4940 = vmatprep.subr.mxu0 0.0
    %4941 = vmatpush1.msra.mxu0 0.0
    %4942 = vmatprep.subr.mxu0 0.0
    %4943 = vmatpush1.msra.mxu0 0.0
    %4944 = vmatprep.subr.mxu0 0.0
    %4945 = vmatpush1.msra.mxu0 0.0
    %4946 = vmatprep.subr.mxu0 0.0
    %4947 = vmatpush1.msra.mxu0 0.0
    %4948 = vmatprep.subr.mxu0 0.0
    %4949 = vmatpush1.msra.mxu0 0.0
    %4950 = vmatprep.subr.mxu0 0.0
    %4951 = vmatpush1.msra.mxu0 0.0
    %4952 = vmatprep.subr.mxu0 0.0
    %4953 = vmatpush1.msra.mxu0 0.0
    %4954 = vmatprep.subr.mxu0 0.0
    %4955 = vmatpush1.msra.mxu0 %v62
    %4956 = vmatprep.subr.mxu0 0.0
    %4957 = vmatpush2.msra.mxu0 0.0
    %4958 = vmatprep.subr.mxu0 0.0
    %4959 = vmatpush2.msra.mxu0 0.0
    %4960 = vmatprep.subr.mxu0 0.0
    %4961 = vmatpush2.msra.mxu0 0.0
    %4962 = vmatprep.subr.mxu0 0.0
    %4963 = vmatpush2.msra.mxu0 0.0
    %4964 = vmatprep.subr.mxu0 0.0
    %4965 = vmatpush2.msra.mxu0 0.0
    %4966 = vmatprep.subr.mxu0 0.0
    %4967 = vmatpush2.msra.mxu0 0.0
    %4968 = vmatprep.subr.mxu0 0.0
    %4969 = vmatpush2.msra.mxu0 0.0
    %4970 = vmatprep.subr.mxu0 0.0
    %4971 = vmatpush2.msra.mxu0 0.0
    %4972 = vmatprep.subr.mxu0 0.0
    %4973 = vmatpush2.msra.mxu0 0.0
    %4974 = vmatprep.subr.mxu0 0.0
    %4975 = vmatpush2.msra.mxu0 0.0
    %4976 = vmatprep.subr.mxu0 0.0
    %4977 = vmatpush2.msra.mxu0 0.0
    %4978 = vmatprep.subr.mxu0 0.0
    %4979 = vmatpush2.msra.mxu0 0.0
    %4980 = vmatprep.subr.mxu0 0.0
    %4981 = vmatpush2.msra.mxu0 0.0
    %4982 = vmatprep.subr.mxu0 0.0
    %4983 = vmatpush2.msra.mxu0 0.0
    %4984 = vmatprep.subr.mxu0 0.0
    %4985 = vmatpush2.msra.mxu0 0.0
    %4986 = vmatprep.subr.mxu0 0.0
    %4987 = vmatpush2.msra.mxu0 0.0
    %4988 = vmatprep.mubr.f32.mxu0 0.0
    %4989 = vmatmul.mubr.f32.gmra.mxu0 %v4922
    %v4990 = vpop.f32.mrf.mxu0
    %v4991 = vadd.f32 0.0, %v4990
    %v4992 = vpop.f32.mrf.mxu0
    %4993 = vdwg.mxu0
    %v4995 = vsel %vm482, %v4920, 0
    %4997 = vmatprep.subr.mxu0 0.0
    %4998 = vmatpush1.msra.mxu0 0.0
    %4999 = vmatprep.subr.mxu0 0.0
    %5000 = vmatpush1.msra.mxu0 0.0
    %5001 = vmatprep.subr.mxu0 0.0
    %5002 = vmatpush1.msra.mxu0 0.0
    %5003 = vmatprep.subr.mxu0 0.0
    %5004 = vmatpush1.msra.mxu0 0.0
    %5005 = vmatprep.subr.mxu0 0.0
    %5006 = vmatpush1.msra.mxu0 0.0
    %5007 = vmatprep.subr.mxu0 0.0
    %5008 = vmatpush1.msra.mxu0 0.0
    %5009 = vmatprep.subr.mxu0 0.0
    %5010 = vmatpush1.msra.mxu0 0.0
    %5011 = vmatprep.subr.mxu0 0.0
    %5012 = vmatpush1.msra.mxu0 0.0
    %5013 = vmatprep.subr.mxu0 0.0
    %5014 = vmatpush1.msra.mxu0 0.0
    %5015 = vmatprep.subr.mxu0 0.0
    %5016 = vmatpush1.msra.mxu0 0.0
    %5017 = vmatprep.subr.mxu0 0.0
    %5018 = vmatpush1.msra.mxu0 0.0
    %5019 = vmatprep.subr.mxu0 0.0
    %5020 = vmatpush1.msra.mxu0 0.0
    %5021 = vmatprep.subr.mxu0 0.0
    %5022 = vmatpush1.msra.mxu0 0.0
    %5023 = vmatprep.subr.mxu0 0.0
    %5024 = vmatpush1.msra.mxu0 0.0
    %5025 = vmatprep.subr.mxu0 0.0
    %5026 = vmatpush1.msra.mxu0 0.0
    %5027 = vmatprep.subr.mxu0 0.0
    %5028 = vmatpush1.msra.mxu0 %v63
    %5029 = vmatprep.subr.mxu0 0.0
    %5030 = vmatpush2.msra.mxu0 0.0
    %5031 = vmatprep.subr.mxu0 0.0
    %5032 = vmatpush2.msra.mxu0 0.0
    %5033 = vmatprep.subr.mxu0 0.0
    %5034 = vmatpush2.msra.mxu0 0.0
    %5035 = vmatprep.subr.mxu0 0.0
    %5036 = vmatpush2.msra.mxu0 0.0
    %5037 = vmatprep.subr.mxu0 0.0
    %5038 = vmatpush2.msra.mxu0 0.0
    %5039 = vmatprep.subr.mxu0 0.0
    %5040 = vmatpush2.msra.mxu0 0.0
    %5041 = vmatprep.subr.mxu0 0.0
    %5042 = vmatpush2.msra.mxu0 0.0
    %5043 = vmatprep.subr.mxu0 0.0
    %5044 = vmatpush2.msra.mxu0 0.0
    %5045 = vmatprep.subr.mxu0 0.0
    %5046 = vmatpush2.msra.mxu0 0.0
    %5047 = vmatprep.subr.mxu0 0.0
    %5048 = vmatpush2.msra.mxu0 0.0
    %5049 = vmatprep.subr.mxu0 0.0
    %5050 = vmatpush2.msra.mxu0 0.0
    %5051 = vmatprep.subr.mxu0 0.0
    %5052 = vmatpush2.msra.mxu0 0.0
    %5053 = vmatprep.subr.mxu0 0.0
    %5054 = vmatpush2.msra.mxu0 0.0
    %5055 = vmatprep.subr.mxu0 0.0
    %5056 = vmatpush2.msra.mxu0 0.0
    %5057 = vmatprep.subr.mxu0 0.0
    %5058 = vmatpush2.msra.mxu0 0.0
    %5059 = vmatprep.subr.mxu0 0.0
    %5060 = vmatpush2.msra.mxu0 0.0
    %5061 = vmatprep.mubr.f32.mxu0 0.0
    %5062 = vmatmul.mubr.f32.gmra.mxu0 %v4995
    %v5063 = vpop.f32.mrf.mxu0
    %v5064 = vadd.f32 0.0, %v5063
    %v5065 = vpop.f32.mrf.mxu0
    %5066 = vdwg.mxu0
    %v5067 = vsel %vm469, %v4918, 0.0
    %5068 = vadd.xlane.f32.xlu0 %v5067
    %v5069 = vpop.xlane.xlu0 %5068
    %v5070 = vsel %vm469, %v4920, 0.0
    %5071 = vadd.xlane.f32.xlu0 %v5070
    %v5072 = vpop.xlane.xlu0 %5071
    %v5073 = vrcp.pop %v5069
    %v5074 = vrcp.pop %v5072
    %v5075 = vmul.f32 %v4991, %v5073
    %v5076 = vmul.f32 %v5064, %v5074
    %v5079 = vrot.slane %v5076, 7
    %v5080 = vsel %vm642, %v5079, %v5075
    %5082 = vrot.lane.b32.xlu0 %v4729, 64
    %v5083 = vpop.permute.xlu0 %5082
    %v5085 = vsel %vm75, %v5080, %v5083
    %v5087 = vsel %vm192, %v5085, 0
    %5089 = vmatprep.subr.mxu0 0.0
    %5090 = vmatpush1.msra.mxu0 0.0
    %5091 = vmatprep.subr.mxu0 0.0
    %5092 = vmatpush1.msra.mxu0 0.0
    %5093 = vmatprep.subr.mxu0 0.0
    %5094 = vmatpush1.msra.mxu0 0.0
    %5095 = vmatprep.subr.mxu0 0.0
    %5096 = vmatpush1.msra.mxu0 0.0
    %5097 = vmatprep.subr.mxu0 0.0
    %5098 = vmatpush1.msra.mxu0 0.0
    %5099 = vmatprep.subr.mxu0 0.0
    %5100 = vmatpush1.msra.mxu0 0.0
    %5101 = vmatprep.subr.mxu0 0.0
    %5102 = vmatpush1.msra.mxu0 0.0
    %5103 = vmatprep.subr.mxu0 0.0
    %5104 = vmatpush1.msra.mxu0 0.0
    %5105 = vmatprep.subr.mxu0 0.0
    %5106 = vmatpush1.msra.mxu0 %v60
    %5107 = vmatprep.subr.mxu0 0.0
    %5108 = vmatpush1.msra.mxu0 %v59
    %5109 = vmatprep.subr.mxu0 0.0
    %5110 = vmatpush1.msra.mxu0 %v58
    %5111 = vmatprep.subr.mxu0 0.0
    %5112 = vmatpush1.msra.mxu0 %v57
    %5113 = vmatprep.subr.mxu0 0.0
    %5114 = vmatpush1.msra.mxu0 %v56
    %5115 = vmatprep.subr.mxu0 0.0
    %5116 = vmatpush1.msra.mxu0 %v55
    %5117 = vmatprep.subr.mxu0 0.0
    %5118 = vmatpush1.msra.mxu0 %v54
    %5119 = vmatprep.subr.mxu0 0.0
    %5120 = vmatpush1.msra.mxu0 %v53
    %5121 = vmatprep.subr.mxu0 0.0
    %5122 = vmatpush2.msra.mxu0 0.0
    %5123 = vmatprep.subr.mxu0 0.0
    %5124 = vmatpush2.msra.mxu0 0.0
    %5125 = vmatprep.subr.mxu0 0.0
    %5126 = vmatpush2.msra.mxu0 0.0
    %5127 = vmatprep.subr.mxu0 0.0
    %5128 = vmatpush2.msra.mxu0 0.0
    %5129 = vmatprep.subr.mxu0 0.0
    %5130 = vmatpush2.msra.mxu0 0.0
    %5131 = vmatprep.subr.mxu0 0.0
    %5132 = vmatpush2.msra.mxu0 0.0
    %5133 = vmatprep.subr.mxu0 0.0
    %5134 = vmatpush2.msra.mxu0 0.0
    %5135 = vmatprep.subr.mxu0 0.0
    %5136 = vmatpush2.msra.mxu0 0.0
    %5137 = vmatprep.subr.mxu0 0.0
    %5138 = vmatpush2.msra.mxu0 0.0
    %5139 = vmatprep.subr.mxu0 0.0
    %5140 = vmatpush2.msra.mxu0 0.0
    %5141 = vmatprep.subr.mxu0 0.0
    %5142 = vmatpush2.msra.mxu0 0.0
    %5143 = vmatprep.subr.mxu0 0.0
    %5144 = vmatpush2.msra.mxu0 0.0
    %5145 = vmatprep.subr.mxu0 0.0
    %5146 = vmatpush2.msra.mxu0 0.0
    %5147 = vmatprep.subr.mxu0 0.0
    %5148 = vmatpush2.msra.mxu0 0.0
    %5149 = vmatprep.subr.mxu0 0.0
    %5150 = vmatpush2.msra.mxu0 0.0
    %5151 = vmatprep.subr.mxu0 0.0
    %5152 = vmatpush2.msra.mxu0 0.0
    %5153 = vmatprep.mubr.f32.mxu0 0.0
    %5154 = vmatmul.mubr.f32.gmra.mxu0 %v5087
    %v5155 = vpop.f32.mrf.mxu0
    %v5156 = vadd.f32 %v653, %v5155
    %v5157 = vpop.f32.mrf.mxu0
    %5158 = vdwg.mxu0
    %v5159 = vtanh.pop %v5156
    %s5160 = scalar_lea.vmem [#allocation2], 14
    %5161 = vst.msk [vmem:[%s5160] sm:$0x3] %vm729, %v5159
    %5162 = vst.msk [vmem:[#allocation4] sm:$0x3] %vm729, %v5159
    %5164 = vrot.lane.b32.xlu0 %v4723, 96
    %v5165 = vpop.permute.xlu0 %5164
    %5167 = vst.msk [vmem:[#allocation6] sm:$0x3] %vm729, %v5165
    // Predicated region
    $region42: #{tpu_custom_call.1} parent=1 // pred_check
      _
    $region43: #{tpu_custom_call.1} parent=1 // pred_check_branch
      %5169 = sbr.rel (0) target = $region45
    $region44: #{tpu_custom_call.1} parent=1 // pred_region
      %s5171 = ssub.s32 256, 256
      %5172 = vsyncadd [#allocation3], %s5171
      %s5173 = sshll.u32 [#allocation2], 4
      %s5174 = int_to_ptr.vmem [resolvable:$true] %s5173
      %5179 = dma.vmem_to_hbm [thread:$0]  %s5174, 256, %s10, [#allocation3], 32, 32, 2
    $region45: #{tpu_custom_call.1} parent=1 // pred_fallthru
      _
    // Predicated region
    $region46: #{tpu_custom_call.1} parent=1 // pred_check
      _
    $region47: #{tpu_custom_call.1} parent=1 // pred_check_branch
      %5181 = sbr.rel (0) target = $region49
    $region48: #{tpu_custom_call.1} parent=1 // pred_region
      %s5183 = ssub.s32 32, 32
      %5184 = vsyncadd [#allocation5], %s5183
      %s5186 = sshll.u32 [#allocation4], 4
      %s5187 = int_to_ptr.vmem [resolvable:$true] %s5186
      %5189 = dma.vmem_to_hbm [thread:$0]  %s5187, 32, %s11, [#allocation5]
    $region49: #{tpu_custom_call.1} parent=1 // pred_fallthru
      _
    // Predicated region
    $region50: #{tpu_custom_call.1} parent=1 // pred_check
      _
    $region51: #{tpu_custom_call.1} parent=1 // pred_check_branch
      %5191 = sbr.rel (0) target = $region53
    $region52: #{tpu_custom_call.1} parent=1 // pred_region
      %s5193 = ssub.s32 32, 32
      %5194 = vsyncadd [#allocation5], %s5193
      %s5196 = sshll.u32 [#allocation6], 4
      %s5197 = int_to_ptr.vmem [resolvable:$true] %s5196
      %5199 = dma.vmem_to_hbm [thread:$0]  %s5197, 32, %s12, [#allocation5]
    $region53: #{tpu_custom_call.1} parent=1 // pred_fallthru
      _
    // Predicated region
    $region54: #{tpu_custom_call.1} parent=1 // pred_check
      _
    $region55: #{tpu_custom_call.1} parent=1 // pred_check_branch
      %5201 = sbr.rel (0) target = $region57
    $region56: #{tpu_custom_call.1} parent=1 // pred_region
      %5202 = dma.done [#allocation3], 256
    $region57: #{tpu_custom_call.1} parent=1 // pred_fallthru
      _
    // Predicated region
    $region58: #{tpu_custom_call.1} parent=1 // pred_check
      _
    $region59: #{tpu_custom_call.1} parent=1 // pred_check_branch
      %5204 = sbr.rel (0) target = $region61
    $region60: #{tpu_custom_call.1} parent=1 // pred_region
      %5205 = dma.done [#allocation5], 32
    $region61: #{tpu_custom_call.1} parent=1 // pred_fallthru
      _
    // Predicated region
    $region62: #{tpu_custom_call.1} parent=1 // pred_check
      _
    $region63: #{tpu_custom_call.1} parent=1 // pred_check_branch
      %5207 = sbr.rel (0) target = $region65
    $region64: #{tpu_custom_call.1} parent=1 // pred_region
      %5208 = dma.done [#allocation5], 32
    $region65: #{tpu_custom_call.1} parent=1 // pred_fallthru
      _
    %5209 = vsyncpa [#allocation3], 1
    %5210 = vsyncpa [#allocation5], 1

</llo_original>
